<compile_context>
chip_gen: v5e
topology: v5e:2x2
jax: 0.10.0
libtpu: 0.0.40
codegen_flags: <defaults>
</compile_context>

<pallas_src>
import functools

import jax
import jax.numpy as jnp
import numpy as np
from jax.experimental import pallas as pl
from jax.experimental.pallas import tpu as pltpu


LAYER_NAME_MAPPING = {1: "relu_1_1", 3: "relu_1_2", 6: "relu_2_1"}
LAYERS = ["relu_1_1", "relu_2_1"]


def _round_up(x, m):
    return ((x + m - 1) // m) * m


# --------------------------- in-kernel conv helper ---------------------------
def _conv3x3_relu(frame_ref, w_ref, b_ref, H, W, guard):
    """relu(3x3 same-conv + bias) on a zero-padded, row-major-flattened frame.

    frame_ref : (Cin, guard + Np + guard) bf16 ref, Np = (H+2)*(W+2).  The
                1-pixel border ring inside the frame and the guard lanes are 0.
    w_ref     : (9, Cout, Cin) bf16 ref, tap-major (kh*3 + kw).
    b_ref     : (Cout, 1) f32 ref.
    Returns (Cout, Np) f32 evaluated at EVERY frame position; values on the
    border ring are garbage (finite) and must be masked/dropped by the caller.
    Each tap is one lane-shifted contiguous slice -> 9 accumulated MXU matmuls.
    """
    Wp = W + 2
    Np = (H + 2) * Wp
    cout = w_ref.shape[1]
    acc = jnp.zeros((cout, Np), jnp.float32)
    for kh in range(3):
        for kw in range(3):
            d = (kh - 1) * Wp + (kw - 1)
            src = frame_ref[:, guard + d:guard + d + Np]           # (Cin, Np) bf16
            acc = acc + jnp.dot(w_ref[kh * 3 + kw], src,
                                preferred_element_type=jnp.float32)
    return jnp.maximum(acc + b_ref[...], 0.0)


# --------------------------- fused network kernel ---------------------------
def _fused_net_kernel(mask1_ref, x_ref, w1_ref, b1_ref, w2_ref, b2_ref,
                      psel_ref, w3_ref, b3_ref, o1_ref, o2_ref,
                      fa1, fa2, fp, *, H, W, G1, G2):
    # x_ref  : (Cin, G1 + Np1 + G1)  zero-padded flattened input frame (bf16)
    # o1_ref : (C1, Np1)  relu_1_1 as a padded-flat slab (f32)
    # o2_ref : (C3, Np2)  relu_2_1 as a padded-flat slab (f32)
    # fa1    : (C1, G1+Np1+G1) bf16  conv2 input frame (relu_1_1, ring zeroed)
    # fa2    : (C2, Np1)       bf16  relu_1_2 (pool input)
    # fp     : (C2, G2+Np2+G2) bf16  conv3 input frame (pooled, ring zeroed)
    Wp = W + 2
    Np1 = (H + 2) * Wp
    Ho, Wo = H // 2, W // 2
    Wop = Wo + 2
    Np2 = (Ho + 2) * Wop
    C1 = fa1.shape[0]
    C2 = fp.shape[0]
    dt = fa1.dtype

    # Border/guard-only zeroing (interiors are fully rewritten every step, so
    # no full-tile memset; all four stores are contiguous lane runs).
    fa1[:, :G1] = jnp.zeros((C1, G1), dt)
    fa1[:, G1 + Np1:] = jnp.zeros((C1, fa1.shape[1] - G1 - Np1), dt)
    fp[:, :G2 + Wop] = jnp.zeros((C2, G2 + Wop), dt)            # left guard + top ring row
    fp[:, G2 + (Ho + 1) * Wop:] = jnp.zeros(
        (C2, fp.shape[1] - G2 - (Ho + 1) * Wop), dt)            # bottom ring row + right guard

    # ---- layers 0/1: Conv(3->C1, 3x3, pad=1) + ReLU  (== relu_1_1) ----
    a1 = _conv3x3_relu(x_ref, w1_ref, b1_ref, H, W, G1)          # (C1, Np1) f32
    o1_ref[...] = a1.astype(o1_ref.dtype)                        # lane-dense slab store
    # Zero the padding ring (mask is a resident (1, Np1) constant) -> this IS
    # conv2's zero padding.  Single slab store into the frame interior.
    fa1[:, G1:G1 + Np1] = (a1 * mask1_ref[...]).astype(dt)

    # ---- layers 2/3: Conv(C1->C2) + ReLU  (relu_1_2, only feeds the pool) ----
    fa2[...] = _conv3x3_relu(fa1, w2_ref, b2_ref, H, W, G1).astype(dt)

    # ---- layer 4: MaxPool2d(2, 2), fused into conv3's input-frame staging ----
    # Row/column pairs are four contiguous lane slices; the even-column
    # compaction (+ left/right zero pad of the pooled row) is one tiny 0/1
    # selection matmul -> a single full-width slab store per pooled row.
    # TODO(synk): block this loop over row bands for very large H.
    for ho in range(Ho):
        r1 = (1 + 2 * ho) * Wp
        r2 = (2 + 2 * ho) * Wp
        cm = jnp.maximum(
            jnp.maximum(fa2[:, r1 + 1:r1 + 1 + W], fa2[:, r1 + 2:r1 + 2 + W]),
            jnp.maximum(fa2[:, r2 + 1:r2 + 1 + W], fa2[:, r2 + 2:r2 + 2 + W]))
        row = jnp.dot(cm, psel_ref[...],
                      preferred_element_type=jnp.float32)        # (C2, Wo+2)
        fp[:, G2 + (1 + ho) * Wop:G2 + (2 + ho) * Wop] = row.astype(dt)

    # ---- layers 5/6: Conv(C2->C3) + ReLU  (== relu_2_1) ----
    a3 = _conv3x3_relu(fp, w3_ref, b3_ref, Ho, Wo, G2)           # (C3, Np2) f32
    o2_ref[...] = a3.astype(o2_ref.dtype)


# ------------------------ PerceptualNetwork forward -------------------------
def perceptual_network_forward(network, layer_name_mapping, layers, x_nchw):
    """Mirrors PerceptualNetwork.forward for the fixed VGG slice used here:
    runs the whole sequential as one fused Pallas kernel and collects the
    requested intermediate activations (returned in NCHW, like PyTorch)."""
    kinds = [k for k, _ in network]
    assert kinds == ["conv", "relu", "conv", "relu", "maxpool", "conv", "relu"]
    assert set(layers) <= {"relu_1_1", "relu_2_1"}, \
        "fused kernel exports relu_1_1 and relu_2_1 only"
    (w1, b1), (w2, b2), (w3, b3) = network[0][1], network[2][1], network[5][1]

    B, Cin, H, W = x_nchw.shape
    assert H % 2 == 0 and W % 2 == 0, "MaxPool2d(2) path assumes even H, W"
    C1, C2, C3 = w1.shape[-1], w2.shape[-1], w3.shape[-1]
    Ho, Wo = H // 2, W // 2
    Hp, Wp = H + 2, W + 2
    Hop, Wop = Ho + 2, Wo + 2
    Np1, Np2 = Hp * Wp, Hop * Wop
    G1 = _round_up(Wp + 1, 128)          # guard lanes so every tap slice is in-bounds
    G2 = _round_up(Wop + 1, 128)
    L1 = Np1 + 2 * G1
    L2 = Np2 + 2 * G2

    cdt = jnp.bfloat16                   # MXU operand dtype (f32 accumulate)

    # Input -> zero-padded, row-major flattened frame with guard lanes
    # (spatial axis on lanes).  Cheap XLA ops on a 3-channel tensor.
    xf = jnp.pad(x_nchw, ((0, 0), (0, 0), (1, 1), (1, 1))).reshape(B, Cin, Np1)
    xf = jnp.pad(xf, ((0, 0), (0, 0), (G1, G1))).astype(cdt)

    def tap_major(w):                    # HWIO (3,3,ci,co) -> (9, co, ci)
        return jnp.transpose(w, (0, 1, 3, 2)).reshape(
            9, w.shape[3], w.shape[2]).astype(cdt)

    w1t, w2t, w3t = tap_major(w1), tap_major(w2), tap_major(w3)
    b1c = b1.reshape(C1, 1).astype(jnp.float32)
    b2c = b2.reshape(C2, 1).astype(jnp.float32)
    b3c = b3.reshape(C3, 1).astype(jnp.float32)

    # Interior mask of the full-resolution frame (1 inside the HxW image, 0 on
    # the 1-pixel padding ring) -> one vmul in the kernel, no int div/mod.
    m = np.zeros((Hp, Wp), np.float32)
    m[1:H + 1, 1:W + 1] = 1.0
    mask1 = jnp.asarray(m.reshape(1, Np1))

    # 0/1 column-selection matrix for the pool: picks the even columns of the
    # (C2, W) row/col-pair max and pads the pooled row to width Wo+2.
    s = np.zeros((W, Wop), np.float32)
    s[2 * np.arange(Wo), 1 + np.arange(Wo)] = 1.0
    psel = jnp.asarray(s).astype(cdt)

    kernel = functools.partial(_fused_net_kernel, H=H, W=W, G1=G1, G2=G2)

    out1, out2 = pl.pallas_call(
        kernel,
        out_shape=(jax.ShapeDtypeStruct((B, C1, Np1), x_nchw.dtype),
                   jax.ShapeDtypeStruct((B, C3, Np2), x_nchw.dtype)),
        grid=(B,),
        in_specs=[
            pl.BlockSpec((1, Np1), lambda b: (0, 0)),            # interior mask (resident)
            pl.BlockSpec((None, Cin, L1), lambda b: (b, 0, 0)),  # input frame
            pl.BlockSpec((9, C1, Cin), lambda b: (0, 0, 0)),     # conv1 taps (resident)
            pl.BlockSpec((C1, 1), lambda b: (0, 0)),
            pl.BlockSpec((9, C2, C1), lambda b: (0, 0, 0)),      # conv2 taps
            pl.BlockSpec((C2, 1), lambda b: (0, 0)),
            pl.BlockSpec((W, Wop), lambda b: (0, 0)),            # pool column selection
            pl.BlockSpec((9, C3, C2), lambda b: (0, 0, 0)),      # conv3 taps
            pl.BlockSpec((C3, 1), lambda b: (0, 0)),
        ],
        out_specs=(
            pl.BlockSpec((None, C1, Np1), lambda b: (b, 0, 0)),  # relu_1_1 (padded-flat)
            pl.BlockSpec((None, C3, Np2), lambda b: (b, 0, 0)),  # relu_2_1 (padded-flat)
        ),
        scratch_shapes=[
            pltpu.VMEM((C1, L1), cdt),   # conv2 input frame (relu_1_1, ring zeroed)
            pltpu.VMEM((C2, Np1), cdt),  # relu_1_2 (pool input)
            pltpu.VMEM((C2, L2), cdt),   # conv3 input frame (pooled, ring zeroed)
        ],
        compiler_params=pltpu.CompilerParams(
            dimension_semantics=("parallel",),                   # batch across TCs (v7x)
            vmem_limit_bytes=64 * 1024 * 1024),
    )(mask1, xf, w1t, b1c, w2t, b2c, psel, w3t, b3c)

    # Padded-flat frames -> NCHW, dropping the padding ring (XLA-side).
    o1 = out1.reshape(B, C1, Hp, Wp)[:, :, 1:H + 1, 1:W + 1]
    o2 = out2.reshape(B, C3, Hop, Wop)[:, :, 1:Ho + 1, 1:Wo + 1]

    collected = {"relu_1_1": o1, "relu_2_1": o2}
    outputs = []
    for i in range(len(network)):
        name = layer_name_mapping.get(i, None)
        if name in layers:
            outputs.append(collected[name])
    return outputs


# ----------------------- network construction (synthetic) -------------------
def build_network(key):
    """Small VGG-like nn.Sequential analogue with deterministic synthetic weights."""
    def conv_params(k, cin, cout):
        kw, kb = jax.random.split(k)
        w = jax.random.normal(kw, (3, 3, cin, cout), jnp.float32)
        w = w * (1.0 / np.sqrt(9.0 * cin))
        b = jax.random.normal(kb, (cout,), jnp.float32) * 0.01
        return w, b

    k0, k1, k2 = jax.random.split(key, 3)
    return [
        ("conv", conv_params(k0, 3, 8)),    # 0
        ("relu", None),                     # 1  -> relu_1_1
        ("conv", conv_params(k1, 8, 8)),    # 2
        ("relu", None),                     # 3  -> relu_1_2
        ("maxpool", None),                  # 4
        ("conv", conv_params(k2, 8, 16)),   # 5
        ("relu", None),                     # 6  -> relu_2_1
    ]


# ----------------------------- pure-JAX reference ---------------------------
def reference_forward(network, layer_name_mapping, layers, x_nchw):
    x = x_nchw
    outs = []
    for i, (kind, params) in enumerate(network):
        if kind == "conv":
            w, b = params                              # HWIO
            w_oihw = jnp.transpose(w, (3, 2, 0, 1))
            x = jax.lax.conv_general_dilated(
                x, w_oihw, (1, 1), ((1, 1), (1, 1)),
                dimension_numbers=("NCHW", "OIHW", "NCHW"))
            x = x + b.reshape(1, -1, 1, 1)
        elif kind == "relu":
            x = jnp.maximum(x, 0.0)
        elif kind == "maxpool":
            x = jax.lax.reduce_window(x, -jnp.inf, jax.lax.max,
                                      (1, 1, 2, 2), (1, 1, 2, 2), "VALID")
        if layer_name_mapping.get(i, None) in layers:
            outs.append(x)
    return outs


if __name__ == "__main__":
    key = jax.random.PRNGKey(0)
    knet, kx = jax.random.split(key)
    network = build_network(knet)
    x = jax.random.normal(kx, (2, 3, 16, 16), jnp.float32)   # NCHW, like PyTorch

    outs = perceptual_network_forward(network, LAYER_NAME_MAPPING, LAYERS, x)
    outs = jax.block_until_ready(outs)

    refs = reference_forward(network, LAYER_NAME_MAPPING, LAYERS, x)
    assert len(outs) == len(refs)
    for o, r in zip(outs, refs):
        assert o.shape == r.shape and o.dtype == r.dtype
        # Tolerance reflects bf16 MXU operands through three chained convs
        # compared against an all-f32 reference.
        np.testing.assert_allclose(np.asarray(o), np.asarray(r),
                                   atol=4e-2, rtol=4e-2)

    print("KERNEL_OK")
</pallas_src>

<mosaic_0001>
module attributes {stable_mosaic.version = 11 : i64} {
  func.func @_fused_net_kernel(%arg0: i32, %arg1: memref<1x324xf32, #tpu.memory_space<vmem>>, %arg2: memref<1x3x580xbf16, #tpu.memory_space<vmem>>, %arg3: memref<9x8x3xbf16, #tpu.memory_space<vmem>>, %arg4: memref<8x1xf32, #tpu.memory_space<vmem>>, %arg5: memref<9x8x8xbf16, #tpu.memory_space<vmem>>, %arg6: memref<8x1xf32, #tpu.memory_space<vmem>>, %arg7: memref<16x10xbf16, #tpu.memory_space<vmem>>, %arg8: memref<9x16x8xbf16, #tpu.memory_space<vmem>>, %arg9: memref<16x1xf32, #tpu.memory_space<vmem>>, %arg10: memref<1x8x324xf32, #tpu.memory_space<vmem>>, %arg11: memref<1x16x100xf32, #tpu.memory_space<vmem>>, %arg12: memref<8x580xbf16, #tpu.memory_space<vmem>>, %arg13: memref<8x324xbf16, #tpu.memory_space<vmem>>, %arg14: memref<8x356xbf16, #tpu.memory_space<vmem>>) attributes {dimension_semantics = [#tpu.dimension_semantics<parallel>], iteration_bounds = array<i64: 2>, scalar_prefetch = 0 : i64, scratch_operands = 3 : i64, tpu.core_type = #tpu.core_type<tc>, window_params = [{pipeline_mode = #tpu.pipeline_mode<synchronous>, transform_indices = @transform_0, window_bounds = array<i64: 1, 324>}, {transform_indices = @transform_1, window_bounds = array<i64: 1, 3, 580>}, {pipeline_mode = #tpu.pipeline_mode<synchronous>, transform_indices = @transform_2, window_bounds = array<i64: 9, 8, 3>}, {pipeline_mode = #tpu.pipeline_mode<synchronous>, transform_indices = @transform_3, window_bounds = array<i64: 8, 1>}, {pipeline_mode = #tpu.pipeline_mode<synchronous>, transform_indices = @transform_4, window_bounds = array<i64: 9, 8, 8>}, {pipeline_mode = #tpu.pipeline_mode<synchronous>, transform_indices = @transform_5, window_bounds = array<i64: 8, 1>}, {pipeline_mode = #tpu.pipeline_mode<synchronous>, transform_indices = @transform_6, window_bounds = array<i64: 16, 10>}, {pipeline_mode = #tpu.pipeline_mode<synchronous>, transform_indices = @transform_7, window_bounds = array<i64: 9, 16, 8>}, {pipeline_mode = #tpu.pipeline_mode<synchronous>, transform_indices = @transform_8, window_bounds = array<i64: 16, 1>}, {transform_indices = @transform_9, window_bounds = array<i64: 1, 8, 324>}, {transform_indices = @transform_10, window_bounds = array<i64: 1, 16, 100>}]} {
    %cst = arith.constant 0.000000e+00 : bf16
    %0 = vector.broadcast %cst : bf16 to vector<8x128xbf16>
    %c0 = arith.constant 0 : index
    %c0_0 = arith.constant 0 : index
    %1 = vector.load %arg12[%c0, %c0_0] : memref<8x580xbf16, #tpu.memory_space<vmem>>, vector<8x128xbf16>
    tpu.vector_store %arg12[%c0, %c0_0], %0 {strides = array<i32>} : memref<8x580xbf16, #tpu.memory_space<vmem>>, vector<8x128xbf16>,
    %cst_1 = arith.constant 0.000000e+00 : bf16
    %2 = vector.broadcast %cst_1 : bf16 to vector<8x128xbf16>
    %c0_2 = arith.constant 0 : index
    %c452 = arith.constant 452 : index
    %3 = vector.load %arg12[%c0_2, %c452] : memref<8x580xbf16, #tpu.memory_space<vmem>>, vector<8x128xbf16>
    tpu.vector_store %arg12[%c0_2, %c452], %2 {strides = array<i32>} : memref<8x580xbf16, #tpu.memory_space<vmem>>, vector<8x128xbf16>,
    %cst_3 = arith.constant 0.000000e+00 : bf16
    %4 = vector.broadcast %cst_3 : bf16 to vector<8x138xbf16>
    %c0_4 = arith.constant 0 : index
    %c0_5 = arith.constant 0 : index
    %5 = vector.load %arg14[%c0_4, %c0_5] : memref<8x356xbf16, #tpu.memory_space<vmem>>, vector<8x138xbf16>
    tpu.vector_store %arg14[%c0_4, %c0_5], %4 {strides = array<i32>} : memref<8x356xbf16, #tpu.memory_space<vmem>>, vector<8x138xbf16>,
    %cst_6 = arith.constant 0.000000e+00 : bf16
    %6 = vector.broadcast %cst_6 : bf16 to vector<8x138xbf16>
    %c0_7 = arith.constant 0 : index
    %c218 = arith.constant 218 : index
    %7 = vector.load %arg14[%c0_7, %c218] : memref<8x356xbf16, #tpu.memory_space<vmem>>, vector<8x138xbf16>
    tpu.vector_store %arg14[%c0_7, %c218], %6 {strides = array<i32>} : memref<8x356xbf16, #tpu.memory_space<vmem>>, vector<8x138xbf16>,
    %cst_8 = arith.constant 0.000000e+00 : f32
    %8 = vector.broadcast %cst_8 : f32 to vector<8x324xf32>
    %c0_9 = arith.constant 0 : index
    %c0_10 = arith.constant 0 : index
    %c109 = arith.constant 109 : index
    %9 = vector.load %arg2[%c0_9, %c0_10, %c109] : memref<1x3x580xbf16, #tpu.memory_space<vmem>>, vector<1x3x324xbf16>
    %10 = vector.shape_cast %9 : vector<1x3x324xbf16> to vector<3x324xbf16>
    %c0_11 = arith.constant 0 : index
    %c0_12 = arith.constant 0 : index
    %c0_13 = arith.constant 0 : index
    %11 = vector.load %arg3[%c0_11, %c0_12, %c0_13] : memref<9x8x3xbf16, #tpu.memory_space<vmem>>, vector<1x8x3xbf16>
    %12 = vector.shape_cast %11 : vector<1x8x3xbf16> to vector<8x3xbf16>
    %cst_14 = arith.constant dense<0.000000e+00> : vector<8x324xf32>
    %13 = tpu.matmul %12, %10, %cst_14 {dimension_numbers = #tpu.dot_dimension_numbers<[1], [0], [0], [1], [0, 0, 1, 1], [], []>} : vector<8x3xbf16>, vector<3x324xbf16>, vector<8x324xf32> -> vector<8x324xf32>
    %14 = arith.addf %8, %13 : vector<8x324xf32>
    %c0_15 = arith.constant 0 : index
    %c0_16 = arith.constant 0 : index
    %c110 = arith.constant 110 : index
    %15 = vector.load %arg2[%c0_15, %c0_16, %c110] : memref<1x3x580xbf16, #tpu.memory_space<vmem>>, vector<1x3x324xbf16>
    %16 = vector.shape_cast %15 : vector<1x3x324xbf16> to vector<3x324xbf16>
    %c1 = arith.constant 1 : index
    %c0_17 = arith.constant 0 : index
    %c0_18 = arith.constant 0 : index
    %17 = vector.load %arg3[%c1, %c0_17, %c0_18] : memref<9x8x3xbf16, #tpu.memory_space<vmem>>, vector<1x8x3xbf16>
    %18 = vector.shape_cast %17 : vector<1x8x3xbf16> to vector<8x3xbf16>
    %cst_19 = arith.constant dense<0.000000e+00> : vector<8x324xf32>
    %19 = tpu.matmul %18, %16, %cst_19 {dimension_numbers = #tpu.dot_dimension_numbers<[1], [0], [0], [1], [0, 0, 1, 1], [], []>} : vector<8x3xbf16>, vector<3x324xbf16>, vector<8x324xf32> -> vector<8x324xf32>
    %20 = arith.addf %14, %19 : vector<8x324xf32>
    %c0_20 = arith.constant 0 : index
    %c0_21 = arith.constant 0 : index
    %c111 = arith.constant 111 : index
    %21 = vector.load %arg2[%c0_20, %c0_21, %c111] : memref<1x3x580xbf16, #tpu.memory_space<vmem>>, vector<1x3x324xbf16>
    %22 = vector.shape_cast %21 : vector<1x3x324xbf16> to vector<3x324xbf16>
    %c2 = arith.constant 2 : index
    %c0_22 = arith.constant 0 : index
    %c0_23 = arith.constant 0 : index
    %23 = vector.load %arg3[%c2, %c0_22, %c0_23] : memref<9x8x3xbf16, #tpu.memory_space<vmem>>, vector<1x8x3xbf16>
    %24 = vector.shape_cast %23 : vector<1x8x3xbf16> to vector<8x3xbf16>
    %cst_24 = arith.constant dense<0.000000e+00> : vector<8x324xf32>
    %25 = tpu.matmul %24, %22, %cst_24 {dimension_numbers = #tpu.dot_dimension_numbers<[1], [0], [0], [1], [0, 0, 1, 1], [], []>} : vector<8x3xbf16>, vector<3x324xbf16>, vector<8x324xf32> -> vector<8x324xf32>
    %26 = arith.addf %20, %25 : vector<8x324xf32>
    %c0_25 = arith.constant 0 : index
    %c0_26 = arith.constant 0 : index
    %c127 = arith.constant 127 : index
    %27 = vector.load %arg2[%c0_25, %c0_26, %c127] : memref<1x3x580xbf16, #tpu.memory_space<vmem>>, vector<1x3x324xbf16>
    %28 = vector.shape_cast %27 : vector<1x3x324xbf16> to vector<3x324xbf16>
    %c3 = arith.constant 3 : index
    %c0_27 = arith.constant 0 : index
    %c0_28 = arith.constant 0 : index
    %29 = vector.load %arg3[%c3, %c0_27, %c0_28] : memref<9x8x3xbf16, #tpu.memory_space<vmem>>, vector<1x8x3xbf16>
    %30 = vector.shape_cast %29 : vector<1x8x3xbf16> to vector<8x3xbf16>
    %cst_29 = arith.constant dense<0.000000e+00> : vector<8x324xf32>
    %31 = tpu.matmul %30, %28, %cst_29 {dimension_numbers = #tpu.dot_dimension_numbers<[1], [0], [0], [1], [0, 0, 1, 1], [], []>} : vector<8x3xbf16>, vector<3x324xbf16>, vector<8x324xf32> -> vector<8x324xf32>
    %32 = arith.addf %26, %31 : vector<8x324xf32>
    %c0_30 = arith.constant 0 : index
    %c0_31 = arith.constant 0 : index
    %c128 = arith.constant 128 : index
    %33 = vector.load %arg2[%c0_30, %c0_31, %c128] : memref<1x3x580xbf16, #tpu.memory_space<vmem>>, vector<1x3x324xbf16>
    %34 = vector.shape_cast %33 : vector<1x3x324xbf16> to vector<3x324xbf16>
    %c4 = arith.constant 4 : index
    %c0_32 = arith.constant 0 : index
    %c0_33 = arith.constant 0 : index
    %35 = vector.load %arg3[%c4, %c0_32, %c0_33] : memref<9x8x3xbf16, #tpu.memory_space<vmem>>, vector<1x8x3xbf16>
    %36 = vector.shape_cast %35 : vector<1x8x3xbf16> to vector<8x3xbf16>
    %cst_34 = arith.constant dense<0.000000e+00> : vector<8x324xf32>
    %37 = tpu.matmul %36, %34, %cst_34 {dimension_numbers = #tpu.dot_dimension_numbers<[1], [0], [0], [1], [0, 0, 1, 1], [], []>} : vector<8x3xbf16>, vector<3x324xbf16>, vector<8x324xf32> -> vector<8x324xf32>
    %38 = arith.addf %32, %37 : vector<8x324xf32>
    %c0_35 = arith.constant 0 : index
    %c0_36 = arith.constant 0 : index
    %c129 = arith.constant 129 : index
    %39 = vector.load %arg2[%c0_35, %c0_36, %c129] : memref<1x3x580xbf16, #tpu.memory_space<vmem>>, vector<1x3x324xbf16>
    %40 = vector.shape_cast %39 : vector<1x3x324xbf16> to vector<3x324xbf16>
    %c5 = arith.constant 5 : index
    %c0_37 = arith.constant 0 : index
    %c0_38 = arith.constant 0 : index
    %41 = vector.load %arg3[%c5, %c0_37, %c0_38] : memref<9x8x3xbf16, #tpu.memory_space<vmem>>, vector<1x8x3xbf16>
    %42 = vector.shape_cast %41 : vector<1x8x3xbf16> to vector<8x3xbf16>
    %cst_39 = arith.constant dense<0.000000e+00> : vector<8x324xf32>
    %43 = tpu.matmul %42, %40, %cst_39 {dimension_numbers = #tpu.dot_dimension_numbers<[1], [0], [0], [1], [0, 0, 1, 1], [], []>} : vector<8x3xbf16>, vector<3x324xbf16>, vector<8x324xf32> -> vector<8x324xf32>
    %44 = arith.addf %38, %43 : vector<8x324xf32>
    %c0_40 = arith.constant 0 : index
    %c0_41 = arith.constant 0 : index
    %c145 = arith.constant 145 : index
    %45 = vector.load %arg2[%c0_40, %c0_41, %c145] : memref<1x3x580xbf16, #tpu.memory_space<vmem>>, vector<1x3x324xbf16>
    %46 = vector.shape_cast %45 : vector<1x3x324xbf16> to vector<3x324xbf16>
    %c6 = arith.constant 6 : index
    %c0_42 = arith.constant 0 : index
    %c0_43 = arith.constant 0 : index
    %47 = vector.load %arg3[%c6, %c0_42, %c0_43] : memref<9x8x3xbf16, #tpu.memory_space<vmem>>, vector<1x8x3xbf16>
    %48 = vector.shape_cast %47 : vector<1x8x3xbf16> to vector<8x3xbf16>
    %cst_44 = arith.constant dense<0.000000e+00> : vector<8x324xf32>
    %49 = tpu.matmul %48, %46, %cst_44 {dimension_numbers = #tpu.dot_dimension_numbers<[1], [0], [0], [1], [0, 0, 1, 1], [], []>} : vector<8x3xbf16>, vector<3x324xbf16>, vector<8x324xf32> -> vector<8x324xf32>
    %50 = arith.addf %44, %49 : vector<8x324xf32>
    %c0_45 = arith.constant 0 : index
    %c0_46 = arith.constant 0 : index
    %c146 = arith.constant 146 : index
    %51 = vector.load %arg2[%c0_45, %c0_46, %c146] : memref<1x3x580xbf16, #tpu.memory_space<vmem>>, vector<1x3x324xbf16>
    %52 = vector.shape_cast %51 : vector<1x3x324xbf16> to vector<3x324xbf16>
    %c7 = arith.constant 7 : index
    %c0_47 = arith.constant 0 : index
    %c0_48 = arith.constant 0 : index
    %53 = vector.load %arg3[%c7, %c0_47, %c0_48] : memref<9x8x3xbf16, #tpu.memory_space<vmem>>, vector<1x8x3xbf16>
    %54 = vector.shape_cast %53 : vector<1x8x3xbf16> to vector<8x3xbf16>
    %cst_49 = arith.constant dense<0.000000e+00> : vector<8x324xf32>
    %55 = tpu.matmul %54, %52, %cst_49 {dimension_numbers = #tpu.dot_dimension_numbers<[1], [0], [0], [1], [0, 0, 1, 1], [], []>} : vector<8x3xbf16>, vector<3x324xbf16>, vector<8x324xf32> -> vector<8x324xf32>
    %56 = arith.addf %50, %55 : vector<8x324xf32>
    %c0_50 = arith.constant 0 : index
    %c0_51 = arith.constant 0 : index
    %c147 = arith.constant 147 : index
    %57 = vector.load %arg2[%c0_50, %c0_51, %c147] : memref<1x3x580xbf16, #tpu.memory_space<vmem>>, vector<1x3x324xbf16>
    %58 = vector.shape_cast %57 : vector<1x3x324xbf16> to vector<3x324xbf16>
    %c8 = arith.constant 8 : index
    %c0_52 = arith.constant 0 : index
    %c0_53 = arith.constant 0 : index
    %59 = vector.load %arg3[%c8, %c0_52, %c0_53] : memref<9x8x3xbf16, #tpu.memory_space<vmem>>, vector<1x8x3xbf16>
    %60 = vector.shape_cast %59 : vector<1x8x3xbf16> to vector<8x3xbf16>
    %cst_54 = arith.constant dense<0.000000e+00> : vector<8x324xf32>
    %61 = tpu.matmul %60, %58, %cst_54 {dimension_numbers = #tpu.dot_dimension_numbers<[1], [0], [0], [1], [0, 0, 1, 1], [], []>} : vector<8x3xbf16>, vector<3x324xbf16>, vector<8x324xf32> -> vector<8x324xf32>
    %62 = arith.addf %56, %61 : vector<8x324xf32>
    %c0_55 = arith.constant 0 : index
    %c0_56 = arith.constant 0 : index
    %63 = vector.load %arg4[%c0_55, %c0_56] : memref<8x1xf32, #tpu.memory_space<vmem>>, vector<8x1xf32>
    %64 = vector.broadcast %63 : vector<8x1xf32> to vector<8x324xf32>
    %65 = arith.addf %62, %64 : vector<8x324xf32>
    %cst_57 = arith.constant 0.000000e+00 : f32
    %66 = vector.broadcast %cst_57 : f32 to vector<8x324xf32>
    %67 = arith.maximumf %65, %66 : vector<8x324xf32>
    %c0_58 = arith.constant 0 : index
    %c0_59 = arith.constant 0 : index
    %c0_60 = arith.constant 0 : index
    %68 = vector.load %arg10[%c0_58, %c0_59, %c0_60] : memref<1x8x324xf32, #tpu.memory_space<vmem>>, vector<1x8x324xf32>
    %69 = vector.shape_cast %68 : vector<1x8x324xf32> to vector<8x324xf32>
    %70 = vector.shape_cast %67 : vector<8x324xf32> to vector<1x8x324xf32>
    tpu.vector_store %arg10[%c0_58, %c0_59, %c0_60], %70 {strides = array<i32>} : memref<1x8x324xf32, #tpu.memory_space<vmem>>, vector<1x8x324xf32>,
    %c0_61 = arith.constant 0 : index
    %c0_62 = arith.constant 0 : index
    %71 = vector.load %arg1[%c0_61, %c0_62] : memref<1x324xf32, #tpu.memory_space<vmem>>, vector<1x324xf32>
    %72 = vector.broadcast %71 : vector<1x324xf32> to vector<8x324xf32>
    %73 = arith.mulf %67, %72 : vector<8x324xf32>
    %74 = arith.truncf %73 : vector<8x324xf32> to vector<8x324xbf16>
    %c0_63 = arith.constant 0 : index
    %c128_64 = arith.constant 128 : index
    %75 = vector.load %arg12[%c0_63, %c128_64] : memref<8x580xbf16, #tpu.memory_space<vmem>>, vector<8x324xbf16>
    tpu.vector_store %arg12[%c0_63, %c128_64], %74 {strides = array<i32>} : memref<8x580xbf16, #tpu.memory_space<vmem>>, vector<8x324xbf16>,
    %cst_65 = arith.constant 0.000000e+00 : f32
    %76 = vector.broadcast %cst_65 : f32 to vector<8x324xf32>
    %c0_66 = arith.constant 0 : index
    %c109_67 = arith.constant 109 : index
    %77 = vector.load %arg12[%c0_66, %c109_67] : memref<8x580xbf16, #tpu.memory_space<vmem>>, vector<8x324xbf16>
    %c0_68 = arith.constant 0 : index
    %c0_69 = arith.constant 0 : index
    %c0_70 = arith.constant 0 : index
    %78 = vector.load %arg5[%c0_68, %c0_69, %c0_70] : memref<9x8x8xbf16, #tpu.memory_space<vmem>>, vector<1x8x8xbf16>
    %79 = vector.shape_cast %78 : vector<1x8x8xbf16> to vector<8x8xbf16>
    %cst_71 = arith.constant dense<0.000000e+00> : vector<8x324xf32>
    %80 = tpu.matmul %79, %77, %cst_71 {dimension_numbers = #tpu.dot_dimension_numbers<[1], [0], [0], [1], [0, 0, 1, 1], [], []>} : vector<8x8xbf16>, vector<8x324xbf16>, vector<8x324xf32> -> vector<8x324xf32>
    %81 = arith.addf %76, %80 : vector<8x324xf32>
    %c0_72 = arith.constant 0 : index
    %c110_73 = arith.constant 110 : index
    %82 = vector.load %arg12[%c0_72, %c110_73] : memref<8x580xbf16, #tpu.memory_space<vmem>>, vector<8x324xbf16>
    %c1_74 = arith.constant 1 : index
    %c0_75 = arith.constant 0 : index
    %c0_76 = arith.constant 0 : index
    %83 = vector.load %arg5[%c1_74, %c0_75, %c0_76] : memref<9x8x8xbf16, #tpu.memory_space<vmem>>, vector<1x8x8xbf16>
    %84 = vector.shape_cast %83 : vector<1x8x8xbf16> to vector<8x8xbf16>
    %cst_77 = arith.constant dense<0.000000e+00> : vector<8x324xf32>
    %85 = tpu.matmul %84, %82, %cst_77 {dimension_numbers = #tpu.dot_dimension_numbers<[1], [0], [0], [1], [0, 0, 1, 1], [], []>} : vector<8x8xbf16>, vector<8x324xbf16>, vector<8x324xf32> -> vector<8x324xf32>
    %86 = arith.addf %81, %85 : vector<8x324xf32>
    %c0_78 = arith.constant 0 : index
    %c111_79 = arith.constant 111 : index
    %87 = vector.load %arg12[%c0_78, %c111_79] : memref<8x580xbf16, #tpu.memory_space<vmem>>, vector<8x324xbf16>
    %c2_80 = arith.constant 2 : index
    %c0_81 = arith.constant 0 : index
    %c0_82 = arith.constant 0 : index
    %88 = vector.load %arg5[%c2_80, %c0_81, %c0_82] : memref<9x8x8xbf16, #tpu.memory_space<vmem>>, vector<1x8x8xbf16>
    %89 = vector.shape_cast %88 : vector<1x8x8xbf16> to vector<8x8xbf16>
    %cst_83 = arith.constant dense<0.000000e+00> : vector<8x324xf32>
    %90 = tpu.matmul %89, %87, %cst_83 {dimension_numbers = #tpu.dot_dimension_numbers<[1], [0], [0], [1], [0, 0, 1, 1], [], []>} : vector<8x8xbf16>, vector<8x324xbf16>, vector<8x324xf32> -> vector<8x324xf32>
    %91 = arith.addf %86, %90 : vector<8x324xf32>
    %c0_84 = arith.constant 0 : index
    %c127_85 = arith.constant 127 : index
    %92 = vector.load %arg12[%c0_84, %c127_85] : memref<8x580xbf16, #tpu.memory_space<vmem>>, vector<8x324xbf16>
    %c3_86 = arith.constant 3 : index
    %c0_87 = arith.constant 0 : index
    %c0_88 = arith.constant 0 : index
    %93 = vector.load %arg5[%c3_86, %c0_87, %c0_88] : memref<9x8x8xbf16, #tpu.memory_space<vmem>>, vector<1x8x8xbf16>
    %94 = vector.shape_cast %93 : vector<1x8x8xbf16> to vector<8x8xbf16>
    %cst_89 = arith.constant dense<0.000000e+00> : vector<8x324xf32>
    %95 = tpu.matmul %94, %92, %cst_89 {dimension_numbers = #tpu.dot_dimension_numbers<[1], [0], [0], [1], [0, 0, 1, 1], [], []>} : vector<8x8xbf16>, vector<8x324xbf16>, vector<8x324xf32> -> vector<8x324xf32>
    %96 = arith.addf %91, %95 : vector<8x324xf32>
    %c0_90 = arith.constant 0 : index
    %c128_91 = arith.constant 128 : index
    %97 = vector.load %arg12[%c0_90, %c128_91] : memref<8x580xbf16, #tpu.memory_space<vmem>>, vector<8x324xbf16>
    %c4_92 = arith.constant 4 : index
    %c0_93 = arith.constant 0 : index
    %c0_94 = arith.constant 0 : index
    %98 = vector.load %arg5[%c4_92, %c0_93, %c0_94] : memref<9x8x8xbf16, #tpu.memory_space<vmem>>, vector<1x8x8xbf16>
    %99 = vector.shape_cast %98 : vector<1x8x8xbf16> to vector<8x8xbf16>
    %cst_95 = arith.constant dense<0.000000e+00> : vector<8x324xf32>
    %100 = tpu.matmul %99, %97, %cst_95 {dimension_numbers = #tpu.dot_dimension_numbers<[1], [0], [0], [1], [0, 0, 1, 1], [], []>} : vector<8x8xbf16>, vector<8x324xbf16>, vector<8x324xf32> -> vector<8x324xf32>
    %101 = arith.addf %96, %100 : vector<8x324xf32>
    %c0_96 = arith.constant 0 : index
    %c129_97 = arith.constant 129 : index
    %102 = vector.load %arg12[%c0_96, %c129_97] : memref<8x580xbf16, #tpu.memory_space<vmem>>, vector<8x324xbf16>
    %c5_98 = arith.constant 5 : index
    %c0_99 = arith.constant 0 : index
    %c0_100 = arith.constant 0 : index
    %103 = vector.load %arg5[%c5_98, %c0_99, %c0_100] : memref<9x8x8xbf16, #tpu.memory_space<vmem>>, vector<1x8x8xbf16>
    %104 = vector.shape_cast %103 : vector<1x8x8xbf16> to vector<8x8xbf16>
    %cst_101 = arith.constant dense<0.000000e+00> : vector<8x324xf32>
    %105 = tpu.matmul %104, %102, %cst_101 {dimension_numbers = #tpu.dot_dimension_numbers<[1], [0], [0], [1], [0, 0, 1, 1], [], []>} : vector<8x8xbf16>, vector<8x324xbf16>, vector<8x324xf32> -> vector<8x324xf32>
    %106 = arith.addf %101, %105 : vector<8x324xf32>
    %c0_102 = arith.constant 0 : index
    %c145_103 = arith.constant 145 : index
    %107 = vector.load %arg12[%c0_102, %c145_103] : memref<8x580xbf16, #tpu.memory_space<vmem>>, vector<8x324xbf16>
    %c6_104 = arith.constant 6 : index
    %c0_105 = arith.constant 0 : index
    %c0_106 = arith.constant 0 : index
    %108 = vector.load %arg5[%c6_104, %c0_105, %c0_106] : memref<9x8x8xbf16, #tpu.memory_space<vmem>>, vector<1x8x8xbf16>
    %109 = vector.shape_cast %108 : vector<1x8x8xbf16> to vector<8x8xbf16>
    %cst_107 = arith.constant dense<0.000000e+00> : vector<8x324xf32>
    %110 = tpu.matmul %109, %107, %cst_107 {dimension_numbers = #tpu.dot_dimension_numbers<[1], [0], [0], [1], [0, 0, 1, 1], [], []>} : vector<8x8xbf16>, vector<8x324xbf16>, vector<8x324xf32> -> vector<8x324xf32>
    %111 = arith.addf %106, %110 : vector<8x324xf32>
    %c0_108 = arith.constant 0 : index
    %c146_109 = arith.constant 146 : index
    %112 = vector.load %arg12[%c0_108, %c146_109] : memref<8x580xbf16, #tpu.memory_space<vmem>>, vector<8x324xbf16>
    %c7_110 = arith.constant 7 : index
    %c0_111 = arith.constant 0 : index
    %c0_112 = arith.constant 0 : index
    %113 = vector.load %arg5[%c7_110, %c0_111, %c0_112] : memref<9x8x8xbf16, #tpu.memory_space<vmem>>, vector<1x8x8xbf16>
    %114 = vector.shape_cast %113 : vector<1x8x8xbf16> to vector<8x8xbf16>
    %cst_113 = arith.constant dense<0.000000e+00> : vector<8x324xf32>
    %115 = tpu.matmul %114, %112, %cst_113 {dimension_numbers = #tpu.dot_dimension_numbers<[1], [0], [0], [1], [0, 0, 1, 1], [], []>} : vector<8x8xbf16>, vector<8x324xbf16>, vector<8x324xf32> -> vector<8x324xf32>
    %116 = arith.addf %111, %115 : vector<8x324xf32>
    %c0_114 = arith.constant 0 : index
    %c147_115 = arith.constant 147 : index
    %117 = vector.load %arg12[%c0_114, %c147_115] : memref<8x580xbf16, #tpu.memory_space<vmem>>, vector<8x324xbf16>
    %c8_116 = arith.constant 8 : index
    %c0_117 = arith.constant 0 : index
    %c0_118 = arith.constant 0 : index
    %118 = vector.load %arg5[%c8_116, %c0_117, %c0_118] : memref<9x8x8xbf16, #tpu.memory_space<vmem>>, vector<1x8x8xbf16>
    %119 = vector.shape_cast %118 : vector<1x8x8xbf16> to vector<8x8xbf16>
    %cst_119 = arith.constant dense<0.000000e+00> : vector<8x324xf32>
    %120 = tpu.matmul %119, %117, %cst_119 {dimension_numbers = #tpu.dot_dimension_numbers<[1], [0], [0], [1], [0, 0, 1, 1], [], []>} : vector<8x8xbf16>, vector<8x324xbf16>, vector<8x324xf32> -> vector<8x324xf32>
    %121 = arith.addf %116, %120 : vector<8x324xf32>
    %c0_120 = arith.constant 0 : index
    %c0_121 = arith.constant 0 : index
    %122 = vector.load %arg6[%c0_120, %c0_121] : memref<8x1xf32, #tpu.memory_space<vmem>>, vector<8x1xf32>
    %123 = vector.broadcast %122 : vector<8x1xf32> to vector<8x324xf32>
    %124 = arith.addf %121, %123 : vector<8x324xf32>
    %cst_122 = arith.constant 0.000000e+00 : f32
    %125 = vector.broadcast %cst_122 : f32 to vector<8x324xf32>
    %126 = arith.maximumf %124, %125 : vector<8x324xf32>
    %127 = arith.truncf %126 : vector<8x324xf32> to vector<8x324xbf16>
    %c0_123 = arith.constant 0 : index
    %c0_124 = arith.constant 0 : index
    %128 = vector.load %arg13[%c0_123, %c0_124] : memref<8x324xbf16, #tpu.memory_space<vmem>>, vector<8x324xbf16>
    tpu.vector_store %arg13[%c0_123, %c0_124], %127 {strides = array<i32>} : memref<8x324xbf16, #tpu.memory_space<vmem>>, vector<8x324xbf16>,
    %c0_125 = arith.constant 0 : index
    %c19 = arith.constant 19 : index
    %129 = vector.load %arg13[%c0_125, %c19] : memref<8x324xbf16, #tpu.memory_space<vmem>>, vector<8x16xbf16>
    %c0_126 = arith.constant 0 : index
    %c20 = arith.constant 20 : index
    %130 = vector.load %arg13[%c0_126, %c20] : memref<8x324xbf16, #tpu.memory_space<vmem>>, vector<8x16xbf16>
    %131 = arith.maximumf %129, %130 : vector<8x16xbf16>
    %c0_127 = arith.constant 0 : index
    %c37 = arith.constant 37 : index
    %132 = vector.load %arg13[%c0_127, %c37] : memref<8x324xbf16, #tpu.memory_space<vmem>>, vector<8x16xbf16>
    %c0_128 = arith.constant 0 : index
    %c38 = arith.constant 38 : index
    %133 = vector.load %arg13[%c0_128, %c38] : memref<8x324xbf16, #tpu.memory_space<vmem>>, vector<8x16xbf16>
    %134 = arith.maximumf %132, %133 : vector<8x16xbf16>
    %135 = arith.maximumf %131, %134 : vector<8x16xbf16>
    %c0_129 = arith.constant 0 : index
    %c0_130 = arith.constant 0 : index
    %136 = vector.load %arg7[%c0_129, %c0_130] : memref<16x10xbf16, #tpu.memory_space<vmem>>, vector<16x10xbf16>
    %cst_131 = arith.constant dense<0.000000e+00> : vector<8x10xf32>
    %137 = tpu.matmul %135, %136, %cst_131 {dimension_numbers = #tpu.dot_dimension_numbers<[1], [0], [0], [1], [0, 0, 1, 1], [], []>} : vector<8x16xbf16>, vector<16x10xbf16>, vector<8x10xf32> -> vector<8x10xf32>
    %138 = arith.truncf %137 : vector<8x10xf32> to vector<8x10xbf16>
    %c0_132 = arith.constant 0 : index
    %c138 = arith.constant 138 : index
    %139 = vector.load %arg14[%c0_132, %c138] : memref<8x356xbf16, #tpu.memory_space<vmem>>, vector<8x10xbf16>
    tpu.vector_store %arg14[%c0_132, %c138], %138 {strides = array<i32>} : memref<8x356xbf16, #tpu.memory_space<vmem>>, vector<8x10xbf16>,
    %c0_133 = arith.constant 0 : index
    %c55 = arith.constant 55 : index
    %140 = vector.load %arg13[%c0_133, %c55] : memref<8x324xbf16, #tpu.memory_space<vmem>>, vector<8x16xbf16>
    %c0_134 = arith.constant 0 : index
    %c56 = arith.constant 56 : index
    %141 = vector.load %arg13[%c0_134, %c56] : memref<8x324xbf16, #tpu.memory_space<vmem>>, vector<8x16xbf16>
    %142 = arith.maximumf %140, %141 : vector<8x16xbf16>
    %c0_135 = arith.constant 0 : index
    %c73 = arith.constant 73 : index
    %143 = vector.load %arg13[%c0_135, %c73] : memref<8x324xbf16, #tpu.memory_space<vmem>>, vector<8x16xbf16>
    %c0_136 = arith.constant 0 : index
    %c74 = arith.constant 74 : index
    %144 = vector.load %arg13[%c0_136, %c74] : memref<8x324xbf16, #tpu.memory_space<vmem>>, vector<8x16xbf16>
    %145 = arith.maximumf %143, %144 : vector<8x16xbf16>
    %146 = arith.maximumf %142, %145 : vector<8x16xbf16>
    %c0_137 = arith.constant 0 : index
    %c0_138 = arith.constant 0 : index
    %147 = vector.load %arg7[%c0_137, %c0_138] : memref<16x10xbf16, #tpu.memory_space<vmem>>, vector<16x10xbf16>
    %cst_139 = arith.constant dense<0.000000e+00> : vector<8x10xf32>
    %148 = tpu.matmul %146, %147, %cst_139 {dimension_numbers = #tpu.dot_dimension_numbers<[1], [0], [0], [1], [0, 0, 1, 1], [], []>} : vector<8x16xbf16>, vector<16x10xbf16>, vector<8x10xf32> -> vector<8x10xf32>
    %149 = arith.truncf %148 : vector<8x10xf32> to vector<8x10xbf16>
    %c0_140 = arith.constant 0 : index
    %c148 = arith.constant 148 : index
    %150 = vector.load %arg14[%c0_140, %c148] : memref<8x356xbf16, #tpu.memory_space<vmem>>, vector<8x10xbf16>
    tpu.vector_store %arg14[%c0_140, %c148], %149 {strides = array<i32>} : memref<8x356xbf16, #tpu.memory_space<vmem>>, vector<8x10xbf16>,
    %c0_141 = arith.constant 0 : index
    %c91 = arith.constant 91 : index
    %151 = vector.load %arg13[%c0_141, %c91] : memref<8x324xbf16, #tpu.memory_space<vmem>>, vector<8x16xbf16>
    %c0_142 = arith.constant 0 : index
    %c92 = arith.constant 92 : index
    %152 = vector.load %arg13[%c0_142, %c92] : memref<8x324xbf16, #tpu.memory_space<vmem>>, vector<8x16xbf16>
    %153 = arith.maximumf %151, %152 : vector<8x16xbf16>
    %c0_143 = arith.constant 0 : index
    %c109_144 = arith.constant 109 : index
    %154 = vector.load %arg13[%c0_143, %c109_144] : memref<8x324xbf16, #tpu.memory_space<vmem>>, vector<8x16xbf16>
    %c0_145 = arith.constant 0 : index
    %c110_146 = arith.constant 110 : index
    %155 = vector.load %arg13[%c0_145, %c110_146] : memref<8x324xbf16, #tpu.memory_space<vmem>>, vector<8x16xbf16>
    %156 = arith.maximumf %154, %155 : vector<8x16xbf16>
    %157 = arith.maximumf %153, %156 : vector<8x16xbf16>
    %c0_147 = arith.constant 0 : index
    %c0_148 = arith.constant 0 : index
    %158 = vector.load %arg7[%c0_147, %c0_148] : memref<16x10xbf16, #tpu.memory_space<vmem>>, vector<16x10xbf16>
    %cst_149 = arith.constant dense<0.000000e+00> : vector<8x10xf32>
    %159 = tpu.matmul %157, %158, %cst_149 {dimension_numbers = #tpu.dot_dimension_numbers<[1], [0], [0], [1], [0, 0, 1, 1], [], []>} : vector<8x16xbf16>, vector<16x10xbf16>, vector<8x10xf32> -> vector<8x10xf32>
    %160 = arith.truncf %159 : vector<8x10xf32> to vector<8x10xbf16>
    %c0_150 = arith.constant 0 : index
    %c158 = arith.constant 158 : index
    %161 = vector.load %arg14[%c0_150, %c158] : memref<8x356xbf16, #tpu.memory_space<vmem>>, vector<8x10xbf16>
    tpu.vector_store %arg14[%c0_150, %c158], %160 {strides = array<i32>} : memref<8x356xbf16, #tpu.memory_space<vmem>>, vector<8x10xbf16>,
    %c0_151 = arith.constant 0 : index
    %c127_152 = arith.constant 127 : index
    %162 = vector.load %arg13[%c0_151, %c127_152] : memref<8x324xbf16, #tpu.memory_space<vmem>>, vector<8x16xbf16>
    %c0_153 = arith.constant 0 : index
    %c128_154 = arith.constant 128 : index
    %163 = vector.load %arg13[%c0_153, %c128_154] : memref<8x324xbf16, #tpu.memory_space<vmem>>, vector<8x16xbf16>
    %164 = arith.maximumf %162, %163 : vector<8x16xbf16>
    %c0_155 = arith.constant 0 : index
    %c145_156 = arith.constant 145 : index
    %165 = vector.load %arg13[%c0_155, %c145_156] : memref<8x324xbf16, #tpu.memory_space<vmem>>, vector<8x16xbf16>
    %c0_157 = arith.constant 0 : index
    %c146_158 = arith.constant 146 : index
    %166 = vector.load %arg13[%c0_157, %c146_158] : memref<8x324xbf16, #tpu.memory_space<vmem>>, vector<8x16xbf16>
    %167 = arith.maximumf %165, %166 : vector<8x16xbf16>
    %168 = arith.maximumf %164, %167 : vector<8x16xbf16>
    %c0_159 = arith.constant 0 : index
    %c0_160 = arith.constant 0 : index
    %169 = vector.load %arg7[%c0_159, %c0_160] : memref<16x10xbf16, #tpu.memory_space<vmem>>, vector<16x10xbf16>
    %cst_161 = arith.constant dense<0.000000e+00> : vector<8x10xf32>
    %170 = tpu.matmul %168, %169, %cst_161 {dimension_numbers = #tpu.dot_dimension_numbers<[1], [0], [0], [1], [0, 0, 1, 1], [], []>} : vector<8x16xbf16>, vector<16x10xbf16>, vector<8x10xf32> -> vector<8x10xf32>
    %171 = arith.truncf %170 : vector<8x10xf32> to vector<8x10xbf16>
    %c0_162 = arith.constant 0 : index
    %c168 = arith.constant 168 : index
    %172 = vector.load %arg14[%c0_162, %c168] : memref<8x356xbf16, #tpu.memory_space<vmem>>, vector<8x10xbf16>
    tpu.vector_store %arg14[%c0_162, %c168], %171 {strides = array<i32>} : memref<8x356xbf16, #tpu.memory_space<vmem>>, vector<8x10xbf16>,
    %c0_163 = arith.constant 0 : index
    %c163 = arith.constant 163 : index
    %173 = vector.load %arg13[%c0_163, %c163] : memref<8x324xbf16, #tpu.memory_space<vmem>>, vector<8x16xbf16>
    %c0_164 = arith.constant 0 : index
    %c164 = arith.constant 164 : index
    %174 = vector.load %arg13[%c0_164, %c164] : memref<8x324xbf16, #tpu.memory_space<vmem>>, vector<8x16xbf16>
    %175 = arith.maximumf %173, %174 : vector<8x16xbf16>
    %c0_165 = arith.constant 0 : index
    %c181 = arith.constant 181 : index
    %176 = vector.load %arg13[%c0_165, %c181] : memref<8x324xbf16, #tpu.memory_space<vmem>>, vector<8x16xbf16>
    %c0_166 = arith.constant 0 : index
    %c182 = arith.constant 182 : index
    %177 = vector.load %arg13[%c0_166, %c182] : memref<8x324xbf16, #tpu.memory_space<vmem>>, vector<8x16xbf16>
    %178 = arith.maximumf %176, %177 : vector<8x16xbf16>
    %179 = arith.maximumf %175, %178 : vector<8x16xbf16>
    %c0_167 = arith.constant 0 : index
    %c0_168 = arith.constant 0 : index
    %180 = vector.load %arg7[%c0_167, %c0_168] : memref<16x10xbf16, #tpu.memory_space<vmem>>, vector<16x10xbf16>
    %cst_169 = arith.constant dense<0.000000e+00> : vector<8x10xf32>
    %181 = tpu.matmul %179, %180, %cst_169 {dimension_numbers = #tpu.dot_dimension_numbers<[1], [0], [0], [1], [0, 0, 1, 1], [], []>} : vector<8x16xbf16>, vector<16x10xbf16>, vector<8x10xf32> -> vector<8x10xf32>
    %182 = arith.truncf %181 : vector<8x10xf32> to vector<8x10xbf16>
    %c0_170 = arith.constant 0 : index
    %c178 = arith.constant 178 : index
    %183 = vector.load %arg14[%c0_170, %c178] : memref<8x356xbf16, #tpu.memory_space<vmem>>, vector<8x10xbf16>
    tpu.vector_store %arg14[%c0_170, %c178], %182 {strides = array<i32>} : memref<8x356xbf16, #tpu.memory_space<vmem>>, vector<8x10xbf16>,
    %c0_171 = arith.constant 0 : index
    %c199 = arith.constant 199 : index
    %184 = vector.load %arg13[%c0_171, %c199] : memref<8x324xbf16, #tpu.memory_space<vmem>>, vector<8x16xbf16>
    %c0_172 = arith.constant 0 : index
    %c200 = arith.constant 200 : index
    %185 = vector.load %arg13[%c0_172, %c200] : memref<8x324xbf16, #tpu.memory_space<vmem>>, vector<8x16xbf16>
    %186 = arith.maximumf %184, %185 : vector<8x16xbf16>
    %c0_173 = arith.constant 0 : index
    %c217 = arith.constant 217 : index
    %187 = vector.load %arg13[%c0_173, %c217] : memref<8x324xbf16, #tpu.memory_space<vmem>>, vector<8x16xbf16>
    %c0_174 = arith.constant 0 : index
    %c218_175 = arith.constant 218 : index
    %188 = vector.load %arg13[%c0_174, %c218_175] : memref<8x324xbf16, #tpu.memory_space<vmem>>, vector<8x16xbf16>
    %189 = arith.maximumf %187, %188 : vector<8x16xbf16>
    %190 = arith.maximumf %186, %189 : vector<8x16xbf16>
    %c0_176 = arith.constant 0 : index
    %c0_177 = arith.constant 0 : index
    %191 = vector.load %arg7[%c0_176, %c0_177] : memref<16x10xbf16, #tpu.memory_space<vmem>>, vector<16x10xbf16>
    %cst_178 = arith.constant dense<0.000000e+00> : vector<8x10xf32>
    %192 = tpu.matmul %190, %191, %cst_178 {dimension_numbers = #tpu.dot_dimension_numbers<[1], [0], [0], [1], [0, 0, 1, 1], [], []>} : vector<8x16xbf16>, vector<16x10xbf16>, vector<8x10xf32> -> vector<8x10xf32>
    %193 = arith.truncf %192 : vector<8x10xf32> to vector<8x10xbf16>
    %c0_179 = arith.constant 0 : index
    %c188 = arith.constant 188 : index
    %194 = vector.load %arg14[%c0_179, %c188] : memref<8x356xbf16, #tpu.memory_space<vmem>>, vector<8x10xbf16>
    tpu.vector_store %arg14[%c0_179, %c188], %193 {strides = array<i32>} : memref<8x356xbf16, #tpu.memory_space<vmem>>, vector<8x10xbf16>,
    %c0_180 = arith.constant 0 : index
    %c235 = arith.constant 235 : index
    %195 = vector.load %arg13[%c0_180, %c235] : memref<8x324xbf16, #tpu.memory_space<vmem>>, vector<8x16xbf16>
    %c0_181 = arith.constant 0 : index
    %c236 = arith.constant 236 : index
    %196 = vector.load %arg13[%c0_181, %c236] : memref<8x324xbf16, #tpu.memory_space<vmem>>, vector<8x16xbf16>
    %197 = arith.maximumf %195, %196 : vector<8x16xbf16>
    %c0_182 = arith.constant 0 : index
    %c253 = arith.constant 253 : index
    %198 = vector.load %arg13[%c0_182, %c253] : memref<8x324xbf16, #tpu.memory_space<vmem>>, vector<8x16xbf16>
    %c0_183 = arith.constant 0 : index
    %c254 = arith.constant 254 : index
    %199 = vector.load %arg13[%c0_183, %c254] : memref<8x324xbf16, #tpu.memory_space<vmem>>, vector<8x16xbf16>
    %200 = arith.maximumf %198, %199 : vector<8x16xbf16>
    %201 = arith.maximumf %197, %200 : vector<8x16xbf16>
    %c0_184 = arith.constant 0 : index
    %c0_185 = arith.constant 0 : index
    %202 = vector.load %arg7[%c0_184, %c0_185] : memref<16x10xbf16, #tpu.memory_space<vmem>>, vector<16x10xbf16>
    %cst_186 = arith.constant dense<0.000000e+00> : vector<8x10xf32>
    %203 = tpu.matmul %201, %202, %cst_186 {dimension_numbers = #tpu.dot_dimension_numbers<[1], [0], [0], [1], [0, 0, 1, 1], [], []>} : vector<8x16xbf16>, vector<16x10xbf16>, vector<8x10xf32> -> vector<8x10xf32>
    %204 = arith.truncf %203 : vector<8x10xf32> to vector<8x10xbf16>
    %c0_187 = arith.constant 0 : index
    %c198 = arith.constant 198 : index
    %205 = vector.load %arg14[%c0_187, %c198] : memref<8x356xbf16, #tpu.memory_space<vmem>>, vector<8x10xbf16>
    tpu.vector_store %arg14[%c0_187, %c198], %204 {strides = array<i32>} : memref<8x356xbf16, #tpu.memory_space<vmem>>, vector<8x10xbf16>,
    %c0_188 = arith.constant 0 : index
    %c271 = arith.constant 271 : index
    %206 = vector.load %arg13[%c0_188, %c271] : memref<8x324xbf16, #tpu.memory_space<vmem>>, vector<8x16xbf16>
    %c0_189 = arith.constant 0 : index
    %c272 = arith.constant 272 : index
    %207 = vector.load %arg13[%c0_189, %c272] : memref<8x324xbf16, #tpu.memory_space<vmem>>, vector<8x16xbf16>
    %208 = arith.maximumf %206, %207 : vector<8x16xbf16>
    %c0_190 = arith.constant 0 : index
    %c289 = arith.constant 289 : index
    %209 = vector.load %arg13[%c0_190, %c289] : memref<8x324xbf16, #tpu.memory_space<vmem>>, vector<8x16xbf16>
    %c0_191 = arith.constant 0 : index
    %c290 = arith.constant 290 : index
    %210 = vector.load %arg13[%c0_191, %c290] : memref<8x324xbf16, #tpu.memory_space<vmem>>, vector<8x16xbf16>
    %211 = arith.maximumf %209, %210 : vector<8x16xbf16>
    %212 = arith.maximumf %208, %211 : vector<8x16xbf16>
    %c0_192 = arith.constant 0 : index
    %c0_193 = arith.constant 0 : index
    %213 = vector.load %arg7[%c0_192, %c0_193] : memref<16x10xbf16, #tpu.memory_space<vmem>>, vector<16x10xbf16>
    %cst_194 = arith.constant dense<0.000000e+00> : vector<8x10xf32>
    %214 = tpu.matmul %212, %213, %cst_194 {dimension_numbers = #tpu.dot_dimension_numbers<[1], [0], [0], [1], [0, 0, 1, 1], [], []>} : vector<8x16xbf16>, vector<16x10xbf16>, vector<8x10xf32> -> vector<8x10xf32>
    %215 = arith.truncf %214 : vector<8x10xf32> to vector<8x10xbf16>
    %c0_195 = arith.constant 0 : index
    %c208 = arith.constant 208 : index
    %216 = vector.load %arg14[%c0_195, %c208] : memref<8x356xbf16, #tpu.memory_space<vmem>>, vector<8x10xbf16>
    tpu.vector_store %arg14[%c0_195, %c208], %215 {strides = array<i32>} : memref<8x356xbf16, #tpu.memory_space<vmem>>, vector<8x10xbf16>,
    %cst_196 = arith.constant 0.000000e+00 : f32
    %217 = vector.broadcast %cst_196 : f32 to vector<16x100xf32>
    %c0_197 = arith.constant 0 : index
    %c117 = arith.constant 117 : index
    %218 = vector.load %arg14[%c0_197, %c117] : memref<8x356xbf16, #tpu.memory_space<vmem>>, vector<8x100xbf16>
    %c0_198 = arith.constant 0 : index
    %c0_199 = arith.constant 0 : index
    %c0_200 = arith.constant 0 : index
    %219 = vector.load %arg8[%c0_198, %c0_199, %c0_200] : memref<9x16x8xbf16, #tpu.memory_space<vmem>>, vector<1x16x8xbf16>
    %220 = vector.shape_cast %219 : vector<1x16x8xbf16> to vector<16x8xbf16>
    %cst_201 = arith.constant dense<0.000000e+00> : vector<16x100xf32>
    %221 = tpu.matmul %220, %218, %cst_201 {dimension_numbers = #tpu.dot_dimension_numbers<[1], [0], [0], [1], [0, 0, 1, 1], [], []>} : vector<16x8xbf16>, vector<8x100xbf16>, vector<16x100xf32> -> vector<16x100xf32>
    %222 = arith.addf %217, %221 : vector<16x100xf32>
    %c0_202 = arith.constant 0 : index
    %c118 = arith.constant 118 : index
    %223 = vector.load %arg14[%c0_202, %c118] : memref<8x356xbf16, #tpu.memory_space<vmem>>, vector<8x100xbf16>
    %c1_203 = arith.constant 1 : index
    %c0_204 = arith.constant 0 : index
    %c0_205 = arith.constant 0 : index
    %224 = vector.load %arg8[%c1_203, %c0_204, %c0_205] : memref<9x16x8xbf16, #tpu.memory_space<vmem>>, vector<1x16x8xbf16>
    %225 = vector.shape_cast %224 : vector<1x16x8xbf16> to vector<16x8xbf16>
    %cst_206 = arith.constant dense<0.000000e+00> : vector<16x100xf32>
    %226 = tpu.matmul %225, %223, %cst_206 {dimension_numbers = #tpu.dot_dimension_numbers<[1], [0], [0], [1], [0, 0, 1, 1], [], []>} : vector<16x8xbf16>, vector<8x100xbf16>, vector<16x100xf32> -> vector<16x100xf32>
    %227 = arith.addf %222, %226 : vector<16x100xf32>
    %c0_207 = arith.constant 0 : index
    %c119 = arith.constant 119 : index
    %228 = vector.load %arg14[%c0_207, %c119] : memref<8x356xbf16, #tpu.memory_space<vmem>>, vector<8x100xbf16>
    %c2_208 = arith.constant 2 : index
    %c0_209 = arith.constant 0 : index
    %c0_210 = arith.constant 0 : index
    %229 = vector.load %arg8[%c2_208, %c0_209, %c0_210] : memref<9x16x8xbf16, #tpu.memory_space<vmem>>, vector<1x16x8xbf16>
    %230 = vector.shape_cast %229 : vector<1x16x8xbf16> to vector<16x8xbf16>
    %cst_211 = arith.constant dense<0.000000e+00> : vector<16x100xf32>
    %231 = tpu.matmul %230, %228, %cst_211 {dimension_numbers = #tpu.dot_dimension_numbers<[1], [0], [0], [1], [0, 0, 1, 1], [], []>} : vector<16x8xbf16>, vector<8x100xbf16>, vector<16x100xf32> -> vector<16x100xf32>
    %232 = arith.addf %227, %231 : vector<16x100xf32>
    %c0_212 = arith.constant 0 : index
    %c127_213 = arith.constant 127 : index
    %233 = vector.load %arg14[%c0_212, %c127_213] : memref<8x356xbf16, #tpu.memory_space<vmem>>, vector<8x100xbf16>
    %c3_214 = arith.constant 3 : index
    %c0_215 = arith.constant 0 : index
    %c0_216 = arith.constant 0 : index
    %234 = vector.load %arg8[%c3_214, %c0_215, %c0_216] : memref<9x16x8xbf16, #tpu.memory_space<vmem>>, vector<1x16x8xbf16>
    %235 = vector.shape_cast %234 : vector<1x16x8xbf16> to vector<16x8xbf16>
    %cst_217 = arith.constant dense<0.000000e+00> : vector<16x100xf32>
    %236 = tpu.matmul %235, %233, %cst_217 {dimension_numbers = #tpu.dot_dimension_numbers<[1], [0], [0], [1], [0, 0, 1, 1], [], []>} : vector<16x8xbf16>, vector<8x100xbf16>, vector<16x100xf32> -> vector<16x100xf32>
    %237 = arith.addf %232, %236 : vector<16x100xf32>
    %c0_218 = arith.constant 0 : index
    %c128_219 = arith.constant 128 : index
    %238 = vector.load %arg14[%c0_218, %c128_219] : memref<8x356xbf16, #tpu.memory_space<vmem>>, vector<8x100xbf16>
    %c4_220 = arith.constant 4 : index
    %c0_221 = arith.constant 0 : index
    %c0_222 = arith.constant 0 : index
    %239 = vector.load %arg8[%c4_220, %c0_221, %c0_222] : memref<9x16x8xbf16, #tpu.memory_space<vmem>>, vector<1x16x8xbf16>
    %240 = vector.shape_cast %239 : vector<1x16x8xbf16> to vector<16x8xbf16>
    %cst_223 = arith.constant dense<0.000000e+00> : vector<16x100xf32>
    %241 = tpu.matmul %240, %238, %cst_223 {dimension_numbers = #tpu.dot_dimension_numbers<[1], [0], [0], [1], [0, 0, 1, 1], [], []>} : vector<16x8xbf16>, vector<8x100xbf16>, vector<16x100xf32> -> vector<16x100xf32>
    %242 = arith.addf %237, %241 : vector<16x100xf32>
    %c0_224 = arith.constant 0 : index
    %c129_225 = arith.constant 129 : index
    %243 = vector.load %arg14[%c0_224, %c129_225] : memref<8x356xbf16, #tpu.memory_space<vmem>>, vector<8x100xbf16>
    %c5_226 = arith.constant 5 : index
    %c0_227 = arith.constant 0 : index
    %c0_228 = arith.constant 0 : index
    %244 = vector.load %arg8[%c5_226, %c0_227, %c0_228] : memref<9x16x8xbf16, #tpu.memory_space<vmem>>, vector<1x16x8xbf16>
    %245 = vector.shape_cast %244 : vector<1x16x8xbf16> to vector<16x8xbf16>
    %cst_229 = arith.constant dense<0.000000e+00> : vector<16x100xf32>
    %246 = tpu.matmul %245, %243, %cst_229 {dimension_numbers = #tpu.dot_dimension_numbers<[1], [0], [0], [1], [0, 0, 1, 1], [], []>} : vector<16x8xbf16>, vector<8x100xbf16>, vector<16x100xf32> -> vector<16x100xf32>
    %247 = arith.addf %242, %246 : vector<16x100xf32>
    %c0_230 = arith.constant 0 : index
    %c137 = arith.constant 137 : index
    %248 = vector.load %arg14[%c0_230, %c137] : memref<8x356xbf16, #tpu.memory_space<vmem>>, vector<8x100xbf16>
    %c6_231 = arith.constant 6 : index
    %c0_232 = arith.constant 0 : index
    %c0_233 = arith.constant 0 : index
    %249 = vector.load %arg8[%c6_231, %c0_232, %c0_233] : memref<9x16x8xbf16, #tpu.memory_space<vmem>>, vector<1x16x8xbf16>
    %250 = vector.shape_cast %249 : vector<1x16x8xbf16> to vector<16x8xbf16>
    %cst_234 = arith.constant dense<0.000000e+00> : vector<16x100xf32>
    %251 = tpu.matmul %250, %248, %cst_234 {dimension_numbers = #tpu.dot_dimension_numbers<[1], [0], [0], [1], [0, 0, 1, 1], [], []>} : vector<16x8xbf16>, vector<8x100xbf16>, vector<16x100xf32> -> vector<16x100xf32>
    %252 = arith.addf %247, %251 : vector<16x100xf32>
    %c0_235 = arith.constant 0 : index
    %c138_236 = arith.constant 138 : index
    %253 = vector.load %arg14[%c0_235, %c138_236] : memref<8x356xbf16, #tpu.memory_space<vmem>>, vector<8x100xbf16>
    %c7_237 = arith.constant 7 : index
    %c0_238 = arith.constant 0 : index
    %c0_239 = arith.constant 0 : index
    %254 = vector.load %arg8[%c7_237, %c0_238, %c0_239] : memref<9x16x8xbf16, #tpu.memory_space<vmem>>, vector<1x16x8xbf16>
    %255 = vector.shape_cast %254 : vector<1x16x8xbf16> to vector<16x8xbf16>
    %cst_240 = arith.constant dense<0.000000e+00> : vector<16x100xf32>
    %256 = tpu.matmul %255, %253, %cst_240 {dimension_numbers = #tpu.dot_dimension_numbers<[1], [0], [0], [1], [0, 0, 1, 1], [], []>} : vector<16x8xbf16>, vector<8x100xbf16>, vector<16x100xf32> -> vector<16x100xf32>
    %257 = arith.addf %252, %256 : vector<16x100xf32>
    %c0_241 = arith.constant 0 : index
    %c139 = arith.constant 139 : index
    %258 = vector.load %arg14[%c0_241, %c139] : memref<8x356xbf16, #tpu.memory_space<vmem>>, vector<8x100xbf16>
    %c8_242 = arith.constant 8 : index
    %c0_243 = arith.constant 0 : index
    %c0_244 = arith.constant 0 : index
    %259 = vector.load %arg8[%c8_242, %c0_243, %c0_244] : memref<9x16x8xbf16, #tpu.memory_space<vmem>>, vector<1x16x8xbf16>
    %260 = vector.shape_cast %259 : vector<1x16x8xbf16> to vector<16x8xbf16>
    %cst_245 = arith.constant dense<0.000000e+00> : vector<16x100xf32>
    %261 = tpu.matmul %260, %258, %cst_245 {dimension_numbers = #tpu.dot_dimension_numbers<[1], [0], [0], [1], [0, 0, 1, 1], [], []>} : vector<16x8xbf16>, vector<8x100xbf16>, vector<16x100xf32> -> vector<16x100xf32>
    %262 = arith.addf %257, %261 : vector<16x100xf32>
    %c0_246 = arith.constant 0 : index
    %c0_247 = arith.constant 0 : index
    %263 = vector.load %arg9[%c0_246, %c0_247] : memref<16x1xf32, #tpu.memory_space<vmem>>, vector<16x1xf32>
    %264 = vector.broadcast %263 : vector<16x1xf32> to vector<16x100xf32>
    %265 = arith.addf %262, %264 : vector<16x100xf32>
    %cst_248 = arith.constant 0.000000e+00 : f32
    %266 = vector.broadcast %cst_248 : f32 to vector<16x100xf32>
    %267 = arith.maximumf %265, %266 : vector<16x100xf32>
    %c0_249 = arith.constant 0 : index
    %c0_250 = arith.constant 0 : index
    %c0_251 = arith.constant 0 : index
    %268 = vector.load %arg11[%c0_249, %c0_250, %c0_251] : memref<1x16x100xf32, #tpu.memory_space<vmem>>, vector<1x16x100xf32>
    %269 = vector.shape_cast %268 : vector<1x16x100xf32> to vector<16x100xf32>
    %270 = vector.shape_cast %267 : vector<16x100xf32> to vector<1x16x100xf32>
    tpu.vector_store %arg11[%c0_249, %c0_250, %c0_251], %270 {strides = array<i32>} : memref<1x16x100xf32, #tpu.memory_space<vmem>>, vector<1x16x100xf32>,
    return
  }
  func.func @transform_0(%arg0: i32) -> (i32, i32) {
    %c0_i32 = arith.constant 0 : i32
    %c0_i32_0 = arith.constant 0 : i32
    %c0_i32_1 = arith.constant 0 : i32
    return %c0_i32, %c0_i32_0 : i32, i32
  }
  func.func @transform_1(%arg0: i32) -> (i32, i32, i32) {
    %c0_i32 = arith.constant 0 : i32
    %c0_i32_0 = arith.constant 0 : i32
    %c0_i32_1 = arith.constant 0 : i32
    return %arg0, %c0_i32, %c0_i32_0 : i32, i32, i32
  }
  func.func @transform_2(%arg0: i32) -> (i32, i32, i32) {
    %c0_i32 = arith.constant 0 : i32
    %c0_i32_0 = arith.constant 0 : i32
    %c0_i32_1 = arith.constant 0 : i32
    %c0_i32_2 = arith.constant 0 : i32
    return %c0_i32, %c0_i32_0, %c0_i32_1 : i32, i32, i32
  }
  func.func @transform_3(%arg0: i32) -> (i32, i32) {
    %c0_i32 = arith.constant 0 : i32
    %c0_i32_0 = arith.constant 0 : i32
    %c0_i32_1 = arith.constant 0 : i32
    return %c0_i32, %c0_i32_0 : i32, i32
  }
  func.func @transform_4(%arg0: i32) -> (i32, i32, i32) {
    %c0_i32 = arith.constant 0 : i32
    %c0_i32_0 = arith.constant 0 : i32
    %c0_i32_1 = arith.constant 0 : i32
    %c0_i32_2 = arith.constant 0 : i32
    return %c0_i32, %c0_i32_0, %c0_i32_1 : i32, i32, i32
  }
  func.func @transform_5(%arg0: i32) -> (i32, i32) {
    %c0_i32 = arith.constant 0 : i32
    %c0_i32_0 = arith.constant 0 : i32
    %c0_i32_1 = arith.constant 0 : i32
    return %c0_i32, %c0_i32_0 : i32, i32
  }
  func.func @transform_6(%arg0: i32) -> (i32, i32) {
    %c0_i32 = arith.constant 0 : i32
    %c0_i32_0 = arith.constant 0 : i32
    %c0_i32_1 = arith.constant 0 : i32
    return %c0_i32, %c0_i32_0 : i32, i32
  }
  func.func @transform_7(%arg0: i32) -> (i32, i32, i32) {
    %c0_i32 = arith.constant 0 : i32
    %c0_i32_0 = arith.constant 0 : i32
    %c0_i32_1 = arith.constant 0 : i32
    %c0_i32_2 = arith.constant 0 : i32
    return %c0_i32, %c0_i32_0, %c0_i32_1 : i32, i32, i32
  }
  func.func @transform_8(%arg0: i32) -> (i32, i32) {
    %c0_i32 = arith.constant 0 : i32
    %c0_i32_0 = arith.constant 0 : i32
    %c0_i32_1 = arith.constant 0 : i32
    return %c0_i32, %c0_i32_0 : i32, i32
  }
  func.func @transform_9(%arg0: i32) -> (i32, i32, i32) {
    %c0_i32 = arith.constant 0 : i32
    %c0_i32_0 = arith.constant 0 : i32
    %c0_i32_1 = arith.constant 0 : i32
    return %arg0, %c0_i32, %c0_i32_0 : i32, i32, i32
  }
  func.func @transform_10(%arg0: i32) -> (i32, i32, i32) {
    %c0_i32 = arith.constant 0 : i32
    %c0_i32_0 = arith.constant 0 : i32
    %c0_i32_1 = arith.constant 0 : i32
    return %arg0, %c0_i32, %c0_i32_0 : i32, i32, i32
  }
}

</mosaic_0001>

<llo_original>
// kernel: tpu_custom_call.1
$region0: #{tpu_custom_call.1}
  #allocation0 [shape = 'u32[]', space=smem, size = 0x4, offset = 0x4, fixed_abs, tag = 'smem constant byte address 0x4 - core index']
  #allocation1 [shape = 'u32[72,128]{1,0:T(1,128)}', space=vmem, size = 0x9000, scoped, tag = 'internal scratch']
  #allocation2 [shape = 'bf16[8,580]{1,0:T(8,128)(2,1)}', space=vmem, size = 0x2800, scoped, tag = 'scratch operand']
  #allocation3 [shape = 'bf16[8,324]{1,0:T(8,128)(2,1)}', space=vmem, size = 0x1800, scoped, tag = 'scratch operand']
  #allocation4 [shape = 'bf16[8,356]{1,0:T(8,128)(2,1)}', space=vmem, size = 0x1800, scoped, tag = 'scratch operand']
  %s0 = inlined_call_operand.vmem [shape: f32[1,324], index: 0, kind: input, shape index: {}]
  %s1 = inlined_call_operand.vmem [shape: bf16[2,3,580], index: 1, kind: input, shape index: {}]
  %s2 = inlined_call_operand.vmem [shape: bf16[9,8,3], index: 2, kind: input, shape index: {}]
  %s3 = inlined_call_operand.vmem [shape: f32[8,1], index: 3, kind: input, shape index: {}]
  %s4 = inlined_call_operand.vmem [shape: bf16[9,8,8], index: 4, kind: input, shape index: {}]
  %s5 = inlined_call_operand.vmem [shape: f32[8,1], index: 5, kind: input, shape index: {}]
  %s6 = inlined_call_operand.vmem [shape: bf16[16,10], index: 6, kind: input, shape index: {}]
  %s7 = inlined_call_operand.vmem [shape: bf16[9,16,8], index: 7, kind: input, shape index: {}]
  %s8 = inlined_call_operand.vmem [shape: f32[16,1], index: 8, kind: input, shape index: {}]
  %s9 = inlined_call_operand.hbm [shape: f32[2,8,324], index: 9, kind: output, shape index: {0}]
  %s10 = inlined_call_operand.hbm [shape: f32[2,16,100], index: 10, kind: output, shape index: {1}]
  %11 = xla_tuple %s9, %s10
  %s12 = sld [smem:[#allocation0]]
  $region77: #{tpu_custom_call.1} parent=0
    _
  %s14 = ssub.s32 1, %s12
  %s15 = scalar_select 0, %s14, %s12
  $region1: #{tpu_custom_call.1} parent=0
    #allocation5 [shape = 'u8[24576]{0}', space=vmem, size = 0x6000, scoped, tag = 'output window, operand 0']
    #allocation6 [shape = 's32[2]{0}', space=sflag, size = 0x8, scoped, tag = 'scoped memory for tpu_custom_call.1']
    #allocation7 [shape = 'u8[16384]{0}', space=vmem, size = 0x4000, scoped, tag = 'output window, operand 1']
    #allocation8 [shape = 's32[2]{0}', space=sflag, size = 0x8, scoped, tag = 'scoped memory for tpu_custom_call.1']
    %16 = vsyncpa [#allocation6], 0
    %s17 = scalar_lea.sflag [#allocation6], 1
    %18 = vsyncpa %s17, 0
    %19 = vsyncpa [#allocation8], 0
    %s20 = scalar_lea.sflag [#allocation8], 1
    %21 = vsyncpa %s20, 0
    loop: start=0, step=1, limit=4
    $region2: #{tpu_custom_call.1} parent=1 // loop_pre_header
      _
    $region3: #{tpu_custom_call.1} parent=1 // loop_header
      %s23 = sphi 0, %s27
      %p24 = scmp.ge.s32.totalorder %s23, 4
      %s31 = sphi 0, %s31
      %s33 = sphi 0, %s31
      %s34 = sphi 0, %s33
      %s48 = sphi 0, %s34
      %s54 = sphi 0, %s56
      %s57 = sphi 0, %s54
      %s58 = sphi 0, %s57
      %s74 = sphi 0, %s58
      %s78 = sphi 0, %s78
      %s80 = sphi 0, %s78
      %s81 = sphi 0, %s80
      %s95 = sphi 0, %s81
      %s99 = sphi 0, %s99
      %s101 = sphi 0, %s99
      %s102 = sphi 0, %s101
      %s116 = sphi 0, %s102
      %s120 = sphi 0, %s120
      %s122 = sphi 0, %s120
      %s123 = sphi 0, %s122
      %s137 = sphi 0, %s123
      %s141 = sphi 0, %s141
      %s143 = sphi 0, %s141
      %s144 = sphi 0, %s143
      %s158 = sphi 0, %s144
      %s162 = sphi 0, %s162
      %s164 = sphi 0, %s162
      %s165 = sphi 0, %s164
      %s179 = sphi 0, %s165
      %s183 = sphi 0, %s183
      %s185 = sphi 0, %s183
      %s186 = sphi 0, %s185
      %s200 = sphi 0, %s186
      %s204 = sphi 0, %s204
      %s206 = sphi 0, %s204
      %s207 = sphi 0, %s206
      %s221 = sphi 0, %s207
      %s227 = sphi 0, %s229
      %s230 = sphi 0, %s227
      %s231 = sphi 0, %s230
      %s247 = sphi 0, %s231
      %s253 = sphi 0, %s255
      %s256 = sphi 0, %s253
      %s257 = sphi 0, %s256
      %s273 = sphi 0, %s257
    $region4: #{tpu_custom_call.1} parent=1 // loop_header_branch
      %26 = sbr.rel (%p24) target = $region8
    $region5: #{tpu_custom_call.1} parent=1 // loop_body
      %s28 = ssub.s32 %s23, 1
      %s29 = ssub.s32 %s23, 2
      %s30 = sadd.s32 %s23, 1
      %s32 = sadd.s32 %s31, 1
      %p35 = scmp.eq.s32.totalorder %s23, 1
      %p36 = scmp.ne.s32.totalorder %s31, %s33
      %p37 = scmp.eq.s32.totalorder %s23, 0
      %p38 = por %p36, %p37
      %p39 = scmp.ne.s32.totalorder %s31, %s33
      %p40 = scmp.eq.s32.totalorder %s28, 1
      %p41 = por %p39, %p40
      %p42 = scmp.ne.s32.totalorder %s33, %s34
      %p43 = scmp.eq.s32.totalorder %s28, 0
      %p44 = por %p42, %p43
      %p45 = scmp.ne.s32.totalorder %s33, %s34
      %p46 = scmp.eq.s32.totalorder %s29, 1
      %p47 = por %p45, %p46
      %p49 = scmp.ne.s32.totalorder %s34, %s48
      %p50 = scmp.eq.s32.totalorder %s29, 0
      %p51 = por %p49, %p50
      %s52 = ssub.s32 %s23, %s30
      %p53 = scmp.eq.s32.totalorder %s52, 0
      %s55 = sadd.s32 %s54, 1
      %s56 = scalar_select %p53, %s54, %s55
      %p59 = pneg %p53
      %p60 = scmp.eq.s32.totalorder %s23, 1
      %p61 = por %p59, %p60
      %p62 = scmp.ne.s32.totalorder %s54, %s57
      %p63 = scmp.eq.s32.totalorder %s23, 0
      %p64 = por %p62, %p63
      %p65 = scmp.ne.s32.totalorder %s54, %s57
      %p66 = scmp.eq.s32.totalorder %s28, 1
      %p67 = por %p65, %p66
      %p68 = scmp.ne.s32.totalorder %s57, %s58
      %p69 = scmp.eq.s32.totalorder %s28, 0
      %p70 = por %p68, %p69
      %p71 = scmp.ne.s32.totalorder %s57, %s58
      %p72 = scmp.eq.s32.totalorder %s29, 1
      %p73 = por %p71, %p72
      %p75 = scmp.ne.s32.totalorder %s58, %s74
      %p76 = scmp.eq.s32.totalorder %s29, 0
      %p77 = por %p75, %p76
      %s79 = sadd.s32 %s78, 1
      %p82 = scmp.eq.s32.totalorder %s23, 1
      %p83 = scmp.ne.s32.totalorder %s78, %s80
      %p84 = scmp.eq.s32.totalorder %s23, 0
      %p85 = por %p83, %p84
      %p86 = scmp.ne.s32.totalorder %s78, %s80
      %p87 = scmp.eq.s32.totalorder %s28, 1
      %p88 = por %p86, %p87
      %p89 = scmp.ne.s32.totalorder %s80, %s81
      %p90 = scmp.eq.s32.totalorder %s28, 0
      %p91 = por %p89, %p90
      %p92 = scmp.ne.s32.totalorder %s80, %s81
      %p93 = scmp.eq.s32.totalorder %s29, 1
      %p94 = por %p92, %p93
      %p96 = scmp.ne.s32.totalorder %s81, %s95
      %p97 = scmp.eq.s32.totalorder %s29, 0
      %p98 = por %p96, %p97
      %s100 = sadd.s32 %s99, 1
      %p103 = scmp.eq.s32.totalorder %s23, 1
      %p104 = scmp.ne.s32.totalorder %s99, %s101
      %p105 = scmp.eq.s32.totalorder %s23, 0
      %p106 = por %p104, %p105
      %p107 = scmp.ne.s32.totalorder %s99, %s101
      %p108 = scmp.eq.s32.totalorder %s28, 1
      %p109 = por %p107, %p108
      %p110 = scmp.ne.s32.totalorder %s101, %s102
      %p111 = scmp.eq.s32.totalorder %s28, 0
      %p112 = por %p110, %p111
      %p113 = scmp.ne.s32.totalorder %s101, %s102
      %p114 = scmp.eq.s32.totalorder %s29, 1
      %p115 = por %p113, %p114
      %p117 = scmp.ne.s32.totalorder %s102, %s116
      %p118 = scmp.eq.s32.totalorder %s29, 0
      %p119 = por %p117, %p118
      %s121 = sadd.s32 %s120, 1
      %p124 = scmp.eq.s32.totalorder %s23, 1
      %p125 = scmp.ne.s32.totalorder %s120, %s122
      %p126 = scmp.eq.s32.totalorder %s23, 0
      %p127 = por %p125, %p126
      %p128 = scmp.ne.s32.totalorder %s120, %s122
      %p129 = scmp.eq.s32.totalorder %s28, 1
      %p130 = por %p128, %p129
      %p131 = scmp.ne.s32.totalorder %s122, %s123
      %p132 = scmp.eq.s32.totalorder %s28, 0
      %p133 = por %p131, %p132
      %p134 = scmp.ne.s32.totalorder %s122, %s123
      %p135 = scmp.eq.s32.totalorder %s29, 1
      %p136 = por %p134, %p135
      %p138 = scmp.ne.s32.totalorder %s123, %s137
      %p139 = scmp.eq.s32.totalorder %s29, 0
      %p140 = por %p138, %p139
      %s142 = sadd.s32 %s141, 1
      %p145 = scmp.eq.s32.totalorder %s23, 1
      %p146 = scmp.ne.s32.totalorder %s141, %s143
      %p147 = scmp.eq.s32.totalorder %s23, 0
      %p148 = por %p146, %p147
      %p149 = scmp.ne.s32.totalorder %s141, %s143
      %p150 = scmp.eq.s32.totalorder %s28, 1
      %p151 = por %p149, %p150
      %p152 = scmp.ne.s32.totalorder %s143, %s144
      %p153 = scmp.eq.s32.totalorder %s28, 0
      %p154 = por %p152, %p153
      %p155 = scmp.ne.s32.totalorder %s143, %s144
      %p156 = scmp.eq.s32.totalorder %s29, 1
      %p157 = por %p155, %p156
      %p159 = scmp.ne.s32.totalorder %s144, %s158
      %p160 = scmp.eq.s32.totalorder %s29, 0
      %p161 = por %p159, %p160
      %s163 = sadd.s32 %s162, 1
      %p166 = scmp.eq.s32.totalorder %s23, 1
      %p167 = scmp.ne.s32.totalorder %s162, %s164
      %p168 = scmp.eq.s32.totalorder %s23, 0
      %p169 = por %p167, %p168
      %p170 = scmp.ne.s32.totalorder %s162, %s164
      %p171 = scmp.eq.s32.totalorder %s28, 1
      %p172 = por %p170, %p171
      %p173 = scmp.ne.s32.totalorder %s164, %s165
      %p174 = scmp.eq.s32.totalorder %s28, 0
      %p175 = por %p173, %p174
      %p176 = scmp.ne.s32.totalorder %s164, %s165
      %p177 = scmp.eq.s32.totalorder %s29, 1
      %p178 = por %p176, %p177
      %p180 = scmp.ne.s32.totalorder %s165, %s179
      %p181 = scmp.eq.s32.totalorder %s29, 0
      %p182 = por %p180, %p181
      %s184 = sadd.s32 %s183, 1
      %p187 = scmp.eq.s32.totalorder %s23, 1
      %p188 = scmp.ne.s32.totalorder %s183, %s185
      %p189 = scmp.eq.s32.totalorder %s23, 0
      %p190 = por %p188, %p189
      %p191 = scmp.ne.s32.totalorder %s183, %s185
      %p192 = scmp.eq.s32.totalorder %s28, 1
      %p193 = por %p191, %p192
      %p194 = scmp.ne.s32.totalorder %s185, %s186
      %p195 = scmp.eq.s32.totalorder %s28, 0
      %p196 = por %p194, %p195
      %p197 = scmp.ne.s32.totalorder %s185, %s186
      %p198 = scmp.eq.s32.totalorder %s29, 1
      %p199 = por %p197, %p198
      %p201 = scmp.ne.s32.totalorder %s186, %s200
      %p202 = scmp.eq.s32.totalorder %s29, 0
      %p203 = por %p201, %p202
      %s205 = sadd.s32 %s204, 1
      %p208 = scmp.eq.s32.totalorder %s23, 1
      %p209 = scmp.ne.s32.totalorder %s204, %s206
      %p210 = scmp.eq.s32.totalorder %s23, 0
      %p211 = por %p209, %p210
      %p212 = scmp.ne.s32.totalorder %s204, %s206
      %p213 = scmp.eq.s32.totalorder %s28, 1
      %p214 = por %p212, %p213
      %p215 = scmp.ne.s32.totalorder %s206, %s207
      %p216 = scmp.eq.s32.totalorder %s28, 0
      %p217 = por %p215, %p216
      %p218 = scmp.ne.s32.totalorder %s206, %s207
      %p219 = scmp.eq.s32.totalorder %s29, 1
      %p220 = por %p218, %p219
      %p222 = scmp.ne.s32.totalorder %s207, %s221
      %p223 = scmp.eq.s32.totalorder %s29, 0
      %p224 = por %p222, %p223
      %s225 = ssub.s32 %s23, %s30
      %p226 = scmp.eq.s32.totalorder %s225, 0
      %s228 = sadd.s32 %s227, 1
      %s229 = scalar_select %p226, %s227, %s228
      %p232 = pneg %p226
      %p233 = scmp.eq.s32.totalorder %s23, 1
      %p234 = por %p232, %p233
      %p235 = scmp.ne.s32.totalorder %s227, %s230
      %p236 = scmp.eq.s32.totalorder %s23, 0
      %p237 = por %p235, %p236
      %p238 = scmp.ne.s32.totalorder %s227, %s230
      %p239 = scmp.eq.s32.totalorder %s28, 1
      %p240 = por %p238, %p239
      %p241 = scmp.ne.s32.totalorder %s230, %s231
      %p242 = scmp.eq.s32.totalorder %s28, 0
      %p243 = por %p241, %p242
      %p244 = scmp.ne.s32.totalorder %s230, %s231
      %p245 = scmp.eq.s32.totalorder %s29, 1
      %p246 = por %p244, %p245
      %p248 = scmp.ne.s32.totalorder %s231, %s247
      %p249 = scmp.eq.s32.totalorder %s29, 0
      %p250 = por %p248, %p249
      %s251 = ssub.s32 %s23, %s30
      %p252 = scmp.eq.s32.totalorder %s251, 0
      %s254 = sadd.s32 %s253, 1
      %s255 = scalar_select %p252, %s253, %s254
      %p258 = pneg %p252
      %p259 = scmp.eq.s32.totalorder %s23, 1
      %p260 = por %p258, %p259
      %p261 = scmp.ne.s32.totalorder %s253, %s256
      %p262 = scmp.eq.s32.totalorder %s23, 0
      %p263 = por %p261, %p262
      %p264 = scmp.ne.s32.totalorder %s253, %s256
      %p265 = scmp.eq.s32.totalorder %s28, 1
      %p266 = por %p264, %p265
      %p267 = scmp.ne.s32.totalorder %s256, %s257
      %p268 = scmp.eq.s32.totalorder %s28, 0
      %p269 = por %p267, %p268
      %p270 = scmp.ne.s32.totalorder %s256, %s257
      %p271 = scmp.eq.s32.totalorder %s29, 1
      %p272 = por %p270, %p271
      %p274 = scmp.ne.s32.totalorder %s257, %s273
      %p275 = scmp.eq.s32.totalorder %s29, 0
      %p276 = por %p274, %p275
      %p277 = scmp.le.s32.totalorder 1, %s23
      %p278 = scmp.lt.s32.totalorder %s23, 3
      %p279 = pnand %p277, %p278
      %p280 = pneg %p279
      // Predicated region
      $region9: #{tpu_custom_call.1} parent=5 // pred_check
        _
      $region10: #{tpu_custom_call.1} parent=5 // pred_check_branch
        %282 = sbr.rel (%p279) target = $region12
      $region11: #{tpu_custom_call.1} parent=5 // pred_region
        %s283 = ssub.s32 %s23, 1
        // Predicated region
        $region13: #{tpu_custom_call.1} parent=11 // pred_check
          %p284 = pneg %p44
        $region14: #{tpu_custom_call.1} parent=11 // pred_check_branch
          %286 = sbr.rel (%p284) target = $region16
        $region15: #{tpu_custom_call.1} parent=11 // pred_region
          _
        $region16: #{tpu_custom_call.1} parent=11 // pred_fallthru
          _
        // Predicated region
        $region17: #{tpu_custom_call.1} parent=11 // pred_check
          %p287 = pneg %p91
        $region18: #{tpu_custom_call.1} parent=11 // pred_check_branch
          %289 = sbr.rel (%p287) target = $region20
        $region19: #{tpu_custom_call.1} parent=11 // pred_region
          _
        $region20: #{tpu_custom_call.1} parent=11 // pred_fallthru
          _
        // Predicated region
        $region21: #{tpu_custom_call.1} parent=11 // pred_check
          %p290 = pneg %p112
        $region22: #{tpu_custom_call.1} parent=11 // pred_check_branch
          %292 = sbr.rel (%p290) target = $region24
        $region23: #{tpu_custom_call.1} parent=11 // pred_region
          _
        $region24: #{tpu_custom_call.1} parent=11 // pred_fallthru
          _
        // Predicated region
        $region25: #{tpu_custom_call.1} parent=11 // pred_check
          %p293 = pneg %p133
        $region26: #{tpu_custom_call.1} parent=11 // pred_check_branch
          %295 = sbr.rel (%p293) target = $region28
        $region27: #{tpu_custom_call.1} parent=11 // pred_region
          _
        $region28: #{tpu_custom_call.1} parent=11 // pred_fallthru
          _
        // Predicated region
        $region29: #{tpu_custom_call.1} parent=11 // pred_check
          %p296 = pneg %p154
        $region30: #{tpu_custom_call.1} parent=11 // pred_check_branch
          %298 = sbr.rel (%p296) target = $region32
        $region31: #{tpu_custom_call.1} parent=11 // pred_region
          _
        $region32: #{tpu_custom_call.1} parent=11 // pred_fallthru
          _
        // Predicated region
        $region33: #{tpu_custom_call.1} parent=11 // pred_check
          %p299 = pneg %p175
        $region34: #{tpu_custom_call.1} parent=11 // pred_check_branch
          %301 = sbr.rel (%p299) target = $region36
        $region35: #{tpu_custom_call.1} parent=11 // pred_region
          _
        $region36: #{tpu_custom_call.1} parent=11 // pred_fallthru
          _
        // Predicated region
        $region37: #{tpu_custom_call.1} parent=11 // pred_check
          %p302 = pneg %p196
        $region38: #{tpu_custom_call.1} parent=11 // pred_check_branch
          %304 = sbr.rel (%p302) target = $region40
        $region39: #{tpu_custom_call.1} parent=11 // pred_region
          _
        $region40: #{tpu_custom_call.1} parent=11 // pred_fallthru
          _
        // Predicated region
        $region41: #{tpu_custom_call.1} parent=11 // pred_check
          %p305 = pneg %p217
        $region42: #{tpu_custom_call.1} parent=11 // pred_check_branch
          %307 = sbr.rel (%p305) target = $region44
        $region43: #{tpu_custom_call.1} parent=11 // pred_region
          _
        $region44: #{tpu_custom_call.1} parent=11 // pred_fallthru
          _
      $region12: #{tpu_custom_call.1} parent=5 // pred_fallthru
        _
      %p308 = scmp.lt.s32.totalorder %s23, 2
      // Predicated region
      $region45: #{tpu_custom_call.1} parent=5 // pred_check
        %p309 = pneg %p308
      $region46: #{tpu_custom_call.1} parent=5 // pred_check_branch
        %311 = sbr.rel (%p309) target = $region48
      $region47: #{tpu_custom_call.1} parent=5 // pred_region
        // Predicated region
        $region49: #{tpu_custom_call.1} parent=47 // pred_check
          %p312 = pneg %p64
        $region50: #{tpu_custom_call.1} parent=47 // pred_check_branch
          %314 = sbr.rel (%p312) target = $region52
        $region51: #{tpu_custom_call.1} parent=47 // pred_region
          %p315 = scmp.lt.s32.totalorder %s23, 1
          %s316 = scalar_select %p315, %s23, 1
          %s317 = smul.addr %s316, 5
          %s318 = smul.addr %s317, 2
          %s319 = scalar_lea.vmem %s1, %s318
        $region52: #{tpu_custom_call.1} parent=47 // pred_fallthru
          _
      $region48: #{tpu_custom_call.1} parent=5 // pred_fallthru
        _
      %p320 = scmp.le.s32.totalorder 1, %s23
      %p321 = scmp.lt.s32.totalorder %s23, 3
      %p322 = pnand %p320, %p321
      %p323 = pneg %p322
      // Predicated region
      $region53: #{tpu_custom_call.1} parent=5 // pred_check
        _
      $region54: #{tpu_custom_call.1} parent=5 // pred_check_branch
        %325 = sbr.rel (%p322) target = $region56
      $region55: #{tpu_custom_call.1} parent=5 // pred_region
        %s326 = ssub.s32 %s23, 1
        %p327 = pneg %p44
        %p328 = pneg %p41
        %p329 = scmp.lt.s32.totalorder %s28, 1
        %s330 = scalar_select %p329, %s28, 1
        %s331 = smul.addr %s330, 5
        %s332 = smul.addr %s331, 2
        %s333 = scalar_lea.vmem %s1, %s332
        %p334 = pneg %p70
        %p335 = pneg %p67
        %p336 = pneg %p91
        %p337 = pneg %p88
        %p338 = pneg %p112
        %p339 = pneg %p109
        %p340 = pneg %p133
        %p341 = pneg %p130
        %p342 = pneg %p154
        %p343 = pneg %p151
        %p344 = pneg %p175
        %p345 = pneg %p172
        %p346 = pneg %p196
        %p347 = pneg %p193
        %p348 = pneg %p217
        %p349 = pneg %p214
        %p350 = pneg %p243
        %p351 = pneg %p240
        %s352 = sand.u32 %s230, 1
        %s353 = scalar_lea.sflag [#allocation6], %s352
        %s354 = sand.u32 %s230, 1
        %s355 = smul.addr %s354, 24
        %s356 = scalar_lea.vmem [#allocation5], %s355
        %p357 = pneg %p269
        %p358 = pneg %p266
        %s359 = sand.u32 %s256, 1
        %s360 = scalar_lea.sflag [#allocation8], %s359
        %s361 = sand.u32 %s256, 1
        %s362 = smul.addr %s361, 16
        %s363 = scalar_lea.vmem [#allocation7], %s362
        %p364 = scmp.lt.s32.totalorder %s28, 1
        %s365 = scalar_select %p364, %s28, 1
        %s366 = smul.addr %s365, 5
        %s367 = smul.addr %s366, 2
        %s368 = scalar_lea.vmem %s1, %s367
        %370 = vst [vmem:[#allocation2] sm:$0xf] 0
        %vm371 = vcmask 1044000
        %vm372 = vcmask 556036
        %vm373 = vmor %vm372, %vm371
        %374 = vst.msk [vmem:[#allocation2 + $0xc] sm:$0xff] %vm373, 0
        %vm375 = vcmask 1043456
        %vm376 = vcmask 80900
        %vm377 = vmor %vm376, %vm375
        %378 = vst.msk [vmem:[#allocation4] sm:$0xff] %vm377, 0
        %vm379 = vcmask 1044176
        %vm380 = vcmask 818180
        %vm381 = vmor %vm380, %vm379
        %382 = vst.msk [vmem:[#allocation4 + $0x4] sm:$0xff] %vm381, 0
        %v383 = vld [vmem:[%s368] sm:$0xff]
        %v384 = vld [vmem:[%s2] sm:$0xf]
        %s385 = scalar_lea.vmem %s2, 4
        %v386 = vld [vmem:[%s385] sm:$0xf]
        %388 = vst [vmem:[#allocation1] ss:$4 sm:$0xff] %v383
        %v389 = vld.sshfl [vmem:[#allocation1] sm:$0xff pattern:$0x73625140]
        %v391 = vld.sshfl [vmem:[#allocation1 + $0x8] sm:$0xff pattern:$0x73625140]
        %v393 = vld.sshfl [vmem:[#allocation1 + $0x10] sm:$0xff pattern:$0x73625140]
        %v395 = vld.sshfl [vmem:[#allocation1 + $0x18] sm:$0xff pattern:$0x73625140]
        %397 = vrot.lane.b32.xlu0 %v389, 18
        %v398 = vpop.permute.xlu0 %397
        %399 = vrot.lane.b32.xlu0 %v391, 18
        %v400 = vpop.permute.xlu0 %399
        %401 = vrot.lane.b32.xlu0 %v393, 18
        %v402 = vpop.permute.xlu0 %401
        %403 = vrot.lane.b32.xlu0 %v395, 18
        %v404 = vpop.permute.xlu0 %403
        %vm405 = vcmask 146432
        %v406 = vsel %vm405, %v398, %v400
        %v407 = vsel %vm405, %v400, %v402
        %v408 = vsel %vm405, %v402, %v404
        %vm409 = vcmask 23552
        %v411 = vsel %vm409, %v386, 0
        %vm413 = vcmask 1040384
        %vm414 = vcmask 1041408
        %v415 = vsel %vm413, 4294967295, 65535
        %v416 = vsel %vm414, %v415, 0
        %v418 = vand.u32 %v406, %v416
        %v421 = vand.u32 %v407, %v416
        %v424 = vand.u32 %v408, %v416
        %426 = vmatpush.bf16.msra.mxu0 0
        %427 = vmatpush.bf16.msra.mxu0 0
        %428 = vmatpush.bf16.msra.mxu0 0
        %429 = vmatpush.bf16.msra.mxu0 0
        %430 = vmatpush.bf16.msra.mxu0 0
        %431 = vmatpush.bf16.msra.mxu0 0
        %432 = vmatpush.bf16.msra.mxu0 0
        %433 = vmatpush.bf16.msra.mxu0 %v418
        %434 = vmatmul.bf16.gmra.mxu0 %v411
        %v435 = vpop.f32.mrf.mxu0
        %v436 = vadd.f32 0.0, %v435
        %v437 = vpop.f32.mrf.mxu0
        %438 = vdwg.mxu0
        %439 = vmatpush.bf16.msra.mxu0 0
        %440 = vmatpush.bf16.msra.mxu0 0
        %441 = vmatpush.bf16.msra.mxu0 0
        %442 = vmatpush.bf16.msra.mxu0 0
        %443 = vmatpush.bf16.msra.mxu0 0
        %444 = vmatpush.bf16.msra.mxu0 0
        %445 = vmatpush.bf16.msra.mxu0 0
        %446 = vmatpush.bf16.msra.mxu0 %v421
        %447 = vmatmul.bf16.gmra.mxu0 %v411
        %v448 = vpop.f32.mrf.mxu0
        %v449 = vadd.f32 0.0, %v448
        %v450 = vpop.f32.mrf.mxu0
        %451 = vdwg.mxu0
        %452 = vmatpush.bf16.msra.mxu0 0
        %453 = vmatpush.bf16.msra.mxu0 0
        %454 = vmatpush.bf16.msra.mxu0 0
        %455 = vmatpush.bf16.msra.mxu0 0
        %456 = vmatpush.bf16.msra.mxu0 0
        %457 = vmatpush.bf16.msra.mxu0 0
        %458 = vmatpush.bf16.msra.mxu0 0
        %459 = vmatpush.bf16.msra.mxu0 %v424
        %460 = vmatmul.bf16.gmra.mxu0 %v411
        %v461 = vpop.f32.mrf.mxu0
        %v462 = vadd.f32 0.0, %v461
        %v463 = vpop.f32.mrf.mxu0
        %464 = vdwg.mxu0
        %465 = vst [vmem:[#allocation1] ss:$4 sm:$0xff] %v383
        %v466 = vld.sshfl [vmem:[#allocation1] sm:$0xff pattern:$0x73625140]
        %v468 = vld.sshfl [vmem:[#allocation1 + $0x8] sm:$0xff pattern:$0x73625140]
        %v470 = vld.sshfl [vmem:[#allocation1 + $0x10] sm:$0xff pattern:$0x73625140]
        %v472 = vld.sshfl [vmem:[#allocation1 + $0x18] sm:$0xff pattern:$0x73625140]
        %474 = vrot.lane.b32.xlu0 %v466, 19
        %v475 = vpop.permute.xlu0 %474
        %476 = vrot.lane.b32.xlu0 %v468, 19
        %v477 = vpop.permute.xlu0 %476
        %478 = vrot.lane.b32.xlu0 %v470, 19
        %v479 = vpop.permute.xlu0 %478
        %480 = vrot.lane.b32.xlu0 %v472, 19
        %v481 = vpop.permute.xlu0 %480
        %vm482 = vcmask 154624
        %v483 = vsel %vm482, %v475, %v477
        %v484 = vsel %vm482, %v477, %v479
        %v485 = vsel %vm482, %v479, %v481
        %v487 = vsel %vm409, %v384, 0
        %v490 = vand.u32 %v483, %v416
        %v493 = vand.u32 %v484, %v416
        %v496 = vand.u32 %v485, %v416
        %498 = vmatpush.bf16.msra.mxu0 0
        %499 = vmatpush.bf16.msra.mxu0 0
        %500 = vmatpush.bf16.msra.mxu0 0
        %501 = vmatpush.bf16.msra.mxu0 0
        %502 = vmatpush.bf16.msra.mxu0 0
        %503 = vmatpush.bf16.msra.mxu0 0
        %504 = vmatpush.bf16.msra.mxu0 0
        %505 = vmatpush.bf16.msra.mxu0 %v490
        %506 = vmatmul.bf16.gmra.mxu0 %v487
        %v507 = vpop.f32.mrf.mxu0
        %v508 = vadd.f32 %v436, %v507
        %v509 = vpop.f32.mrf.mxu0
        %510 = vdwg.mxu0
        %511 = vmatpush.bf16.msra.mxu0 0
        %512 = vmatpush.bf16.msra.mxu0 0
        %513 = vmatpush.bf16.msra.mxu0 0
        %514 = vmatpush.bf16.msra.mxu0 0
        %515 = vmatpush.bf16.msra.mxu0 0
        %516 = vmatpush.bf16.msra.mxu0 0
        %517 = vmatpush.bf16.msra.mxu0 0
        %518 = vmatpush.bf16.msra.mxu0 %v493
        %519 = vmatmul.bf16.gmra.mxu0 %v487
        %v520 = vpop.f32.mrf.mxu0
        %v521 = vadd.f32 %v449, %v520
        %v522 = vpop.f32.mrf.mxu0
        %523 = vdwg.mxu0
        %524 = vmatpush.bf16.msra.mxu0 0
        %525 = vmatpush.bf16.msra.mxu0 0
        %526 = vmatpush.bf16.msra.mxu0 0
        %527 = vmatpush.bf16.msra.mxu0 0
        %528 = vmatpush.bf16.msra.mxu0 0
        %529 = vmatpush.bf16.msra.mxu0 0
        %530 = vmatpush.bf16.msra.mxu0 0
        %531 = vmatpush.bf16.msra.mxu0 %v496
        %532 = vmatmul.bf16.gmra.mxu0 %v487
        %v533 = vpop.f32.mrf.mxu0
        %v534 = vadd.f32 %v462, %v533
        %v535 = vpop.f32.mrf.mxu0
        %536 = vdwg.mxu0
        %v537 = vld [vmem:[%s368] sm:$0xff]
        %s538 = scalar_lea.vmem %s2, 8
        %v539 = vld [vmem:[%s538] sm:$0xf]
        %541 = vst [vmem:[#allocation1] ss:$4 sm:$0xff] %v537
        %v542 = vld.sshfl [vmem:[#allocation1] sm:$0xff pattern:$0x73625140]
        %v544 = vld.sshfl [vmem:[#allocation1 + $0x8] sm:$0xff pattern:$0x73625140]
        %v546 = vld.sshfl [vmem:[#allocation1 + $0x10] sm:$0xff pattern:$0x73625140]
        %v548 = vld.sshfl [vmem:[#allocation1 + $0x18] sm:$0xff pattern:$0x73625140]
        %550 = vrot.lane.b32.xlu0 %v542, 17
        %v551 = vpop.permute.xlu0 %550
        %552 = vrot.lane.b32.xlu0 %v544, 17
        %v553 = vpop.permute.xlu0 %552
        %554 = vrot.lane.b32.xlu0 %v546, 17
        %v555 = vpop.permute.xlu0 %554
        %556 = vrot.lane.b32.xlu0 %v548, 17
        %v557 = vpop.permute.xlu0 %556
        %vm558 = vcmask 138240
        %v559 = vsel %vm558, %v551, %v553
        %v560 = vsel %vm558, %v553, %v555
        %v561 = vsel %vm558, %v555, %v557
        %v563 = vsel %vm409, %v539, 0
        %v566 = vand.u32 %v559, %v416
        %v569 = vand.u32 %v560, %v416
        %v572 = vand.u32 %v561, %v416
        %574 = vmatpush.bf16.msra.mxu0 0
        %575 = vmatpush.bf16.msra.mxu0 0
        %576 = vmatpush.bf16.msra.mxu0 0
        %577 = vmatpush.bf16.msra.mxu0 0
        %578 = vmatpush.bf16.msra.mxu0 0
        %579 = vmatpush.bf16.msra.mxu0 0
        %580 = vmatpush.bf16.msra.mxu0 0
        %581 = vmatpush.bf16.msra.mxu0 %v566
        %582 = vmatmul.bf16.gmra.mxu0 %v563
        %v583 = vpop.f32.mrf.mxu0
        %v584 = vadd.f32 0.0, %v583
        %v585 = vpop.f32.mrf.mxu0
        %586 = vdwg.mxu0
        %587 = vmatpush.bf16.msra.mxu0 0
        %588 = vmatpush.bf16.msra.mxu0 0
        %589 = vmatpush.bf16.msra.mxu0 0
        %590 = vmatpush.bf16.msra.mxu0 0
        %591 = vmatpush.bf16.msra.mxu0 0
        %592 = vmatpush.bf16.msra.mxu0 0
        %593 = vmatpush.bf16.msra.mxu0 0
        %594 = vmatpush.bf16.msra.mxu0 %v569
        %595 = vmatmul.bf16.gmra.mxu0 %v563
        %v596 = vpop.f32.mrf.mxu0
        %v597 = vadd.f32 0.0, %v596
        %v598 = vpop.f32.mrf.mxu0
        %599 = vdwg.mxu0
        %600 = vmatpush.bf16.msra.mxu0 0
        %601 = vmatpush.bf16.msra.mxu0 0
        %602 = vmatpush.bf16.msra.mxu0 0
        %603 = vmatpush.bf16.msra.mxu0 0
        %604 = vmatpush.bf16.msra.mxu0 0
        %605 = vmatpush.bf16.msra.mxu0 0
        %606 = vmatpush.bf16.msra.mxu0 0
        %607 = vmatpush.bf16.msra.mxu0 %v572
        %608 = vmatmul.bf16.gmra.mxu0 %v563
        %v609 = vpop.f32.mrf.mxu0
        %v610 = vadd.f32 0.0, %v609
        %v611 = vpop.f32.mrf.mxu0
        %612 = vdwg.mxu0
        %v613 = vadd.f32 %v508, %v584
        %v614 = vadd.f32 %v521, %v597
        %v615 = vadd.f32 %v534, %v610
        %v616 = vld [vmem:[%s368] sm:$0xff]
        %s617 = scalar_lea.vmem %s2, 12
        %v618 = vld [vmem:[%s617] sm:$0xf]
        %620 = vst [vmem:[#allocation1] ss:$4 sm:$0xff] %v616
        %v621 = vld.sshfl [vmem:[#allocation1] sm:$0xff pattern:$0x73625140]
        %v623 = vld.sshfl [vmem:[#allocation1 + $0x8] sm:$0xff pattern:$0x73625140]
        %v625 = vld.sshfl [vmem:[#allocation1 + $0x10] sm:$0xff pattern:$0x73625140]
        %v627 = vld.sshfl [vmem:[#allocation1 + $0x18] sm:$0xff pattern:$0x73625140]
        %629 = vrot.lane.b32.xlu0 %v621, 1
        %v630 = vpop.permute.xlu0 %629
        %631 = vrot.lane.b32.xlu0 %v623, 1
        %v632 = vpop.permute.xlu0 %631
        %633 = vrot.lane.b32.xlu0 %v625, 1
        %v634 = vpop.permute.xlu0 %633
        %635 = vrot.lane.b32.xlu0 %v627, 1
        %v636 = vpop.permute.xlu0 %635
        %vm637 = vcmask 7168
        %v638 = vsel %vm637, %v630, %v632
        %v639 = vsel %vm637, %v632, %v634
        %v640 = vsel %vm637, %v634, %v636
        %v642 = vsel %vm409, %v618, 0
        %v645 = vand.u32 %v638, %v416
        %v648 = vand.u32 %v639, %v416
        %v651 = vand.u32 %v640, %v416
        %653 = vmatpush.bf16.msra.mxu0 0
        %654 = vmatpush.bf16.msra.mxu0 0
        %655 = vmatpush.bf16.msra.mxu0 0
        %656 = vmatpush.bf16.msra.mxu0 0
        %657 = vmatpush.bf16.msra.mxu0 0
        %658 = vmatpush.bf16.msra.mxu0 0
        %659 = vmatpush.bf16.msra.mxu0 0
        %660 = vmatpush.bf16.msra.mxu0 %v645
        %661 = vmatmul.bf16.gmra.mxu0 %v642
        %v662 = vpop.f32.mrf.mxu0
        %v663 = vadd.f32 0.0, %v662
        %v664 = vpop.f32.mrf.mxu0
        %665 = vdwg.mxu0
        %666 = vmatpush.bf16.msra.mxu0 0
        %667 = vmatpush.bf16.msra.mxu0 0
        %668 = vmatpush.bf16.msra.mxu0 0
        %669 = vmatpush.bf16.msra.mxu0 0
        %670 = vmatpush.bf16.msra.mxu0 0
        %671 = vmatpush.bf16.msra.mxu0 0
        %672 = vmatpush.bf16.msra.mxu0 0
        %673 = vmatpush.bf16.msra.mxu0 %v648
        %674 = vmatmul.bf16.gmra.mxu0 %v642
        %v675 = vpop.f32.mrf.mxu0
        %v676 = vadd.f32 0.0, %v675
        %v677 = vpop.f32.mrf.mxu0
        %678 = vdwg.mxu0
        %679 = vmatpush.bf16.msra.mxu0 0
        %680 = vmatpush.bf16.msra.mxu0 0
        %681 = vmatpush.bf16.msra.mxu0 0
        %682 = vmatpush.bf16.msra.mxu0 0
        %683 = vmatpush.bf16.msra.mxu0 0
        %684 = vmatpush.bf16.msra.mxu0 0
        %685 = vmatpush.bf16.msra.mxu0 0
        %686 = vmatpush.bf16.msra.mxu0 %v651
        %687 = vmatmul.bf16.gmra.mxu0 %v642
        %v688 = vpop.f32.mrf.mxu0
        %v689 = vadd.f32 0.0, %v688
        %v690 = vpop.f32.mrf.mxu0
        %691 = vdwg.mxu0
        %v692 = vadd.f32 %v613, %v663
        %v693 = vadd.f32 %v614, %v676
        %v694 = vadd.f32 %v615, %v689
        %v695 = vld [vmem:[%s368 + $0x2] sm:$0x3f]
        %s696 = scalar_lea.vmem %s2, 16
        %v697 = vld [vmem:[%s696] sm:$0xf]
        %699 = vst [vmem:[#allocation1] ss:$4 sm:$0xff] %v695
        %v700 = vld.sshfl [vmem:[#allocation1] sm:$0xff pattern:$0x73625140]
        %v701 = vld.sshfl [vmem:[#allocation1 + $0x8] sm:$0xff pattern:$0x73625140]
        %v702 = vld.sshfl [vmem:[#allocation1 + $0x10] sm:$0xff pattern:$0x73625140]
        %v704 = vsel %vm409, %v697, 0
        %v706 = vand.u32 %v700, %v416
        %v708 = vand.u32 %v701, %v416
        %v710 = vand.u32 %v702, %v416
        %712 = vmatpush.bf16.msra.mxu0 0
        %713 = vmatpush.bf16.msra.mxu0 0
        %714 = vmatpush.bf16.msra.mxu0 0
        %715 = vmatpush.bf16.msra.mxu0 0
        %716 = vmatpush.bf16.msra.mxu0 0
        %717 = vmatpush.bf16.msra.mxu0 0
        %718 = vmatpush.bf16.msra.mxu0 0
        %719 = vmatpush.bf16.msra.mxu0 %v706
        %720 = vmatmul.bf16.gmra.mxu0 %v704
        %v721 = vpop.f32.mrf.mxu0
        %v722 = vadd.f32 0.0, %v721
        %v723 = vpop.f32.mrf.mxu0
        %724 = vdwg.mxu0
        %725 = vmatpush.bf16.msra.mxu0 0
        %726 = vmatpush.bf16.msra.mxu0 0
        %727 = vmatpush.bf16.msra.mxu0 0
        %728 = vmatpush.bf16.msra.mxu0 0
        %729 = vmatpush.bf16.msra.mxu0 0
        %730 = vmatpush.bf16.msra.mxu0 0
        %731 = vmatpush.bf16.msra.mxu0 0
        %732 = vmatpush.bf16.msra.mxu0 %v708
        %733 = vmatmul.bf16.gmra.mxu0 %v704
        %v734 = vpop.f32.mrf.mxu0
        %v735 = vadd.f32 0.0, %v734
        %v736 = vpop.f32.mrf.mxu0
        %737 = vdwg.mxu0
        %738 = vmatpush.bf16.msra.mxu0 0
        %739 = vmatpush.bf16.msra.mxu0 0
        %740 = vmatpush.bf16.msra.mxu0 0
        %741 = vmatpush.bf16.msra.mxu0 0
        %742 = vmatpush.bf16.msra.mxu0 0
        %743 = vmatpush.bf16.msra.mxu0 0
        %744 = vmatpush.bf16.msra.mxu0 0
        %745 = vmatpush.bf16.msra.mxu0 %v710
        %746 = vmatmul.bf16.gmra.mxu0 %v704
        %v747 = vpop.f32.mrf.mxu0
        %v748 = vadd.f32 0.0, %v747
        %v749 = vpop.f32.mrf.mxu0
        %750 = vdwg.mxu0
        %v751 = vadd.f32 %v692, %v722
        %v752 = vadd.f32 %v693, %v735
        %v753 = vadd.f32 %v694, %v748
        %v754 = vld [vmem:[%s368 + $0x2] sm:$0x3f]
        %s755 = scalar_lea.vmem %s2, 20
        %v756 = vld [vmem:[%s755] sm:$0xf]
        %758 = vst [vmem:[#allocation1] ss:$4 sm:$0xff] %v754
        %v759 = vld.sshfl [vmem:[#allocation1] sm:$0xff pattern:$0x73625140]
        %v761 = vld.sshfl [vmem:[#allocation1 + $0x8] sm:$0xff pattern:$0x73625140]
        %v763 = vld.sshfl [vmem:[#allocation1 + $0x10] sm:$0xff pattern:$0x73625140]
        %765 = vrot.lane.b32.xlu0 %v759, 127
        %v766 = vpop.permute.xlu0 %765
        %767 = vrot.lane.b32.xlu0 %v761, 127
        %v768 = vpop.permute.xlu0 %767
        %769 = vrot.lane.b32.xlu0 %v763, 127
        %v770 = vpop.permute.xlu0 %769
        %vm771 = vcmask 1039360
        %v772 = vsel %vm771, %v766, %v768
        %v773 = vsel %vm771, %v768, %v770
        %v775 = vsel %vm409, %v756, 0
        %v778 = vand.u32 %v772, %v416
        %v781 = vand.u32 %v773, %v416
        %v784 = vand.u32 %v770, %v416
        %786 = vmatpush.bf16.msra.mxu0 0
        %787 = vmatpush.bf16.msra.mxu0 0
        %788 = vmatpush.bf16.msra.mxu0 0
        %789 = vmatpush.bf16.msra.mxu0 0
        %790 = vmatpush.bf16.msra.mxu0 0
        %791 = vmatpush.bf16.msra.mxu0 0
        %792 = vmatpush.bf16.msra.mxu0 0
        %793 = vmatpush.bf16.msra.mxu0 %v778
        %794 = vmatmul.bf16.gmra.mxu0 %v775
        %v795 = vpop.f32.mrf.mxu0
        %v796 = vadd.f32 0.0, %v795
        %v797 = vpop.f32.mrf.mxu0
        %798 = vdwg.mxu0
        %799 = vmatpush.bf16.msra.mxu0 0
        %800 = vmatpush.bf16.msra.mxu0 0
        %801 = vmatpush.bf16.msra.mxu0 0
        %802 = vmatpush.bf16.msra.mxu0 0
        %803 = vmatpush.bf16.msra.mxu0 0
        %804 = vmatpush.bf16.msra.mxu0 0
        %805 = vmatpush.bf16.msra.mxu0 0
        %806 = vmatpush.bf16.msra.mxu0 %v781
        %807 = vmatmul.bf16.gmra.mxu0 %v775
        %v808 = vpop.f32.mrf.mxu0
        %v809 = vadd.f32 0.0, %v808
        %v810 = vpop.f32.mrf.mxu0
        %811 = vdwg.mxu0
        %812 = vmatpush.bf16.msra.mxu0 0
        %813 = vmatpush.bf16.msra.mxu0 0
        %814 = vmatpush.bf16.msra.mxu0 0
        %815 = vmatpush.bf16.msra.mxu0 0
        %816 = vmatpush.bf16.msra.mxu0 0
        %817 = vmatpush.bf16.msra.mxu0 0
        %818 = vmatpush.bf16.msra.mxu0 0
        %819 = vmatpush.bf16.msra.mxu0 %v784
        %820 = vmatmul.bf16.gmra.mxu0 %v775
        %v821 = vpop.f32.mrf.mxu0
        %v822 = vadd.f32 0.0, %v821
        %v823 = vpop.f32.mrf.mxu0
        %824 = vdwg.mxu0
        %v825 = vadd.f32 %v751, %v796
        %v826 = vadd.f32 %v752, %v809
        %v827 = vadd.f32 %v753, %v822
        %v828 = vld [vmem:[%s368 + $0x2] sm:$0x3f]
        %s829 = scalar_lea.vmem %s2, 24
        %v830 = vld [vmem:[%s829] sm:$0xf]
        %832 = vst [vmem:[#allocation1] ss:$4 sm:$0xff] %v828
        %v833 = vld.sshfl [vmem:[#allocation1] sm:$0xff pattern:$0x73625140]
        %v835 = vld.sshfl [vmem:[#allocation1 + $0x8] sm:$0xff pattern:$0x73625140]
        %v837 = vld.sshfl [vmem:[#allocation1 + $0x10] sm:$0xff pattern:$0x73625140]
        %839 = vrot.lane.b32.xlu0 %v833, 111
        %v840 = vpop.permute.xlu0 %839
        %841 = vrot.lane.b32.xlu0 %v835, 111
        %v842 = vpop.permute.xlu0 %841
        %843 = vrot.lane.b32.xlu0 %v837, 111
        %v844 = vpop.permute.xlu0 %843
        %vm845 = vcmask 908288
        %v846 = vsel %vm845, %v840, %v842
        %v847 = vsel %vm845, %v842, %v844
        %v849 = vsel %vm409, %v830, 0
        %v852 = vand.u32 %v846, %v416
        %v855 = vand.u32 %v847, %v416
        %v858 = vand.u32 %v844, %v416
        %860 = vmatpush.bf16.msra.mxu0 0
        %861 = vmatpush.bf16.msra.mxu0 0
        %862 = vmatpush.bf16.msra.mxu0 0
        %863 = vmatpush.bf16.msra.mxu0 0
        %864 = vmatpush.bf16.msra.mxu0 0
        %865 = vmatpush.bf16.msra.mxu0 0
        %866 = vmatpush.bf16.msra.mxu0 0
        %867 = vmatpush.bf16.msra.mxu0 %v852
        %868 = vmatmul.bf16.gmra.mxu0 %v849
        %v869 = vpop.f32.mrf.mxu0
        %v870 = vadd.f32 0.0, %v869
        %v871 = vpop.f32.mrf.mxu0
        %872 = vdwg.mxu0
        %873 = vmatpush.bf16.msra.mxu0 0
        %874 = vmatpush.bf16.msra.mxu0 0
        %875 = vmatpush.bf16.msra.mxu0 0
        %876 = vmatpush.bf16.msra.mxu0 0
        %877 = vmatpush.bf16.msra.mxu0 0
        %878 = vmatpush.bf16.msra.mxu0 0
        %879 = vmatpush.bf16.msra.mxu0 0
        %880 = vmatpush.bf16.msra.mxu0 %v855
        %881 = vmatmul.bf16.gmra.mxu0 %v849
        %v882 = vpop.f32.mrf.mxu0
        %v883 = vadd.f32 0.0, %v882
        %v884 = vpop.f32.mrf.mxu0
        %885 = vdwg.mxu0
        %886 = vmatpush.bf16.msra.mxu0 0
        %887 = vmatpush.bf16.msra.mxu0 0
        %888 = vmatpush.bf16.msra.mxu0 0
        %889 = vmatpush.bf16.msra.mxu0 0
        %890 = vmatpush.bf16.msra.mxu0 0
        %891 = vmatpush.bf16.msra.mxu0 0
        %892 = vmatpush.bf16.msra.mxu0 0
        %893 = vmatpush.bf16.msra.mxu0 %v858
        %894 = vmatmul.bf16.gmra.mxu0 %v849
        %v895 = vpop.f32.mrf.mxu0
        %v896 = vadd.f32 0.0, %v895
        %v897 = vpop.f32.mrf.mxu0
        %898 = vdwg.mxu0
        %v899 = vadd.f32 %v825, %v870
        %v900 = vadd.f32 %v826, %v883
        %v901 = vadd.f32 %v827, %v896
        %v902 = vld [vmem:[%s368 + $0x2] sm:$0x3f]
        %s903 = scalar_lea.vmem %s2, 28
        %v904 = vld [vmem:[%s903] sm:$0xf]
        %906 = vst [vmem:[#allocation1] ss:$4 sm:$0xff] %v902
        %v907 = vld.sshfl [vmem:[#allocation1] sm:$0xff pattern:$0x73625140]
        %v909 = vld.sshfl [vmem:[#allocation1 + $0x8] sm:$0xff pattern:$0x73625140]
        %v911 = vld.sshfl [vmem:[#allocation1 + $0x10] sm:$0xff pattern:$0x73625140]
        %913 = vrot.lane.b32.xlu0 %v907, 110
        %v914 = vpop.permute.xlu0 %913
        %915 = vrot.lane.b32.xlu0 %v909, 110
        %v916 = vpop.permute.xlu0 %915
        %917 = vrot.lane.b32.xlu0 %v911, 110
        %v918 = vpop.permute.xlu0 %917
        %vm919 = vcmask 900096
        %v920 = vsel %vm919, %v914, %v916
        %v921 = vsel %vm919, %v916, %v918
        %v923 = vsel %vm409, %v904, 0
        %v926 = vand.u32 %v920, %v416
        %v929 = vand.u32 %v921, %v416
        %v932 = vand.u32 %v918, %v416
        %934 = vmatpush.bf16.msra.mxu0 0
        %935 = vmatpush.bf16.msra.mxu0 0
        %936 = vmatpush.bf16.msra.mxu0 0
        %937 = vmatpush.bf16.msra.mxu0 0
        %938 = vmatpush.bf16.msra.mxu0 0
        %939 = vmatpush.bf16.msra.mxu0 0
        %940 = vmatpush.bf16.msra.mxu0 0
        %941 = vmatpush.bf16.msra.mxu0 %v926
        %942 = vmatmul.bf16.gmra.mxu0 %v923
        %v943 = vpop.f32.mrf.mxu0
        %v944 = vadd.f32 0.0, %v943
        %v945 = vpop.f32.mrf.mxu0
        %946 = vdwg.mxu0
        %947 = vmatpush.bf16.msra.mxu0 0
        %948 = vmatpush.bf16.msra.mxu0 0
        %949 = vmatpush.bf16.msra.mxu0 0
        %950 = vmatpush.bf16.msra.mxu0 0
        %951 = vmatpush.bf16.msra.mxu0 0
        %952 = vmatpush.bf16.msra.mxu0 0
        %953 = vmatpush.bf16.msra.mxu0 0
        %954 = vmatpush.bf16.msra.mxu0 %v929
        %955 = vmatmul.bf16.gmra.mxu0 %v923
        %v956 = vpop.f32.mrf.mxu0
        %v957 = vadd.f32 0.0, %v956
        %v958 = vpop.f32.mrf.mxu0
        %959 = vdwg.mxu0
        %960 = vmatpush.bf16.msra.mxu0 0
        %961 = vmatpush.bf16.msra.mxu0 0
        %962 = vmatpush.bf16.msra.mxu0 0
        %963 = vmatpush.bf16.msra.mxu0 0
        %964 = vmatpush.bf16.msra.mxu0 0
        %965 = vmatpush.bf16.msra.mxu0 0
        %966 = vmatpush.bf16.msra.mxu0 0
        %967 = vmatpush.bf16.msra.mxu0 %v932
        %968 = vmatmul.bf16.gmra.mxu0 %v923
        %v969 = vpop.f32.mrf.mxu0
        %v970 = vadd.f32 0.0, %v969
        %v971 = vpop.f32.mrf.mxu0
        %972 = vdwg.mxu0
        %v973 = vadd.f32 %v899, %v944
        %v974 = vadd.f32 %v900, %v957
        %v975 = vadd.f32 %v901, %v970
        %v976 = vld [vmem:[%s368 + $0x2] sm:$0x3f]
        %s977 = scalar_lea.vmem %s2, 32
        %v978 = vld [vmem:[%s977] sm:$0xf]
        %980 = vst [vmem:[#allocation1] ss:$4 sm:$0xff] %v976
        %v981 = vld.sshfl [vmem:[#allocation1] sm:$0xff pattern:$0x73625140]
        %v983 = vld.sshfl [vmem:[#allocation1 + $0x8] sm:$0xff pattern:$0x73625140]
        %v985 = vld.sshfl [vmem:[#allocation1 + $0x10] sm:$0xff pattern:$0x73625140]
        %987 = vrot.lane.b32.xlu0 %v981, 109
        %v988 = vpop.permute.xlu0 %987
        %989 = vrot.lane.b32.xlu0 %v983, 109
        %v990 = vpop.permute.xlu0 %989
        %991 = vrot.lane.b32.xlu0 %v985, 109
        %v992 = vpop.permute.xlu0 %991
        %vm993 = vcmask 891904
        %v994 = vsel %vm993, %v988, %v990
        %v995 = vsel %vm993, %v990, %v992
        %v997 = vsel %vm409, %v978, 0
        %v1000 = vand.u32 %v994, %v416
        %v1003 = vand.u32 %v995, %v416
        %v1006 = vand.u32 %v992, %v416
        %1008 = vmatpush.bf16.msra.mxu0 0
        %1009 = vmatpush.bf16.msra.mxu0 0
        %1010 = vmatpush.bf16.msra.mxu0 0
        %1011 = vmatpush.bf16.msra.mxu0 0
        %1012 = vmatpush.bf16.msra.mxu0 0
        %1013 = vmatpush.bf16.msra.mxu0 0
        %1014 = vmatpush.bf16.msra.mxu0 0
        %1015 = vmatpush.bf16.msra.mxu0 %v1000
        %1016 = vmatmul.bf16.gmra.mxu0 %v997
        %v1017 = vpop.f32.mrf.mxu0
        %v1018 = vadd.f32 0.0, %v1017
        %v1019 = vpop.f32.mrf.mxu0
        %1020 = vdwg.mxu0
        %1021 = vmatpush.bf16.msra.mxu0 0
        %1022 = vmatpush.bf16.msra.mxu0 0
        %1023 = vmatpush.bf16.msra.mxu0 0
        %1024 = vmatpush.bf16.msra.mxu0 0
        %1025 = vmatpush.bf16.msra.mxu0 0
        %1026 = vmatpush.bf16.msra.mxu0 0
        %1027 = vmatpush.bf16.msra.mxu0 0
        %1028 = vmatpush.bf16.msra.mxu0 %v1003
        %1029 = vmatmul.bf16.gmra.mxu0 %v997
        %v1030 = vpop.f32.mrf.mxu0
        %v1031 = vadd.f32 0.0, %v1030
        %v1032 = vpop.f32.mrf.mxu0
        %1033 = vdwg.mxu0
        %1034 = vmatpush.bf16.msra.mxu0 0
        %1035 = vmatpush.bf16.msra.mxu0 0
        %1036 = vmatpush.bf16.msra.mxu0 0
        %1037 = vmatpush.bf16.msra.mxu0 0
        %1038 = vmatpush.bf16.msra.mxu0 0
        %1039 = vmatpush.bf16.msra.mxu0 0
        %1040 = vmatpush.bf16.msra.mxu0 0
        %1041 = vmatpush.bf16.msra.mxu0 %v1006
        %1042 = vmatmul.bf16.gmra.mxu0 %v997
        %v1043 = vpop.f32.mrf.mxu0
        %v1044 = vadd.f32 0.0, %v1043
        %v1045 = vpop.f32.mrf.mxu0
        %1046 = vdwg.mxu0
        %v1047 = vadd.f32 %v973, %v1018
        %v1048 = vadd.f32 %v974, %v1031
        %v1049 = vadd.f32 %v975, %v1044
        %v1050 = vld [vmem:[%s3] sm:$0xff]
        %1052 = vset.pattern.permute.xlu0 0
        %1053 = vperm.xlu0 %1052, %v1050
        %v1054 = vpop.permute.xlu0 %1053
        %v1056 = vadd.f32 %v1047, %v1054
        %v1057 = vadd.f32 %v1048, %v1054
        %v1058 = vadd.f32 %v1049, %v1054
        %v1059 = vmax.f32 %v1056, 0.0
        %v1060 = vmax.f32 %v1057, 0.0
        %v1061 = vmax.f32 %v1058, 0.0
        %1062 = vst [vmem:[%s356] sm:$0xff] %v1059
        %1063 = vst [vmem:[%s356 + $0x8] sm:$0xff] %v1060
        %vm1064 = vcmask 556032
        %1065 = vst.msk [vmem:[%s356 + $0x10] sm:$0xff] %vm1064, %v1061
        %v1066 = vld [vmem:[%s0] sm:$0x7]
        %v1068 = vperm.slane %v1066, 0
        %v1069 = vperm.slane %v1066, 1
        %v1070 = vperm.slane %v1066, 2
        %v1074 = vmul.f32 %v1059, %v1068
        %v1075 = vmul.f32 %v1060, %v1069
        %v1076 = vmul.f32 %v1061, %v1070
        %v1077 = vpack.c.bf16 %v1075, %v1074
        %v1078 = vpack.c.bf16 %v1076, %v1076
        %1079 = vst [vmem:[#allocation2 + $0x4] sm:$0xff] %v1077
        %vm1080 = vcmask 551936
        %1081 = vst.msk [vmem:[#allocation2 + $0xc] sm:$0xf] %vm1080, %v1078
        %v1082 = vld [vmem:[#allocation2] sm:$0xff]
        %v1083 = vld [vmem:[#allocation2 + $0x8] sm:$0xff]
        %v1084 = vld [vmem:[%s4] sm:$0xf]
        %s1085 = scalar_lea.vmem %s4, 4
        %v1086 = vld [vmem:[%s1085] sm:$0xf]
        %v1089 = vunpack.c.l.b16 %v1082
        %v1090 = vunpack.c.h.b16 %v1082
        %v1091 = vunpack.c.l.b16 %v1083
        %v1092 = vunpack.c.h.b16 %v1083
        %v1093 = vpack.c.b16 %v1089, %v1089
        %v1094 = vpack.c.b16 %v1090, %v1090
        %v1095 = vpack.c.b16 %v1091, %v1091
        %v1096 = vpack.c.b16 %v1092, %v1092
        %1097 = vrot.lane.b32.xlu0 %v1093, 18
        %v1098 = vpop.permute.xlu0 %1097
        %1099 = vrot.lane.b32.xlu0 %v1094, 18
        %v1100 = vpop.permute.xlu0 %1099
        %1101 = vrot.lane.b32.xlu0 %v1095, 18
        %v1102 = vpop.permute.xlu0 %1101
        %1103 = vrot.lane.b32.xlu0 %v1096, 18
        %v1104 = vpop.permute.xlu0 %1103
        %v1105 = vsel %vm405, %v1098, %v1100
        %v1106 = vsel %vm405, %v1100, %v1102
        %v1107 = vsel %vm405, %v1102, %v1104
        %vm1108 = vcmask 64512
        %v1110 = vsel %vm1108, %v1086, 0
        %v1113 = vsel %vm375, %v1105, 0
        %v1116 = vsel %vm375, %v1106, 0
        %v1119 = vsel %vm375, %v1107, 0
        %1121 = vmatpush.bf16.msra.mxu0 0
        %1122 = vmatpush.bf16.msra.mxu0 0
        %1123 = vmatpush.bf16.msra.mxu0 0
        %1124 = vmatpush.bf16.msra.mxu0 0
        %1125 = vmatpush.bf16.msra.mxu0 0
        %1126 = vmatpush.bf16.msra.mxu0 0
        %1127 = vmatpush.bf16.msra.mxu0 0
        %1128 = vmatpush.bf16.msra.mxu0 %v1113
        %1129 = vmatmul.bf16.gmra.mxu0 %v1110
        %v1130 = vpop.f32.mrf.mxu0
        %v1131 = vadd.f32 0.0, %v1130
        %v1132 = vpop.f32.mrf.mxu0
        %1133 = vdwg.mxu0
        %1134 = vmatpush.bf16.msra.mxu0 0
        %1135 = vmatpush.bf16.msra.mxu0 0
        %1136 = vmatpush.bf16.msra.mxu0 0
        %1137 = vmatpush.bf16.msra.mxu0 0
        %1138 = vmatpush.bf16.msra.mxu0 0
        %1139 = vmatpush.bf16.msra.mxu0 0
        %1140 = vmatpush.bf16.msra.mxu0 0
        %1141 = vmatpush.bf16.msra.mxu0 %v1116
        %1142 = vmatmul.bf16.gmra.mxu0 %v1110
        %v1143 = vpop.f32.mrf.mxu0
        %v1144 = vadd.f32 0.0, %v1143
        %v1145 = vpop.f32.mrf.mxu0
        %1146 = vdwg.mxu0
        %1147 = vmatpush.bf16.msra.mxu0 0
        %1148 = vmatpush.bf16.msra.mxu0 0
        %1149 = vmatpush.bf16.msra.mxu0 0
        %1150 = vmatpush.bf16.msra.mxu0 0
        %1151 = vmatpush.bf16.msra.mxu0 0
        %1152 = vmatpush.bf16.msra.mxu0 0
        %1153 = vmatpush.bf16.msra.mxu0 0
        %1154 = vmatpush.bf16.msra.mxu0 %v1119
        %1155 = vmatmul.bf16.gmra.mxu0 %v1110
        %v1156 = vpop.f32.mrf.mxu0
        %v1157 = vadd.f32 0.0, %v1156
        %v1158 = vpop.f32.mrf.mxu0
        %1159 = vdwg.mxu0
        %1160 = vrot.lane.b32.xlu0 %v1093, 19
        %v1161 = vpop.permute.xlu0 %1160
        %1162 = vrot.lane.b32.xlu0 %v1094, 19
        %v1163 = vpop.permute.xlu0 %1162
        %1164 = vrot.lane.b32.xlu0 %v1095, 19
        %v1165 = vpop.permute.xlu0 %1164
        %1166 = vrot.lane.b32.xlu0 %v1096, 19
        %v1167 = vpop.permute.xlu0 %1166
        %v1168 = vsel %vm482, %v1161, %v1163
        %v1169 = vsel %vm482, %v1163, %v1165
        %v1170 = vsel %vm482, %v1165, %v1167
        %v1172 = vsel %vm1108, %v1084, 0
        %v1175 = vsel %vm375, %v1168, 0
        %v1178 = vsel %vm375, %v1169, 0
        %v1181 = vsel %vm375, %v1170, 0
        %1183 = vmatpush.bf16.msra.mxu0 0
        %1184 = vmatpush.bf16.msra.mxu0 0
        %1185 = vmatpush.bf16.msra.mxu0 0
        %1186 = vmatpush.bf16.msra.mxu0 0
        %1187 = vmatpush.bf16.msra.mxu0 0
        %1188 = vmatpush.bf16.msra.mxu0 0
        %1189 = vmatpush.bf16.msra.mxu0 0
        %1190 = vmatpush.bf16.msra.mxu0 %v1175
        %1191 = vmatmul.bf16.gmra.mxu0 %v1172
        %v1192 = vpop.f32.mrf.mxu0
        %v1193 = vadd.f32 %v1131, %v1192
        %v1194 = vpop.f32.mrf.mxu0
        %1195 = vdwg.mxu0
        %1196 = vmatpush.bf16.msra.mxu0 0
        %1197 = vmatpush.bf16.msra.mxu0 0
        %1198 = vmatpush.bf16.msra.mxu0 0
        %1199 = vmatpush.bf16.msra.mxu0 0
        %1200 = vmatpush.bf16.msra.mxu0 0
        %1201 = vmatpush.bf16.msra.mxu0 0
        %1202 = vmatpush.bf16.msra.mxu0 0
        %1203 = vmatpush.bf16.msra.mxu0 %v1178
        %1204 = vmatmul.bf16.gmra.mxu0 %v1172
        %v1205 = vpop.f32.mrf.mxu0
        %v1206 = vadd.f32 %v1144, %v1205
        %v1207 = vpop.f32.mrf.mxu0
        %1208 = vdwg.mxu0
        %1209 = vmatpush.bf16.msra.mxu0 0
        %1210 = vmatpush.bf16.msra.mxu0 0
        %1211 = vmatpush.bf16.msra.mxu0 0
        %1212 = vmatpush.bf16.msra.mxu0 0
        %1213 = vmatpush.bf16.msra.mxu0 0
        %1214 = vmatpush.bf16.msra.mxu0 0
        %1215 = vmatpush.bf16.msra.mxu0 0
        %1216 = vmatpush.bf16.msra.mxu0 %v1181
        %1217 = vmatmul.bf16.gmra.mxu0 %v1172
        %v1218 = vpop.f32.mrf.mxu0
        %v1219 = vadd.f32 %v1157, %v1218
        %v1220 = vpop.f32.mrf.mxu0
        %1221 = vdwg.mxu0
        %s1222 = scalar_lea.vmem %s4, 8
        %v1223 = vld [vmem:[%s1222] sm:$0xf]
        %1224 = vrot.lane.b32.xlu0 %v1093, 17
        %v1225 = vpop.permute.xlu0 %1224
        %1226 = vrot.lane.b32.xlu0 %v1094, 17
        %v1227 = vpop.permute.xlu0 %1226
        %1228 = vrot.lane.b32.xlu0 %v1095, 17
        %v1229 = vpop.permute.xlu0 %1228
        %1230 = vrot.lane.b32.xlu0 %v1096, 17
        %v1231 = vpop.permute.xlu0 %1230
        %v1232 = vsel %vm558, %v1225, %v1227
        %v1233 = vsel %vm558, %v1227, %v1229
        %v1234 = vsel %vm558, %v1229, %v1231
        %v1236 = vsel %vm1108, %v1223, 0
        %v1239 = vsel %vm375, %v1232, 0
        %v1242 = vsel %vm375, %v1233, 0
        %v1245 = vsel %vm375, %v1234, 0
        %1247 = vmatpush.bf16.msra.mxu0 0
        %1248 = vmatpush.bf16.msra.mxu0 0
        %1249 = vmatpush.bf16.msra.mxu0 0
        %1250 = vmatpush.bf16.msra.mxu0 0
        %1251 = vmatpush.bf16.msra.mxu0 0
        %1252 = vmatpush.bf16.msra.mxu0 0
        %1253 = vmatpush.bf16.msra.mxu0 0
        %1254 = vmatpush.bf16.msra.mxu0 %v1239
        %1255 = vmatmul.bf16.gmra.mxu0 %v1236
        %v1256 = vpop.f32.mrf.mxu0
        %v1257 = vadd.f32 0.0, %v1256
        %v1258 = vpop.f32.mrf.mxu0
        %1259 = vdwg.mxu0
        %1260 = vmatpush.bf16.msra.mxu0 0
        %1261 = vmatpush.bf16.msra.mxu0 0
        %1262 = vmatpush.bf16.msra.mxu0 0
        %1263 = vmatpush.bf16.msra.mxu0 0
        %1264 = vmatpush.bf16.msra.mxu0 0
        %1265 = vmatpush.bf16.msra.mxu0 0
        %1266 = vmatpush.bf16.msra.mxu0 0
        %1267 = vmatpush.bf16.msra.mxu0 %v1242
        %1268 = vmatmul.bf16.gmra.mxu0 %v1236
        %v1269 = vpop.f32.mrf.mxu0
        %v1270 = vadd.f32 0.0, %v1269
        %v1271 = vpop.f32.mrf.mxu0
        %1272 = vdwg.mxu0
        %1273 = vmatpush.bf16.msra.mxu0 0
        %1274 = vmatpush.bf16.msra.mxu0 0
        %1275 = vmatpush.bf16.msra.mxu0 0
        %1276 = vmatpush.bf16.msra.mxu0 0
        %1277 = vmatpush.bf16.msra.mxu0 0
        %1278 = vmatpush.bf16.msra.mxu0 0
        %1279 = vmatpush.bf16.msra.mxu0 0
        %1280 = vmatpush.bf16.msra.mxu0 %v1245
        %1281 = vmatmul.bf16.gmra.mxu0 %v1236
        %v1282 = vpop.f32.mrf.mxu0
        %v1283 = vadd.f32 0.0, %v1282
        %v1284 = vpop.f32.mrf.mxu0
        %1285 = vdwg.mxu0
        %v1286 = vadd.f32 %v1193, %v1257
        %v1287 = vadd.f32 %v1206, %v1270
        %v1288 = vadd.f32 %v1219, %v1283
        %s1289 = scalar_lea.vmem %s4, 12
        %v1290 = vld [vmem:[%s1289] sm:$0xf]
        %1291 = vrot.lane.b32.xlu0 %v1093, 1
        %v1292 = vpop.permute.xlu0 %1291
        %1293 = vrot.lane.b32.xlu0 %v1094, 1
        %v1294 = vpop.permute.xlu0 %1293
        %1295 = vrot.lane.b32.xlu0 %v1095, 1
        %v1296 = vpop.permute.xlu0 %1295
        %1297 = vrot.lane.b32.xlu0 %v1096, 1
        %v1298 = vpop.permute.xlu0 %1297
        %v1299 = vsel %vm637, %v1292, %v1294
        %v1300 = vsel %vm637, %v1294, %v1296
        %v1301 = vsel %vm637, %v1296, %v1298
        %v1303 = vsel %vm1108, %v1290, 0
        %v1306 = vsel %vm375, %v1299, 0
        %v1309 = vsel %vm375, %v1300, 0
        %v1312 = vsel %vm375, %v1301, 0
        %1314 = vmatpush.bf16.msra.mxu0 0
        %1315 = vmatpush.bf16.msra.mxu0 0
        %1316 = vmatpush.bf16.msra.mxu0 0
        %1317 = vmatpush.bf16.msra.mxu0 0
        %1318 = vmatpush.bf16.msra.mxu0 0
        %1319 = vmatpush.bf16.msra.mxu0 0
        %1320 = vmatpush.bf16.msra.mxu0 0
        %1321 = vmatpush.bf16.msra.mxu0 %v1306
        %1322 = vmatmul.bf16.gmra.mxu0 %v1303
        %v1323 = vpop.f32.mrf.mxu0
        %v1324 = vadd.f32 0.0, %v1323
        %v1325 = vpop.f32.mrf.mxu0
        %1326 = vdwg.mxu0
        %1327 = vmatpush.bf16.msra.mxu0 0
        %1328 = vmatpush.bf16.msra.mxu0 0
        %1329 = vmatpush.bf16.msra.mxu0 0
        %1330 = vmatpush.bf16.msra.mxu0 0
        %1331 = vmatpush.bf16.msra.mxu0 0
        %1332 = vmatpush.bf16.msra.mxu0 0
        %1333 = vmatpush.bf16.msra.mxu0 0
        %1334 = vmatpush.bf16.msra.mxu0 %v1309
        %1335 = vmatmul.bf16.gmra.mxu0 %v1303
        %v1336 = vpop.f32.mrf.mxu0
        %v1337 = vadd.f32 0.0, %v1336
        %v1338 = vpop.f32.mrf.mxu0
        %1339 = vdwg.mxu0
        %1340 = vmatpush.bf16.msra.mxu0 0
        %1341 = vmatpush.bf16.msra.mxu0 0
        %1342 = vmatpush.bf16.msra.mxu0 0
        %1343 = vmatpush.bf16.msra.mxu0 0
        %1344 = vmatpush.bf16.msra.mxu0 0
        %1345 = vmatpush.bf16.msra.mxu0 0
        %1346 = vmatpush.bf16.msra.mxu0 0
        %1347 = vmatpush.bf16.msra.mxu0 %v1312
        %1348 = vmatmul.bf16.gmra.mxu0 %v1303
        %v1349 = vpop.f32.mrf.mxu0
        %v1350 = vadd.f32 0.0, %v1349
        %v1351 = vpop.f32.mrf.mxu0
        %1352 = vdwg.mxu0
        %v1353 = vadd.f32 %v1286, %v1324
        %v1354 = vadd.f32 %v1287, %v1337
        %v1355 = vadd.f32 %v1288, %v1350
        %v1356 = vld [vmem:[#allocation2 + $0x4] sm:$0xff]
        %v1357 = vld [vmem:[#allocation2 + $0xc] sm:$0xf]
        %s1358 = scalar_lea.vmem %s4, 16
        %v1359 = vld [vmem:[%s1358] sm:$0xf]
        %v1362 = vunpack.c.l.b16 %v1356
        %v1363 = vunpack.c.h.b16 %v1356
        %v1364 = vunpack.c.l.b16 %v1357
        %v1365 = vpack.c.b16 %v1362, %v1362
        %v1366 = vpack.c.b16 %v1363, %v1363
        %v1367 = vpack.c.b16 %v1364, %v1364
        %v1369 = vsel %vm1108, %v1359, 0
        %v1372 = vsel %vm375, %v1365, 0
        %v1375 = vsel %vm375, %v1366, 0
        %v1378 = vsel %vm375, %v1367, 0
        %1380 = vmatpush.bf16.msra.mxu0 0
        %1381 = vmatpush.bf16.msra.mxu0 0
        %1382 = vmatpush.bf16.msra.mxu0 0
        %1383 = vmatpush.bf16.msra.mxu0 0
        %1384 = vmatpush.bf16.msra.mxu0 0
        %1385 = vmatpush.bf16.msra.mxu0 0
        %1386 = vmatpush.bf16.msra.mxu0 0
        %1387 = vmatpush.bf16.msra.mxu0 %v1372
        %1388 = vmatmul.bf16.gmra.mxu0 %v1369
        %v1389 = vpop.f32.mrf.mxu0
        %v1390 = vadd.f32 0.0, %v1389
        %v1391 = vpop.f32.mrf.mxu0
        %1392 = vdwg.mxu0
        %1393 = vmatpush.bf16.msra.mxu0 0
        %1394 = vmatpush.bf16.msra.mxu0 0
        %1395 = vmatpush.bf16.msra.mxu0 0
        %1396 = vmatpush.bf16.msra.mxu0 0
        %1397 = vmatpush.bf16.msra.mxu0 0
        %1398 = vmatpush.bf16.msra.mxu0 0
        %1399 = vmatpush.bf16.msra.mxu0 0
        %1400 = vmatpush.bf16.msra.mxu0 %v1375
        %1401 = vmatmul.bf16.gmra.mxu0 %v1369
        %v1402 = vpop.f32.mrf.mxu0
        %v1403 = vadd.f32 0.0, %v1402
        %v1404 = vpop.f32.mrf.mxu0
        %1405 = vdwg.mxu0
        %1406 = vmatpush.bf16.msra.mxu0 0
        %1407 = vmatpush.bf16.msra.mxu0 0
        %1408 = vmatpush.bf16.msra.mxu0 0
        %1409 = vmatpush.bf16.msra.mxu0 0
        %1410 = vmatpush.bf16.msra.mxu0 0
        %1411 = vmatpush.bf16.msra.mxu0 0
        %1412 = vmatpush.bf16.msra.mxu0 0
        %1413 = vmatpush.bf16.msra.mxu0 %v1378
        %1414 = vmatmul.bf16.gmra.mxu0 %v1369
        %v1415 = vpop.f32.mrf.mxu0
        %v1416 = vadd.f32 0.0, %v1415
        %v1417 = vpop.f32.mrf.mxu0
        %1418 = vdwg.mxu0
        %v1419 = vadd.f32 %v1353, %v1390
        %v1420 = vadd.f32 %v1354, %v1403
        %v1421 = vadd.f32 %v1355, %v1416
        %s1422 = scalar_lea.vmem %s4, 20
        %v1423 = vld [vmem:[%s1422] sm:$0xf]
        %1424 = vrot.lane.b32.xlu0 %v1365, 127
        %v1425 = vpop.permute.xlu0 %1424
        %1426 = vrot.lane.b32.xlu0 %v1366, 127
        %v1427 = vpop.permute.xlu0 %1426
        %1428 = vrot.lane.b32.xlu0 %v1367, 127
        %v1429 = vpop.permute.xlu0 %1428
        %v1430 = vsel %vm771, %v1425, %v1427
        %v1431 = vsel %vm771, %v1427, %v1429
        %v1433 = vsel %vm1108, %v1423, 0
        %v1436 = vsel %vm375, %v1430, 0
        %v1439 = vsel %vm375, %v1431, 0
        %v1442 = vsel %vm375, %v1429, 0
        %1444 = vmatpush.bf16.msra.mxu0 0
        %1445 = vmatpush.bf16.msra.mxu0 0
        %1446 = vmatpush.bf16.msra.mxu0 0
        %1447 = vmatpush.bf16.msra.mxu0 0
        %1448 = vmatpush.bf16.msra.mxu0 0
        %1449 = vmatpush.bf16.msra.mxu0 0
        %1450 = vmatpush.bf16.msra.mxu0 0
        %1451 = vmatpush.bf16.msra.mxu0 %v1436
        %1452 = vmatmul.bf16.gmra.mxu0 %v1433
        %v1453 = vpop.f32.mrf.mxu0
        %v1454 = vadd.f32 0.0, %v1453
        %v1455 = vpop.f32.mrf.mxu0
        %1456 = vdwg.mxu0
        %1457 = vmatpush.bf16.msra.mxu0 0
        %1458 = vmatpush.bf16.msra.mxu0 0
        %1459 = vmatpush.bf16.msra.mxu0 0
        %1460 = vmatpush.bf16.msra.mxu0 0
        %1461 = vmatpush.bf16.msra.mxu0 0
        %1462 = vmatpush.bf16.msra.mxu0 0
        %1463 = vmatpush.bf16.msra.mxu0 0
        %1464 = vmatpush.bf16.msra.mxu0 %v1439
        %1465 = vmatmul.bf16.gmra.mxu0 %v1433
        %v1466 = vpop.f32.mrf.mxu0
        %v1467 = vadd.f32 0.0, %v1466
        %v1468 = vpop.f32.mrf.mxu0
        %1469 = vdwg.mxu0
        %1470 = vmatpush.bf16.msra.mxu0 0
        %1471 = vmatpush.bf16.msra.mxu0 0
        %1472 = vmatpush.bf16.msra.mxu0 0
        %1473 = vmatpush.bf16.msra.mxu0 0
        %1474 = vmatpush.bf16.msra.mxu0 0
        %1475 = vmatpush.bf16.msra.mxu0 0
        %1476 = vmatpush.bf16.msra.mxu0 0
        %1477 = vmatpush.bf16.msra.mxu0 %v1442
        %1478 = vmatmul.bf16.gmra.mxu0 %v1433
        %v1479 = vpop.f32.mrf.mxu0
        %v1480 = vadd.f32 0.0, %v1479
        %v1481 = vpop.f32.mrf.mxu0
        %1482 = vdwg.mxu0
        %v1483 = vadd.f32 %v1419, %v1454
        %v1484 = vadd.f32 %v1420, %v1467
        %v1485 = vadd.f32 %v1421, %v1480
        %s1486 = scalar_lea.vmem %s4, 24
        %v1487 = vld [vmem:[%s1486] sm:$0xf]
        %1488 = vrot.lane.b32.xlu0 %v1365, 111
        %v1489 = vpop.permute.xlu0 %1488
        %1490 = vrot.lane.b32.xlu0 %v1366, 111
        %v1491 = vpop.permute.xlu0 %1490
        %1492 = vrot.lane.b32.xlu0 %v1367, 111
        %v1493 = vpop.permute.xlu0 %1492
        %v1494 = vsel %vm845, %v1489, %v1491
        %v1495 = vsel %vm845, %v1491, %v1493
        %v1497 = vsel %vm1108, %v1487, 0
        %v1500 = vsel %vm375, %v1494, 0
        %v1503 = vsel %vm375, %v1495, 0
        %v1506 = vsel %vm375, %v1493, 0
        %1508 = vmatpush.bf16.msra.mxu0 0
        %1509 = vmatpush.bf16.msra.mxu0 0
        %1510 = vmatpush.bf16.msra.mxu0 0
        %1511 = vmatpush.bf16.msra.mxu0 0
        %1512 = vmatpush.bf16.msra.mxu0 0
        %1513 = vmatpush.bf16.msra.mxu0 0
        %1514 = vmatpush.bf16.msra.mxu0 0
        %1515 = vmatpush.bf16.msra.mxu0 %v1500
        %1516 = vmatmul.bf16.gmra.mxu0 %v1497
        %v1517 = vpop.f32.mrf.mxu0
        %v1518 = vadd.f32 0.0, %v1517
        %v1519 = vpop.f32.mrf.mxu0
        %1520 = vdwg.mxu0
        %1521 = vmatpush.bf16.msra.mxu0 0
        %1522 = vmatpush.bf16.msra.mxu0 0
        %1523 = vmatpush.bf16.msra.mxu0 0
        %1524 = vmatpush.bf16.msra.mxu0 0
        %1525 = vmatpush.bf16.msra.mxu0 0
        %1526 = vmatpush.bf16.msra.mxu0 0
        %1527 = vmatpush.bf16.msra.mxu0 0
        %1528 = vmatpush.bf16.msra.mxu0 %v1503
        %1529 = vmatmul.bf16.gmra.mxu0 %v1497
        %v1530 = vpop.f32.mrf.mxu0
        %v1531 = vadd.f32 0.0, %v1530
        %v1532 = vpop.f32.mrf.mxu0
        %1533 = vdwg.mxu0
        %1534 = vmatpush.bf16.msra.mxu0 0
        %1535 = vmatpush.bf16.msra.mxu0 0
        %1536 = vmatpush.bf16.msra.mxu0 0
        %1537 = vmatpush.bf16.msra.mxu0 0
        %1538 = vmatpush.bf16.msra.mxu0 0
        %1539 = vmatpush.bf16.msra.mxu0 0
        %1540 = vmatpush.bf16.msra.mxu0 0
        %1541 = vmatpush.bf16.msra.mxu0 %v1506
        %1542 = vmatmul.bf16.gmra.mxu0 %v1497
        %v1543 = vpop.f32.mrf.mxu0
        %v1544 = vadd.f32 0.0, %v1543
        %v1545 = vpop.f32.mrf.mxu0
        %1546 = vdwg.mxu0
        %v1547 = vadd.f32 %v1483, %v1518
        %v1548 = vadd.f32 %v1484, %v1531
        %v1549 = vadd.f32 %v1485, %v1544
        %s1550 = scalar_lea.vmem %s4, 28
        %v1551 = vld [vmem:[%s1550] sm:$0xf]
        %1552 = vrot.lane.b32.xlu0 %v1365, 110
        %v1553 = vpop.permute.xlu0 %1552
        %1554 = vrot.lane.b32.xlu0 %v1366, 110
        %v1555 = vpop.permute.xlu0 %1554
        %1556 = vrot.lane.b32.xlu0 %v1367, 110
        %v1557 = vpop.permute.xlu0 %1556
        %v1558 = vsel %vm919, %v1553, %v1555
        %v1559 = vsel %vm919, %v1555, %v1557
        %v1561 = vsel %vm1108, %v1551, 0
        %v1564 = vsel %vm375, %v1558, 0
        %v1567 = vsel %vm375, %v1559, 0
        %v1570 = vsel %vm375, %v1557, 0
        %1572 = vmatpush.bf16.msra.mxu0 0
        %1573 = vmatpush.bf16.msra.mxu0 0
        %1574 = vmatpush.bf16.msra.mxu0 0
        %1575 = vmatpush.bf16.msra.mxu0 0
        %1576 = vmatpush.bf16.msra.mxu0 0
        %1577 = vmatpush.bf16.msra.mxu0 0
        %1578 = vmatpush.bf16.msra.mxu0 0
        %1579 = vmatpush.bf16.msra.mxu0 %v1564
        %1580 = vmatmul.bf16.gmra.mxu0 %v1561
        %v1581 = vpop.f32.mrf.mxu0
        %v1582 = vadd.f32 0.0, %v1581
        %v1583 = vpop.f32.mrf.mxu0
        %1584 = vdwg.mxu0
        %1585 = vmatpush.bf16.msra.mxu0 0
        %1586 = vmatpush.bf16.msra.mxu0 0
        %1587 = vmatpush.bf16.msra.mxu0 0
        %1588 = vmatpush.bf16.msra.mxu0 0
        %1589 = vmatpush.bf16.msra.mxu0 0
        %1590 = vmatpush.bf16.msra.mxu0 0
        %1591 = vmatpush.bf16.msra.mxu0 0
        %1592 = vmatpush.bf16.msra.mxu0 %v1567
        %1593 = vmatmul.bf16.gmra.mxu0 %v1561
        %v1594 = vpop.f32.mrf.mxu0
        %v1595 = vadd.f32 0.0, %v1594
        %v1596 = vpop.f32.mrf.mxu0
        %1597 = vdwg.mxu0
        %1598 = vmatpush.bf16.msra.mxu0 0
        %1599 = vmatpush.bf16.msra.mxu0 0
        %1600 = vmatpush.bf16.msra.mxu0 0
        %1601 = vmatpush.bf16.msra.mxu0 0
        %1602 = vmatpush.bf16.msra.mxu0 0
        %1603 = vmatpush.bf16.msra.mxu0 0
        %1604 = vmatpush.bf16.msra.mxu0 0
        %1605 = vmatpush.bf16.msra.mxu0 %v1570
        %1606 = vmatmul.bf16.gmra.mxu0 %v1561
        %v1607 = vpop.f32.mrf.mxu0
        %v1608 = vadd.f32 0.0, %v1607
        %v1609 = vpop.f32.mrf.mxu0
        %1610 = vdwg.mxu0
        %v1611 = vadd.f32 %v1547, %v1582
        %v1612 = vadd.f32 %v1548, %v1595
        %v1613 = vadd.f32 %v1549, %v1608
        %s1614 = scalar_lea.vmem %s4, 32
        %v1615 = vld [vmem:[%s1614] sm:$0xf]
        %1616 = vrot.lane.b32.xlu0 %v1365, 109
        %v1617 = vpop.permute.xlu0 %1616
        %1618 = vrot.lane.b32.xlu0 %v1366, 109
        %v1619 = vpop.permute.xlu0 %1618
        %1620 = vrot.lane.b32.xlu0 %v1367, 109
        %v1621 = vpop.permute.xlu0 %1620
        %v1622 = vsel %vm993, %v1617, %v1619
        %v1623 = vsel %vm993, %v1619, %v1621
        %v1625 = vsel %vm1108, %v1615, 0
        %v1628 = vsel %vm375, %v1622, 0
        %v1631 = vsel %vm375, %v1623, 0
        %v1634 = vsel %vm375, %v1621, 0
        %1636 = vmatpush.bf16.msra.mxu0 0
        %1637 = vmatpush.bf16.msra.mxu0 0
        %1638 = vmatpush.bf16.msra.mxu0 0
        %1639 = vmatpush.bf16.msra.mxu0 0
        %1640 = vmatpush.bf16.msra.mxu0 0
        %1641 = vmatpush.bf16.msra.mxu0 0
        %1642 = vmatpush.bf16.msra.mxu0 0
        %1643 = vmatpush.bf16.msra.mxu0 %v1628
        %1644 = vmatmul.bf16.gmra.mxu0 %v1625
        %v1645 = vpop.f32.mrf.mxu0
        %v1646 = vadd.f32 0.0, %v1645
        %v1647 = vpop.f32.mrf.mxu0
        %1648 = vdwg.mxu0
        %1649 = vmatpush.bf16.msra.mxu0 0
        %1650 = vmatpush.bf16.msra.mxu0 0
        %1651 = vmatpush.bf16.msra.mxu0 0
        %1652 = vmatpush.bf16.msra.mxu0 0
        %1653 = vmatpush.bf16.msra.mxu0 0
        %1654 = vmatpush.bf16.msra.mxu0 0
        %1655 = vmatpush.bf16.msra.mxu0 0
        %1656 = vmatpush.bf16.msra.mxu0 %v1631
        %1657 = vmatmul.bf16.gmra.mxu0 %v1625
        %v1658 = vpop.f32.mrf.mxu0
        %v1659 = vadd.f32 0.0, %v1658
        %v1660 = vpop.f32.mrf.mxu0
        %1661 = vdwg.mxu0
        %1662 = vmatpush.bf16.msra.mxu0 0
        %1663 = vmatpush.bf16.msra.mxu0 0
        %1664 = vmatpush.bf16.msra.mxu0 0
        %1665 = vmatpush.bf16.msra.mxu0 0
        %1666 = vmatpush.bf16.msra.mxu0 0
        %1667 = vmatpush.bf16.msra.mxu0 0
        %1668 = vmatpush.bf16.msra.mxu0 0
        %1669 = vmatpush.bf16.msra.mxu0 %v1634
        %1670 = vmatmul.bf16.gmra.mxu0 %v1625
        %v1671 = vpop.f32.mrf.mxu0
        %v1672 = vadd.f32 0.0, %v1671
        %v1673 = vpop.f32.mrf.mxu0
        %1674 = vdwg.mxu0
        %v1675 = vadd.f32 %v1611, %v1646
        %v1676 = vadd.f32 %v1612, %v1659
        %v1677 = vadd.f32 %v1613, %v1672
        %v1678 = vld [vmem:[%s5] sm:$0xff]
        %1680 = vset.pattern.permute.xlu0 0
        %1681 = vperm.xlu0 %1680, %v1678
        %v1682 = vpop.permute.xlu0 %1681
        %v1684 = vadd.f32 %v1675, %v1682
        %v1685 = vadd.f32 %v1676, %v1682
        %v1686 = vadd.f32 %v1677, %v1682
        %v1687 = vmax.f32 %v1684, 0.0
        %v1688 = vmax.f32 %v1685, 0.0
        %v1689 = vmax.f32 %v1686, 0.0
        %v1690 = vpack.c.bf16 %v1688, %v1687
        %v1691 = vpack.c.bf16 %v1689, %v1689
        %1692 = vst [vmem:[#allocation3] sm:$0xff] %v1690
        %1693 = vst.msk [vmem:[#allocation3 + $0x8] sm:$0xf] %vm1080, %v1691
        %v1694 = vld [vmem:[#allocation3] sm:$0xf]
        %v1695 = vunpack.c.l.bf16 %v1694
        %1697 = vrot.lane.b32.xlu0 %v1695, 127
        %v1698 = vpop.permute.xlu0 %1697
        %v1700 = vmax.f32 %v1695, %v1698
        %v1701 = vpack.c.bf16 %v1700, %v1700
        %v1702 = vunpack.c.l.bf16 %v1701
        %1704 = vrot.lane.b32.xlu0 %v1702, 110
        %v1705 = vpop.permute.xlu0 %1704
        %v1707 = vmax.f32 %v1702, %v1705
        %v1708 = vpack.c.bf16 %v1707, %v1707
        %v1709 = vld [vmem:[%s6] sm:$0xf]
        %v1710 = vld [vmem:[%s6 + $0x4] sm:$0xf]
        %1712 = vrot.lane.b32.xlu0 %v1708, 109
        %v1713 = vpop.permute.xlu0 %1712
        %v1716 = vunpack.c.l.b16 %v1709
        %v1717 = vunpack.c.l.b16 %v1710
        %v1718 = vpack.c.b16 %v1717, %v1716
        %vm1720 = vcmask 130048
        %v1722 = vsel %vm1720, %v1713, 0
        %1724 = vmatpush.bf16.msra.mxu0 0
        %1725 = vmatpush.bf16.msra.mxu0 0
        %1726 = vmatpush.bf16.msra.mxu0 0
        %1727 = vmatpush.bf16.msra.mxu0 0
        %1728 = vmatpush.bf16.msra.mxu0 0
        %1729 = vmatpush.bf16.msra.mxu0 0
        %1730 = vmatpush.bf16.msra.mxu0 0
        %1731 = vmatpush.bf16.msra.mxu0 %v1718
        %1732 = vmatmul.bf16.gmra.mxu0 %v1722
        %v1733 = vpop.f32.mrf.mxu0
        %v1734 = vadd.f32 0.0, %v1733
        %v1735 = vpop.f32.mrf.mxu0
        %1736 = vdwg.mxu0
        %v1737 = vpack.c.bf16 %v1734, %v1734
        %1739 = vrot.lane.b32.xlu0 %v1737, 10
        %v1740 = vpop.permute.xlu0 %1739
        %vm1742 = vcmask 158800
        %1743 = vst.msk [vmem:[#allocation4 + $0x4] sm:$0xf] %vm1742, %v1740
        %v1744 = vld [vmem:[#allocation3] sm:$0xf]
        %v1745 = vunpack.c.l.bf16 %v1744
        %1747 = vrot.lane.b32.xlu0 %v1745, 127
        %v1748 = vpop.permute.xlu0 %1747
        %v1750 = vmax.f32 %v1745, %v1748
        %v1751 = vpack.c.bf16 %v1750, %v1750
        %v1752 = vunpack.c.l.bf16 %v1751
        %1754 = vrot.lane.b32.xlu0 %v1752, 110
        %v1755 = vpop.permute.xlu0 %1754
        %v1757 = vmax.f32 %v1752, %v1755
        %v1758 = vpack.c.bf16 %v1757, %v1757
        %v1759 = vld [vmem:[%s6] sm:$0xf]
        %v1760 = vld [vmem:[%s6 + $0x4] sm:$0xf]
        %1762 = vrot.lane.b32.xlu0 %v1758, 73
        %v1763 = vpop.permute.xlu0 %1762
        %v1766 = vunpack.c.l.b16 %v1759
        %v1767 = vunpack.c.l.b16 %v1760
        %v1768 = vpack.c.b16 %v1767, %v1766
        %v1771 = vsel %vm1720, %v1763, 0
        %1773 = vmatpush.bf16.msra.mxu0 0
        %1774 = vmatpush.bf16.msra.mxu0 0
        %1775 = vmatpush.bf16.msra.mxu0 0
        %1776 = vmatpush.bf16.msra.mxu0 0
        %1777 = vmatpush.bf16.msra.mxu0 0
        %1778 = vmatpush.bf16.msra.mxu0 0
        %1779 = vmatpush.bf16.msra.mxu0 0
        %1780 = vmatpush.bf16.msra.mxu0 %v1768
        %1781 = vmatmul.bf16.gmra.mxu0 %v1771
        %v1782 = vpop.f32.mrf.mxu0
        %v1783 = vadd.f32 0.0, %v1782
        %v1784 = vpop.f32.mrf.mxu0
        %1785 = vdwg.mxu0
        %v1786 = vpack.c.bf16 %v1783, %v1783
        %1788 = vrot.lane.b32.xlu0 %v1786, 20
        %v1789 = vpop.permute.xlu0 %1788
        %vm1791 = vcmask 240800
        %1792 = vst.msk [vmem:[#allocation4 + $0x4] sm:$0xf] %vm1791, %v1789
        %v1793 = vld [vmem:[#allocation3] sm:$0xf]
        %v1794 = vunpack.c.l.bf16 %v1793
        %1796 = vrot.lane.b32.xlu0 %v1794, 127
        %v1797 = vpop.permute.xlu0 %1796
        %v1799 = vmax.f32 %v1794, %v1797
        %v1800 = vpack.c.bf16 %v1799, %v1799
        %v1801 = vunpack.c.l.bf16 %v1800
        %1803 = vrot.lane.b32.xlu0 %v1801, 110
        %v1804 = vpop.permute.xlu0 %1803
        %v1806 = vmax.f32 %v1801, %v1804
        %v1807 = vpack.c.bf16 %v1806, %v1806
        %v1808 = vld [vmem:[%s6] sm:$0xf]
        %v1809 = vld [vmem:[%s6 + $0x4] sm:$0xf]
        %1811 = vrot.lane.b32.xlu0 %v1807, 37
        %v1812 = vpop.permute.xlu0 %1811
        %v1815 = vunpack.c.l.b16 %v1808
        %v1816 = vunpack.c.l.b16 %v1809
        %v1817 = vpack.c.b16 %v1816, %v1815
        %v1820 = vsel %vm1720, %v1812, 0
        %1822 = vmatpush.bf16.msra.mxu0 0
        %1823 = vmatpush.bf16.msra.mxu0 0
        %1824 = vmatpush.bf16.msra.mxu0 0
        %1825 = vmatpush.bf16.msra.mxu0 0
        %1826 = vmatpush.bf16.msra.mxu0 0
        %1827 = vmatpush.bf16.msra.mxu0 0
        %1828 = vmatpush.bf16.msra.mxu0 0
        %1829 = vmatpush.bf16.msra.mxu0 %v1817
        %1830 = vmatmul.bf16.gmra.mxu0 %v1820
        %v1831 = vpop.f32.mrf.mxu0
        %v1832 = vadd.f32 0.0, %v1831
        %v1833 = vpop.f32.mrf.mxu0
        %1834 = vdwg.mxu0
        %v1835 = vpack.c.bf16 %v1832, %v1832
        %1837 = vrot.lane.b32.xlu0 %v1835, 30
        %v1838 = vpop.permute.xlu0 %1837
        %vm1840 = vcmask 322800
        %1841 = vst.msk [vmem:[#allocation4 + $0x4] sm:$0xf] %vm1840, %v1838
        %v1842 = vld [vmem:[#allocation3] sm:$0xff]
        %v1843 = vld [vmem:[#allocation3 + $0x4] sm:$0xf]
        %v1844 = vunpack.c.l.bf16 %v1842
        %v1845 = vunpack.c.h.bf16 %v1842
        %v1846 = vunpack.c.l.bf16 %v1843
        %1848 = vrot.lane.b32.xlu0 %v1846, 127
        %v1849 = vpop.permute.xlu0 %1848
        %v1851 = vmax.f32 %v1844, %v1849
        %v1852 = vmax.f32 %v1845, %v1849
        %v1853 = vpack.c.bf16 %v1852, %v1851
        %v1854 = vmax.f32 %v1846, %v1849
        %v1855 = vpack.c.bf16 %v1854, %v1854
        %v1856 = vunpack.c.l.bf16 %v1853
        %v1857 = vunpack.c.h.bf16 %v1853
        %v1858 = vunpack.c.l.bf16 %v1855
        %1860 = vrot.lane.b32.xlu0 %v1858, 110
        %v1861 = vpop.permute.xlu0 %1860
        %v1863 = vmax.f32 %v1856, %v1861
        %v1864 = vmax.f32 %v1857, %v1861
        %v1865 = vpack.c.bf16 %v1863, %v1863
        %v1866 = vpack.c.bf16 %v1864, %v1864
        %v1867 = vld [vmem:[%s6] sm:$0xf]
        %v1868 = vld [vmem:[%s6 + $0x4] sm:$0xf]
        %1871 = vrot.lane.b32.xlu0 %v1865, 1
        %v1872 = vpop.permute.xlu0 %1871
        %1873 = vrot.lane.b32.xlu0 %v1866, 1
        %v1874 = vpop.permute.xlu0 %1873
        %v1875 = vsel %vm637, %v1872, %v1874
        %v1878 = vunpack.c.l.b16 %v1867
        %v1879 = vunpack.c.l.b16 %v1868
        %v1880 = vpack.c.b16 %v1879, %v1878
        %v1883 = vsel %vm1720, %v1875, 0
        %1885 = vmatpush.bf16.msra.mxu0 0
        %1886 = vmatpush.bf16.msra.mxu0 0
        %1887 = vmatpush.bf16.msra.mxu0 0
        %1888 = vmatpush.bf16.msra.mxu0 0
        %1889 = vmatpush.bf16.msra.mxu0 0
        %1890 = vmatpush.bf16.msra.mxu0 0
        %1891 = vmatpush.bf16.msra.mxu0 0
        %1892 = vmatpush.bf16.msra.mxu0 %v1880
        %1893 = vmatmul.bf16.gmra.mxu0 %v1883
        %v1894 = vpop.f32.mrf.mxu0
        %v1895 = vadd.f32 0.0, %v1894
        %v1896 = vpop.f32.mrf.mxu0
        %1897 = vdwg.mxu0
        %v1898 = vpack.c.bf16 %v1895, %v1895
        %1900 = vrot.lane.b32.xlu0 %v1898, 40
        %v1901 = vpop.permute.xlu0 %1900
        %vm1903 = vcmask 404800
        %1904 = vst.msk [vmem:[#allocation4 + $0x4] sm:$0xf] %vm1903, %v1901
        %v1905 = vld [vmem:[#allocation3 + $0x4] sm:$0xf]
        %v1906 = vunpack.c.l.bf16 %v1905
        %1908 = vrot.lane.b32.xlu0 %v1906, 127
        %v1909 = vpop.permute.xlu0 %1908
        %v1911 = vmax.f32 %v1906, %v1909
        %v1912 = vpack.c.bf16 %v1911, %v1911
        %v1913 = vunpack.c.l.bf16 %v1912
        %1915 = vrot.lane.b32.xlu0 %v1913, 110
        %v1916 = vpop.permute.xlu0 %1915
        %v1918 = vmax.f32 %v1913, %v1916
        %v1919 = vpack.c.bf16 %v1918, %v1918
        %v1920 = vld [vmem:[%s6] sm:$0xf]
        %v1921 = vld [vmem:[%s6 + $0x4] sm:$0xf]
        %1923 = vrot.lane.b32.xlu0 %v1919, 93
        %v1924 = vpop.permute.xlu0 %1923
        %v1927 = vunpack.c.l.b16 %v1920
        %v1928 = vunpack.c.l.b16 %v1921
        %v1929 = vpack.c.b16 %v1928, %v1927
        %v1932 = vsel %vm1720, %v1924, 0
        %1934 = vmatpush.bf16.msra.mxu0 0
        %1935 = vmatpush.bf16.msra.mxu0 0
        %1936 = vmatpush.bf16.msra.mxu0 0
        %1937 = vmatpush.bf16.msra.mxu0 0
        %1938 = vmatpush.bf16.msra.mxu0 0
        %1939 = vmatpush.bf16.msra.mxu0 0
        %1940 = vmatpush.bf16.msra.mxu0 0
        %1941 = vmatpush.bf16.msra.mxu0 %v1929
        %1942 = vmatmul.bf16.gmra.mxu0 %v1932
        %v1943 = vpop.f32.mrf.mxu0
        %v1944 = vadd.f32 0.0, %v1943
        %v1945 = vpop.f32.mrf.mxu0
        %1946 = vdwg.mxu0
        %v1947 = vpack.c.bf16 %v1944, %v1944
        %1949 = vrot.lane.b32.xlu0 %v1947, 50
        %v1950 = vpop.permute.xlu0 %1949
        %vm1952 = vcmask 486800
        %1953 = vst.msk [vmem:[#allocation4 + $0x4] sm:$0xf] %vm1952, %v1950
        %v1954 = vld [vmem:[#allocation3 + $0x4] sm:$0xf]
        %v1955 = vunpack.c.l.bf16 %v1954
        %1957 = vrot.lane.b32.xlu0 %v1955, 127
        %v1958 = vpop.permute.xlu0 %1957
        %v1960 = vmax.f32 %v1955, %v1958
        %v1961 = vpack.c.bf16 %v1960, %v1960
        %v1962 = vunpack.c.l.bf16 %v1961
        %1964 = vrot.lane.b32.xlu0 %v1962, 110
        %v1965 = vpop.permute.xlu0 %1964
        %v1967 = vmax.f32 %v1962, %v1965
        %v1968 = vpack.c.bf16 %v1967, %v1967
        %v1969 = vld [vmem:[%s6] sm:$0xf]
        %v1970 = vld [vmem:[%s6 + $0x4] sm:$0xf]
        %1972 = vrot.lane.b32.xlu0 %v1968, 57
        %v1973 = vpop.permute.xlu0 %1972
        %v1976 = vunpack.c.l.b16 %v1969
        %v1977 = vunpack.c.l.b16 %v1970
        %v1978 = vpack.c.b16 %v1977, %v1976
        %v1981 = vsel %vm1720, %v1973, 0
        %1983 = vmatpush.bf16.msra.mxu0 0
        %1984 = vmatpush.bf16.msra.mxu0 0
        %1985 = vmatpush.bf16.msra.mxu0 0
        %1986 = vmatpush.bf16.msra.mxu0 0
        %1987 = vmatpush.bf16.msra.mxu0 0
        %1988 = vmatpush.bf16.msra.mxu0 0
        %1989 = vmatpush.bf16.msra.mxu0 0
        %1990 = vmatpush.bf16.msra.mxu0 %v1978
        %1991 = vmatmul.bf16.gmra.mxu0 %v1981
        %v1992 = vpop.f32.mrf.mxu0
        %v1993 = vadd.f32 0.0, %v1992
        %v1994 = vpop.f32.mrf.mxu0
        %1995 = vdwg.mxu0
        %v1996 = vpack.c.bf16 %v1993, %v1993
        %1998 = vrot.lane.b32.xlu0 %v1996, 60
        %v1999 = vpop.permute.xlu0 %1998
        %vm2001 = vcmask 568800
        %2002 = vst.msk [vmem:[#allocation4 + $0x4] sm:$0xf] %vm2001, %v1999
        %v2003 = vld [vmem:[#allocation3 + $0x4] sm:$0xf]
        %v2004 = vunpack.c.l.bf16 %v2003
        %2006 = vrot.lane.b32.xlu0 %v2004, 127
        %v2007 = vpop.permute.xlu0 %2006
        %v2009 = vmax.f32 %v2004, %v2007
        %v2010 = vpack.c.bf16 %v2009, %v2009
        %v2011 = vld [vmem:[#allocation3 + $0x4] sm:$0xff]
        %v2012 = vunpack.c.l.bf16 %v2011
        %v2013 = vunpack.c.h.bf16 %v2011
        %2016 = vrot.lane.b32.xlu0 %v2012, 127
        %v2017 = vpop.permute.xlu0 %2016
        %2018 = vrot.lane.b32.xlu0 %v2013, 127
        %v2019 = vpop.permute.xlu0 %2018
        %vm2020 = vcmask 1039360
        %v2021 = vsel %vm2020, %v2017, %v2019
        %v2024 = vmax.f32 %v2012, %v2021
        %v2025 = vmax.f32 %v2013, %v2019
        %v2026 = vpack.c.bf16 %v2025, %v2024
        %v2027 = vunpack.c.l.bf16 %v2010
        %v2028 = vunpack.c.l.bf16 %v2026
        %v2029 = vunpack.c.h.bf16 %v2026
        %2032 = vrot.lane.b32.xlu0 %v2028, 110
        %v2033 = vpop.permute.xlu0 %2032
        %2034 = vrot.lane.b32.xlu0 %v2029, 110
        %v2035 = vpop.permute.xlu0 %2034
        %vm2036 = vcmask 900096
        %v2037 = vsel %vm2036, %v2033, %v2035
        %v2039 = vmax.f32 %v2027, %v2037
        %v2040 = vpack.c.bf16 %v2039, %v2039
        %v2041 = vld [vmem:[%s6] sm:$0xf]
        %v2042 = vld [vmem:[%s6 + $0x4] sm:$0xf]
        %2044 = vrot.lane.b32.xlu0 %v2040, 21
        %v2045 = vpop.permute.xlu0 %2044
        %v2048 = vunpack.c.l.b16 %v2041
        %v2049 = vunpack.c.l.b16 %v2042
        %v2050 = vpack.c.b16 %v2049, %v2048
        %v2053 = vsel %vm1720, %v2045, 0
        %2055 = vmatpush.bf16.msra.mxu0 0
        %2056 = vmatpush.bf16.msra.mxu0 0
        %2057 = vmatpush.bf16.msra.mxu0 0
        %2058 = vmatpush.bf16.msra.mxu0 0
        %2059 = vmatpush.bf16.msra.mxu0 0
        %2060 = vmatpush.bf16.msra.mxu0 0
        %2061 = vmatpush.bf16.msra.mxu0 0
        %2062 = vmatpush.bf16.msra.mxu0 %v2050
        %2063 = vmatmul.bf16.gmra.mxu0 %v2053
        %v2064 = vpop.f32.mrf.mxu0
        %v2065 = vadd.f32 0.0, %v2064
        %v2066 = vpop.f32.mrf.mxu0
        %2067 = vdwg.mxu0
        %v2068 = vpack.c.bf16 %v2065, %v2065
        %2070 = vrot.lane.b32.xlu0 %v2068, 70
        %v2071 = vpop.permute.xlu0 %2070
        %vm2073 = vcmask 650800
        %2074 = vst.msk [vmem:[#allocation4 + $0x4] sm:$0xf] %vm2073, %v2071
        %v2075 = vld [vmem:[#allocation3 + $0x8] sm:$0xf]
        %v2076 = vunpack.c.l.bf16 %v2075
        %2078 = vrot.lane.b32.xlu0 %v2076, 127
        %v2079 = vpop.permute.xlu0 %2078
        %v2081 = vmax.f32 %v2076, %v2079
        %v2082 = vpack.c.bf16 %v2081, %v2081
        %v2083 = vunpack.c.l.bf16 %v2082
        %2085 = vrot.lane.b32.xlu0 %v2083, 110
        %v2086 = vpop.permute.xlu0 %2085
        %v2088 = vmax.f32 %v2083, %v2086
        %v2089 = vpack.c.bf16 %v2088, %v2088
        %v2090 = vld [vmem:[%s6] sm:$0xf]
        %v2091 = vld [vmem:[%s6 + $0x4] sm:$0xf]
        %2093 = vrot.lane.b32.xlu0 %v2089, 113
        %v2094 = vpop.permute.xlu0 %2093
        %v2097 = vunpack.c.l.b16 %v2090
        %v2098 = vunpack.c.l.b16 %v2091
        %v2099 = vpack.c.b16 %v2098, %v2097
        %v2102 = vsel %vm1720, %v2094, 0
        %2104 = vmatpush.bf16.msra.mxu0 0
        %2105 = vmatpush.bf16.msra.mxu0 0
        %2106 = vmatpush.bf16.msra.mxu0 0
        %2107 = vmatpush.bf16.msra.mxu0 0
        %2108 = vmatpush.bf16.msra.mxu0 0
        %2109 = vmatpush.bf16.msra.mxu0 0
        %2110 = vmatpush.bf16.msra.mxu0 0
        %2111 = vmatpush.bf16.msra.mxu0 %v2099
        %2112 = vmatmul.bf16.gmra.mxu0 %v2102
        %v2113 = vpop.f32.mrf.mxu0
        %v2114 = vadd.f32 0.0, %v2113
        %v2115 = vpop.f32.mrf.mxu0
        %2116 = vdwg.mxu0
        %v2117 = vpack.c.bf16 %v2114, %v2114
        %2119 = vrot.lane.b32.xlu0 %v2117, 80
        %v2120 = vpop.permute.xlu0 %2119
        %vm2122 = vcmask 732800
        %2123 = vst.msk [vmem:[#allocation4 + $0x4] sm:$0xf] %vm2122, %v2120
        %v2124 = vld [vmem:[#allocation4] sm:$0xff]
        %v2125 = vld [vmem:[%s7] sm:$0xf]
        %v2126 = vld [vmem:[%s7 + $0x4] sm:$0xf]
        %s2127 = scalar_lea.vmem %s7, 8
        %v2128 = vld [vmem:[%s2127] sm:$0xf]
        %v2129 = vld [vmem:[%s2127 + $0x4] sm:$0xf]
        %v2132 = vunpack.c.l.b16 %v2128
        %v2133 = vunpack.c.l.b16 %v2129
        %v2134 = vpack.c.b16 %v2133, %v2132
        %v2136 = vunpack.c.l.b16 %v2124
        %v2137 = vunpack.c.h.b16 %v2124
        %v2138 = vpack.c.b16 %v2136, %v2136
        %v2139 = vpack.c.b16 %v2137, %v2137
        %2140 = vrot.lane.b32.xlu0 %v2138, 10
        %v2141 = vpop.permute.xlu0 %2140
        %2142 = vrot.lane.b32.xlu0 %v2139, 10
        %v2143 = vpop.permute.xlu0 %2142
        %vm2144 = vcmask 80896
        %v2145 = vsel %vm2144, %v2141, %v2143
        %v2147 = vsel %vm1108, %v2134, 0
        %v2150 = vsel %vm375, %v2145, 0
        %2152 = vmatpush.bf16.msra.mxu0 0
        %2153 = vmatpush.bf16.msra.mxu0 0
        %2154 = vmatpush.bf16.msra.mxu0 0
        %2155 = vmatpush.bf16.msra.mxu0 0
        %2156 = vmatpush.bf16.msra.mxu0 0
        %2157 = vmatpush.bf16.msra.mxu0 0
        %2158 = vmatpush.bf16.msra.mxu0 0
        %2159 = vmatpush.bf16.msra.mxu0 %v2150
        %2160 = vmatmul.bf16.gmra.mxu0 %v2147
        %v2161 = vpop.f32.mrf.mxu0
        %v2162 = vadd.f32 0.0, %v2161
        %v2163 = vpop.f32.mrf.mxu0
        %v2164 = vadd.f32 0.0, %v2163
        %2165 = vdwg.mxu0
        %v2168 = vunpack.c.l.b16 %v2125
        %v2169 = vunpack.c.l.b16 %v2126
        %v2170 = vpack.c.b16 %v2169, %v2168
        %2171 = vrot.lane.b32.xlu0 %v2138, 11
        %v2172 = vpop.permute.xlu0 %2171
        %2173 = vrot.lane.b32.xlu0 %v2139, 11
        %v2174 = vpop.permute.xlu0 %2173
        %vm2175 = vcmask 89088
        %v2176 = vsel %vm2175, %v2172, %v2174
        %v2178 = vsel %vm1108, %v2170, 0
        %v2181 = vsel %vm375, %v2176, 0
        %2183 = vmatpush.bf16.msra.mxu0 0
        %2184 = vmatpush.bf16.msra.mxu0 0
        %2185 = vmatpush.bf16.msra.mxu0 0
        %2186 = vmatpush.bf16.msra.mxu0 0
        %2187 = vmatpush.bf16.msra.mxu0 0
        %2188 = vmatpush.bf16.msra.mxu0 0
        %2189 = vmatpush.bf16.msra.mxu0 0
        %2190 = vmatpush.bf16.msra.mxu0 %v2181
        %2191 = vmatmul.bf16.gmra.mxu0 %v2178
        %v2192 = vpop.f32.mrf.mxu0
        %v2193 = vadd.f32 %v2162, %v2192
        %v2194 = vpop.f32.mrf.mxu0
        %v2195 = vadd.f32 %v2164, %v2194
        %2196 = vdwg.mxu0
        %s2197 = scalar_lea.vmem %s7, 16
        %v2198 = vld [vmem:[%s2197] sm:$0xf]
        %v2199 = vld [vmem:[%s2197 + $0x4] sm:$0xf]
        %v2202 = vunpack.c.l.b16 %v2198
        %v2203 = vunpack.c.l.b16 %v2199
        %v2204 = vpack.c.b16 %v2203, %v2202
        %2205 = vrot.lane.b32.xlu0 %v2138, 9
        %v2206 = vpop.permute.xlu0 %2205
        %2207 = vrot.lane.b32.xlu0 %v2139, 9
        %v2208 = vpop.permute.xlu0 %2207
        %vm2209 = vcmask 72704
        %v2210 = vsel %vm2209, %v2206, %v2208
        %v2212 = vsel %vm1108, %v2204, 0
        %v2215 = vsel %vm375, %v2210, 0
        %2217 = vmatpush.bf16.msra.mxu0 0
        %2218 = vmatpush.bf16.msra.mxu0 0
        %2219 = vmatpush.bf16.msra.mxu0 0
        %2220 = vmatpush.bf16.msra.mxu0 0
        %2221 = vmatpush.bf16.msra.mxu0 0
        %2222 = vmatpush.bf16.msra.mxu0 0
        %2223 = vmatpush.bf16.msra.mxu0 0
        %2224 = vmatpush.bf16.msra.mxu0 %v2215
        %2225 = vmatmul.bf16.gmra.mxu0 %v2212
        %v2226 = vpop.f32.mrf.mxu0
        %v2227 = vadd.f32 0.0, %v2226
        %v2228 = vpop.f32.mrf.mxu0
        %v2229 = vadd.f32 0.0, %v2228
        %2230 = vdwg.mxu0
        %v2231 = vadd.f32 %v2193, %v2227
        %v2232 = vadd.f32 %v2195, %v2229
        %s2233 = scalar_lea.vmem %s7, 24
        %v2234 = vld [vmem:[%s2233] sm:$0xf]
        %v2235 = vld [vmem:[%s2233 + $0x4] sm:$0xf]
        %v2238 = vunpack.c.l.b16 %v2234
        %v2239 = vunpack.c.l.b16 %v2235
        %v2240 = vpack.c.b16 %v2239, %v2238
        %2241 = vrot.lane.b32.xlu0 %v2138, 1
        %v2242 = vpop.permute.xlu0 %2241
        %2243 = vrot.lane.b32.xlu0 %v2139, 1
        %v2244 = vpop.permute.xlu0 %2243
        %v2245 = vsel %vm637, %v2242, %v2244
        %v2247 = vsel %vm1108, %v2240, 0
        %v2250 = vsel %vm375, %v2245, 0
        %2252 = vmatpush.bf16.msra.mxu0 0
        %2253 = vmatpush.bf16.msra.mxu0 0
        %2254 = vmatpush.bf16.msra.mxu0 0
        %2255 = vmatpush.bf16.msra.mxu0 0
        %2256 = vmatpush.bf16.msra.mxu0 0
        %2257 = vmatpush.bf16.msra.mxu0 0
        %2258 = vmatpush.bf16.msra.mxu0 0
        %2259 = vmatpush.bf16.msra.mxu0 %v2250
        %2260 = vmatmul.bf16.gmra.mxu0 %v2247
        %v2261 = vpop.f32.mrf.mxu0
        %v2262 = vadd.f32 0.0, %v2261
        %v2263 = vpop.f32.mrf.mxu0
        %v2264 = vadd.f32 0.0, %v2263
        %2265 = vdwg.mxu0
        %v2266 = vadd.f32 %v2231, %v2262
        %v2267 = vadd.f32 %v2232, %v2264
        %v2268 = vld [vmem:[#allocation4 + $0x4] sm:$0xf]
        %s2269 = scalar_lea.vmem %s7, 32
        %v2270 = vld [vmem:[%s2269] sm:$0xf]
        %v2271 = vld [vmem:[%s2269 + $0x4] sm:$0xf]
        %v2274 = vunpack.c.l.b16 %v2270
        %v2275 = vunpack.c.l.b16 %v2271
        %v2276 = vpack.c.b16 %v2275, %v2274
        %v2278 = vsel %vm1108, %v2276, 0
        %v2281 = vsel %vm375, %v2268, 0
        %2283 = vmatpush.bf16.msra.mxu0 0
        %2284 = vmatpush.bf16.msra.mxu0 0
        %2285 = vmatpush.bf16.msra.mxu0 0
        %2286 = vmatpush.bf16.msra.mxu0 0
        %2287 = vmatpush.bf16.msra.mxu0 0
        %2288 = vmatpush.bf16.msra.mxu0 0
        %2289 = vmatpush.bf16.msra.mxu0 0
        %2290 = vmatpush.bf16.msra.mxu0 %v2281
        %2291 = vmatmul.bf16.gmra.mxu0 %v2278
        %v2292 = vpop.f32.mrf.mxu0
        %v2293 = vadd.f32 0.0, %v2292
        %v2294 = vpop.f32.mrf.mxu0
        %v2295 = vadd.f32 0.0, %v2294
        %2296 = vdwg.mxu0
        %v2297 = vadd.f32 %v2266, %v2293
        %v2298 = vadd.f32 %v2267, %v2295
        %s2299 = scalar_lea.vmem %s7, 40
        %v2300 = vld [vmem:[%s2299] sm:$0xf]
        %v2301 = vld [vmem:[%s2299 + $0x4] sm:$0xf]
        %v2304 = vunpack.c.l.b16 %v2300
        %v2305 = vunpack.c.l.b16 %v2301
        %v2306 = vpack.c.b16 %v2305, %v2304
        %v2308 = vunpack.c.l.b16 %v2268
        %v2309 = vpack.c.b16 %v2308, %v2308
        %2310 = vrot.lane.b32.xlu0 %v2309, 127
        %v2311 = vpop.permute.xlu0 %2310
        %v2313 = vsel %vm1108, %v2306, 0
        %v2316 = vsel %vm375, %v2311, 0
        %2318 = vmatpush.bf16.msra.mxu0 0
        %2319 = vmatpush.bf16.msra.mxu0 0
        %2320 = vmatpush.bf16.msra.mxu0 0
        %2321 = vmatpush.bf16.msra.mxu0 0
        %2322 = vmatpush.bf16.msra.mxu0 0
        %2323 = vmatpush.bf16.msra.mxu0 0
        %2324 = vmatpush.bf16.msra.mxu0 0
        %2325 = vmatpush.bf16.msra.mxu0 %v2316
        %2326 = vmatmul.bf16.gmra.mxu0 %v2313
        %v2327 = vpop.f32.mrf.mxu0
        %v2328 = vadd.f32 0.0, %v2327
        %v2329 = vpop.f32.mrf.mxu0
        %v2330 = vadd.f32 0.0, %v2329
        %2331 = vdwg.mxu0
        %v2332 = vadd.f32 %v2297, %v2328
        %v2333 = vadd.f32 %v2298, %v2330
        %s2334 = scalar_lea.vmem %s7, 48
        %v2335 = vld [vmem:[%s2334] sm:$0xf]
        %v2336 = vld [vmem:[%s2334 + $0x4] sm:$0xf]
        %v2339 = vunpack.c.l.b16 %v2335
        %v2340 = vunpack.c.l.b16 %v2336
        %v2341 = vpack.c.b16 %v2340, %v2339
        %2342 = vrot.lane.b32.xlu0 %v2309, 119
        %v2343 = vpop.permute.xlu0 %2342
        %v2345 = vsel %vm1108, %v2341, 0
        %v2348 = vsel %vm375, %v2343, 0
        %2350 = vmatpush.bf16.msra.mxu0 0
        %2351 = vmatpush.bf16.msra.mxu0 0
        %2352 = vmatpush.bf16.msra.mxu0 0
        %2353 = vmatpush.bf16.msra.mxu0 0
        %2354 = vmatpush.bf16.msra.mxu0 0
        %2355 = vmatpush.bf16.msra.mxu0 0
        %2356 = vmatpush.bf16.msra.mxu0 0
        %2357 = vmatpush.bf16.msra.mxu0 %v2348
        %2358 = vmatmul.bf16.gmra.mxu0 %v2345
        %v2359 = vpop.f32.mrf.mxu0
        %v2360 = vadd.f32 0.0, %v2359
        %v2361 = vpop.f32.mrf.mxu0
        %v2362 = vadd.f32 0.0, %v2361
        %2363 = vdwg.mxu0
        %v2364 = vadd.f32 %v2332, %v2360
        %v2365 = vadd.f32 %v2333, %v2362
        %s2366 = scalar_lea.vmem %s7, 56
        %v2367 = vld [vmem:[%s2366] sm:$0xf]
        %v2368 = vld [vmem:[%s2366 + $0x4] sm:$0xf]
        %v2371 = vunpack.c.l.b16 %v2367
        %v2372 = vunpack.c.l.b16 %v2368
        %v2373 = vpack.c.b16 %v2372, %v2371
        %2374 = vrot.lane.b32.xlu0 %v2309, 118
        %v2375 = vpop.permute.xlu0 %2374
        %v2377 = vsel %vm1108, %v2373, 0
        %v2380 = vsel %vm375, %v2375, 0
        %2382 = vmatpush.bf16.msra.mxu0 0
        %2383 = vmatpush.bf16.msra.mxu0 0
        %2384 = vmatpush.bf16.msra.mxu0 0
        %2385 = vmatpush.bf16.msra.mxu0 0
        %2386 = vmatpush.bf16.msra.mxu0 0
        %2387 = vmatpush.bf16.msra.mxu0 0
        %2388 = vmatpush.bf16.msra.mxu0 0
        %2389 = vmatpush.bf16.msra.mxu0 %v2380
        %2390 = vmatmul.bf16.gmra.mxu0 %v2377
        %v2391 = vpop.f32.mrf.mxu0
        %v2392 = vadd.f32 0.0, %v2391
        %v2393 = vpop.f32.mrf.mxu0
        %v2394 = vadd.f32 0.0, %v2393
        %2395 = vdwg.mxu0
        %v2396 = vadd.f32 %v2364, %v2392
        %v2397 = vadd.f32 %v2365, %v2394
        %s2398 = scalar_lea.vmem %s7, 64
        %v2399 = vld [vmem:[%s2398] sm:$0xf]
        %v2400 = vld [vmem:[%s2398 + $0x4] sm:$0xf]
        %v2403 = vunpack.c.l.b16 %v2399
        %v2404 = vunpack.c.l.b16 %v2400
        %v2405 = vpack.c.b16 %v2404, %v2403
        %2406 = vrot.lane.b32.xlu0 %v2309, 117
        %v2407 = vpop.permute.xlu0 %2406
        %v2409 = vsel %vm1108, %v2405, 0
        %v2412 = vsel %vm375, %v2407, 0
        %2414 = vmatpush.bf16.msra.mxu0 0
        %2415 = vmatpush.bf16.msra.mxu0 0
        %2416 = vmatpush.bf16.msra.mxu0 0
        %2417 = vmatpush.bf16.msra.mxu0 0
        %2418 = vmatpush.bf16.msra.mxu0 0
        %2419 = vmatpush.bf16.msra.mxu0 0
        %2420 = vmatpush.bf16.msra.mxu0 0
        %2421 = vmatpush.bf16.msra.mxu0 %v2412
        %2422 = vmatmul.bf16.gmra.mxu0 %v2409
        %v2423 = vpop.f32.mrf.mxu0
        %v2424 = vadd.f32 0.0, %v2423
        %v2425 = vpop.f32.mrf.mxu0
        %v2426 = vadd.f32 0.0, %v2425
        %2427 = vdwg.mxu0
        %v2428 = vadd.f32 %v2396, %v2424
        %v2429 = vadd.f32 %v2397, %v2426
        %v2430 = vld [vmem:[%s8] sm:$0xff]
        %v2431 = vld [vmem:[%s8 + $0x8] sm:$0xff]
        %2433 = vset.pattern.permute.xlu0 0
        %2434 = vperm.xlu0 %2433, %v2430
        %v2435 = vpop.permute.xlu0 %2434
        %2438 = vset.pattern.permute.xlu0 0
        %2439 = vperm.xlu0 %2438, %v2431
        %v2440 = vpop.permute.xlu0 %2439
        %v2442 = vadd.f32 %v2428, %v2435
        %v2443 = vadd.f32 %v2429, %v2440
        %v2444 = vmax.f32 %v2442, 0.0
        %v2445 = vmax.f32 %v2443, 0.0
        %vm2446 = vcmask 818176
        %2447 = vst.msk [vmem:[%s363] sm:$0xff] %vm2446, %v2444
        %2448 = vst.msk [vmem:[%s363 + $0x8] sm:$0xff] %vm2446, %v2445
        %s2449 = sand.u32 %s230, 1
        %s2450 = scalar_lea.sflag [#allocation6], %s2449
        %s2451 = sand.u32 %s230, 1
        %s2452 = smul.addr %s2451, 24
        %s2453 = scalar_lea.vmem [#allocation5], %s2452
        %s2454 = sand.u32 %s256, 1
        %s2455 = scalar_lea.sflag [#allocation8], %s2454
        %s2456 = sand.u32 %s256, 1
        %s2457 = smul.addr %s2456, 16
        %s2458 = scalar_lea.vmem [#allocation7], %s2457
        // Predicated region
        $region57: #{tpu_custom_call.1} parent=55 // pred_check
          %p2459 = pneg %p240
        $region58: #{tpu_custom_call.1} parent=55 // pred_check_branch
          %2461 = sbr.rel (%p2459) target = $region60
        $region59: #{tpu_custom_call.1} parent=55 // pred_region
          %2463 = vsyncadd %s2450, 0
          %s2464 = smul.addr %s28, 3
          %s2465 = smul.addr %s2464, 8
          %s2466 = scalar_lea.hbm %s9, %s2465
          %s2468 = sshll.u32 %s2453, 4
          %s2469 = int_to_ptr.vmem [resolvable:$true] %s2468
          %s2470 = sshll.u32 %s2466, 4
          %s2471 = int_to_ptr.hbm [resolvable:$true] %s2470
          %2473 = dma.vmem_to_hbm [thread:$0]  %s2469, 384, %s2471, %s2450
        $region60: #{tpu_custom_call.1} parent=55 // pred_fallthru
          _
        // Predicated region
        $region61: #{tpu_custom_call.1} parent=55 // pred_check
          %p2474 = pneg %p266
        $region62: #{tpu_custom_call.1} parent=55 // pred_check_branch
          %2476 = sbr.rel (%p2474) target = $region64
        $region63: #{tpu_custom_call.1} parent=55 // pred_region
          %2478 = vsyncadd %s2455, 0
          %s2479 = smul.addr %s28, 2
          %s2480 = smul.addr %s2479, 8
          %s2481 = scalar_lea.hbm %s10, %s2480
          %s2482 = sshll.u32 %s2458, 4
          %s2483 = int_to_ptr.vmem [resolvable:$true] %s2482
          %s2484 = sshll.u32 %s2481, 4
          %s2485 = int_to_ptr.hbm [resolvable:$true] %s2484
          %2490 = dma.vmem_to_hbm [thread:$0]  %s2483, 256, %s2485, %s2455, 128, 128, 8
        $region64: #{tpu_custom_call.1} parent=55 // pred_fallthru
          _
      $region56: #{tpu_custom_call.1} parent=5 // pred_fallthru
        _
      %p2491 = scmp.le.s32.totalorder 2, %s23
      // Predicated region
      $region65: #{tpu_custom_call.1} parent=5 // pred_check
        %p2492 = pneg %p2491
      $region66: #{tpu_custom_call.1} parent=5 // pred_check_branch
        %2494 = sbr.rel (%p2492) target = $region68
      $region67: #{tpu_custom_call.1} parent=5 // pred_region
        %s2495 = ssub.s32 %s23, 2
        // Predicated region
        $region69: #{tpu_custom_call.1} parent=67 // pred_check
          %p2496 = pneg %p246
        $region70: #{tpu_custom_call.1} parent=67 // pred_check_branch
          %2498 = sbr.rel (%p2496) target = $region72
        $region71: #{tpu_custom_call.1} parent=67 // pred_region
          %s2499 = sand.u32 %s231, 1
          %s2500 = scalar_lea.sflag [#allocation6], %s2499
          %s2501 = sand.u32 %s231, 1
          %s2502 = smul.addr %s2501, 24
          %s2503 = scalar_lea.vmem [#allocation5], %s2502
          %2505 = dma.done %s2500, 384
        $region72: #{tpu_custom_call.1} parent=67 // pred_fallthru
          _
        // Predicated region
        $region73: #{tpu_custom_call.1} parent=67 // pred_check
          %p2506 = pneg %p272
        $region74: #{tpu_custom_call.1} parent=67 // pred_check_branch
          %2508 = sbr.rel (%p2506) target = $region76
        $region75: #{tpu_custom_call.1} parent=67 // pred_region
          %s2509 = sand.u32 %s257, 1
          %s2510 = scalar_lea.sflag [#allocation8], %s2509
          %s2511 = sand.u32 %s257, 1
          %s2512 = smul.addr %s2511, 16
          %s2513 = scalar_lea.vmem [#allocation7], %s2512
          %2515 = dma.done %s2510, 256
        $region76: #{tpu_custom_call.1} parent=67 // pred_fallthru
          _
      $region68: #{tpu_custom_call.1} parent=5 // pred_fallthru
        _
    $region6: #{tpu_custom_call.1} parent=1 // loop_footer
      %s27 = sadd.s32 1, %s23
    $region7: #{tpu_custom_call.1} parent=1 // loop_footer_branch
      %22 = sbr.rel target = $region3
    $region8: #{tpu_custom_call.1} parent=1 // loop_exit
      _
    %2516 = vsyncpa [#allocation6], 1
    %s2517 = scalar_lea.sflag [#allocation6], 1
    %2518 = vsyncpa %s2517, 1
    %2519 = vsyncpa [#allocation8], 1
    %s2520 = scalar_lea.sflag [#allocation8], 1
    %2521 = vsyncpa %s2520, 1

</llo_original>
